<compile_context>
chip_gen: v7x
topology: tpu7x:2x2x1
jax: 0.10.0
libtpu: 0.0.40
codegen_flags: <defaults>
</compile_context>

<pallas_src>
import jax
import jax.numpy as jnp
from jax import lax
from jax.experimental import pallas as pl
from jax.experimental.pallas import tpu as pltpu

EPS = 1e-5


def _dshot_kernel(x_ref, w1_ref, s1_ref, t1_ref, f1_ref, w2_ref, b2_ref,
                  o_ref, xpad_ref, mid_ref):
    B, H, W, Cin = x_ref.shape
    C2 = mid_ref.shape[-1]          # 2 * Co

    # Zero the padded scratches (borders must be zero).  Re-done every grid
    # step so the kernel stays correct when the parallel axis is sharded
    # across TensorCores (each core has its own scratch instance).
    xpad_ref[...] = jnp.zeros_like(xpad_ref)
    mid_ref[...] = jnp.zeros_like(mid_ref)

    # Write the unpadded input block into the interior of the padded scratch
    # (replaces the HBM-side jnp.pad of the whole input).
    xpad_ref[:, 1:H + 1, 1:W + 1, :] = x_ref[...]

    def im2col(ref, c):
        # 9 shifted (B, H, W, c) views of the zero-padded slab, stacked along
        # channels -> one (B*H*W, 9*c) matmul operand.
        taps = [ref[:, dy:dy + H, dx:dx + W, :]
                for dy in range(3) for dx in range(3)]
        return jnp.concatenate(taps, axis=-1).reshape(B * H * W, 9 * c)

    # Stage 1: fused conv_r || conv_l (+bias +BN +ReLU) as ONE im2col matmul.
    acc1 = jnp.dot(im2col(xpad_ref, Cin), w1_ref[...],
                   preferred_element_type=jnp.float32)
    # relu(acc*s1 + t1) + t2/s2  ==  max(acc*s1 + (t1 + t2/s2), t2/s2)
    mid = jnp.maximum(acc1 * s1_ref[...] + t1_ref[...], f1_ref[...])
    mid_ref[:, 1:H + 1, 1:W + 1, :] = mid.reshape(B, H, W, C2)

    # Stage 2: BN2-folded 3x3 conv + bias + ReLU.
    acc2 = jnp.dot(im2col(mid_ref, C2), w2_ref[...],
                   preferred_element_type=jnp.float32)
    o_ref[...] = jnp.maximum(acc2 + b2_ref[...], 0.0)


def dshot_connect3d(x_ncdhw, folded):
    """x_ncdhw: (N, Cin, D, H, W) float32 -> (N, Co, D, H, W) float32."""
    w1, s1, t1, f1, w2, b2 = folded
    N, Cin, D, H, W = x_ncdhw.shape
    Co = w2.shape[-1]
    C2 = 2 * Co

    ND = N * D
    # Batch many depth-slices per grid step (matmul M = B*H*W).
    B = ND if ND <= 32 else 32
    G = -(-ND // B)
    NDp = G * B

    # NCDHW -> (N*D, H, W, Cin); no spatial padding here (done in VMEM).
    x = jnp.transpose(x_ncdhw, (0, 2, 3, 4, 1)).reshape(ND, H, W, Cin)
    if NDp != ND:
        x = jnp.pad(x, ((0, NDp - ND), (0, 0), (0, 0), (0, 0)))

    out = pl.pallas_call(
        _dshot_kernel,
        out_shape=jax.ShapeDtypeStruct((NDp * H * W, Co), jnp.float32),
        grid_spec=pltpu.PrefetchScalarGridSpec(
            num_scalar_prefetch=0,
            grid=(G,),
            in_specs=[
                pl.BlockSpec((B, H, W, Cin), lambda i: (i, 0, 0, 0)),
                pl.BlockSpec((9 * Cin, C2), lambda i: (0, 0)),   # fused w1
                pl.BlockSpec((1, C2), lambda i: (0, 0)),         # scale1
                pl.BlockSpec((1, C2), lambda i: (0, 0)),         # shift1'
                pl.BlockSpec((1, C2), lambda i: (0, 0)),         # relu floor
                pl.BlockSpec((9 * C2, Co), lambda i: (0, 0)),    # BN2-folded w2
                pl.BlockSpec((1, Co), lambda i: (0, 0)),         # b2
            ],
            out_specs=pl.BlockSpec((B * H * W, Co), lambda i: (i, 0)),
            scratch_shapes=[
                pltpu.VMEM((B, H + 2, W + 2, Cin), jnp.float32),  # padded x
                pltpu.VMEM((B, H + 2, W + 2, C2), jnp.float32),   # padded mid
            ],
        ),
        compiler_params=pltpu.CompilerParams(
            dimension_semantics=("parallel",)),
    )(x, w1, s1, t1, f1, w2, b2)

    out = out.reshape(NDp, H, W, Co)[:ND]
    return jnp.transpose(out.reshape(N, D, H, W, Co), (0, 4, 1, 2, 3))


# ----------------------- parameter init + folding + reference ----------------

def init_raw_params(key, cin, co):
    ks = iter(jax.random.split(key, 24))
    n = lambda shape, s=0.1: jax.random.normal(next(ks), shape, jnp.float32) * s
    u = lambda shape: jax.random.uniform(next(ks), shape, jnp.float32, 0.5, 1.5)
    raw = dict(
        wr=n((3, 3, cin, co)), br=n((co,)),
        g_r=1.0 + n((co,)), be_r=n((co,)), m_r=n((co,)), v_r=u((co,)),
        wl=n((3, 3, cin, co)), bl=n((co,)),
        g_l=1.0 + n((co,)), be_l=n((co,)), m_l=n((co,)), v_l=u((co,)),
        g2=1.0 + n((2 * co,)), be2=n((2 * co,)), m2=n((2 * co,)), v2=u((2 * co,)),
        w2=n((3, 3, 2 * co, co)), b2=n((co,)),
    )
    return raw


def fold_params(raw, cin, co):
    sr = raw['g_r'] / jnp.sqrt(raw['v_r'] + EPS)
    tr = raw['be_r'] + (raw['br'] - raw['m_r']) * sr
    sl = raw['g_l'] / jnp.sqrt(raw['v_l'] + EPS)
    tl = raw['be_l'] + (raw['bl'] - raw['m_l']) * sl
    s2 = raw['g2'] / jnp.sqrt(raw['v2'] + EPS)
    t2 = raw['be2'] - raw['m2'] * s2

    # Fuse conv_r / conv_l: they share the same 9 input taps, so concatenate
    # their output channels -> one (9*Cin, 2*Co) matmul weight.
    w1 = jnp.concatenate([raw['wr'], raw['wl']], axis=-1).reshape(9 * cin, 2 * co)
    s1 = jnp.concatenate([sr, sl])
    t1 = jnp.concatenate([tr, tl])

    # Fold BN2 into conv2:  conv(pad(m*s2 + t2), w2) == conv(pad(m + t2/s2), w2*s2)
    # (exact, including the zero padding).  relu(a)+c == max(a+c, c) folds the
    # t2/s2 shift into stage-1's affine with a per-channel ReLU floor.
    # TODO(synk): t2/s2 is ill-conditioned if a BN2 gamma is ~0.
    shift2 = t2 / s2
    w2 = (raw['w2'] * s2[None, None, :, None]).reshape(9 * 2 * co, co)

    return (w1,
            s1.reshape(1, 2 * co),
            (t1 + shift2).reshape(1, 2 * co),
            shift2.reshape(1, 2 * co),
            w2,
            raw['b2'].reshape(1, co))


def _conv2d_ref(x, w, b):
    y = lax.conv_general_dilated(x, w, (1, 1), ((1, 1), (1, 1)),
                                 dimension_numbers=('NHWC', 'HWIO', 'NHWC'))
    return y + b


def _bn_ref(x, gamma, beta, mean, var):
    return (x - mean) / jnp.sqrt(var + EPS) * gamma + beta


def ref_forward(x_ncdhw, raw):
    N, Cin, D, H, W = x_ncdhw.shape
    Co = raw['wr'].shape[-1]
    x = jnp.transpose(x_ncdhw, (0, 2, 3, 4, 1)).reshape(N * D, H, W, Cin)
    xr = jax.nn.relu(_bn_ref(_conv2d_ref(x, raw['wr'], raw['br']),
                             raw['g_r'], raw['be_r'], raw['m_r'], raw['v_r']))
    xl = jax.nn.relu(_bn_ref(_conv2d_ref(x, raw['wl'], raw['bl']),
                             raw['g_l'], raw['be_l'], raw['m_l'], raw['v_l']))
    xc = jnp.concatenate([xr, xl], axis=-1)
    xc = _bn_ref(xc, raw['g2'], raw['be2'], raw['m2'], raw['v2'])
    y = jax.nn.relu(_conv2d_ref(xc, raw['w2'], raw['b2']))
    return jnp.transpose(y.reshape(N, D, H, W, Co), (0, 4, 1, 2, 3))


if __name__ == "__main__":
    N, Cin, Co, D, H, W = 2, 4, 8, 3, 8, 8
    key = jax.random.PRNGKey(0)
    kx, kp = jax.random.split(key)
    x = jax.random.normal(kx, (N, Cin, D, H, W), jnp.float32)

    raw = init_raw_params(kp, Cin, Co)
    folded = fold_params(raw, Cin, Co)

    out = dshot_connect3d(x, folded)
    out = jax.block_until_ready(out)

    ref = jax.block_until_ready(ref_forward(x, raw))
    assert out.shape == (N, Co, D, H, W)
    assert jnp.allclose(out, ref, atol=2e-4, rtol=2e-4), \
        f"max abs err {jnp.max(jnp.abs(out - ref))}"
    print("KERNEL_OK")
</pallas_src>

<mosaic_0001>
module attributes {stable_mosaic.version = 11 : i64} {
  func.func @_dshot_kernel(%arg0: i32, %arg1: memref<6x8x8x4xf32, #tpu.memory_space<vmem>>, %arg2: memref<36x16xf32, #tpu.memory_space<vmem>>, %arg3: memref<1x16xf32, #tpu.memory_space<vmem>>, %arg4: memref<1x16xf32, #tpu.memory_space<vmem>>, %arg5: memref<1x16xf32, #tpu.memory_space<vmem>>, %arg6: memref<144x8xf32, #tpu.memory_space<vmem>>, %arg7: memref<1x8xf32, #tpu.memory_space<vmem>>, %arg8: memref<384x8xf32, #tpu.memory_space<vmem>>, %arg9: memref<6x10x10x4xf32, #tpu.memory_space<vmem>>, %arg10: memref<6x10x10x16xf32, #tpu.memory_space<vmem>>) attributes {dimension_semantics = [#tpu.dimension_semantics<parallel>], iteration_bounds = array<i64: 1>, scalar_prefetch = 0 : i64, scratch_operands = 2 : i64, tpu.core_type = #tpu.core_type<tc>, window_params = [{transform_indices = @transform_0, window_bounds = array<i64: 6, 8, 8, 4>}, {pipeline_mode = #tpu.pipeline_mode<synchronous>, transform_indices = @transform_1, window_bounds = array<i64: 36, 16>}, {pipeline_mode = #tpu.pipeline_mode<synchronous>, transform_indices = @transform_2, window_bounds = array<i64: 1, 16>}, {pipeline_mode = #tpu.pipeline_mode<synchronous>, transform_indices = @transform_3, window_bounds = array<i64: 1, 16>}, {pipeline_mode = #tpu.pipeline_mode<synchronous>, transform_indices = @transform_4, window_bounds = array<i64: 1, 16>}, {pipeline_mode = #tpu.pipeline_mode<synchronous>, transform_indices = @transform_5, window_bounds = array<i64: 144, 8>}, {pipeline_mode = #tpu.pipeline_mode<synchronous>, transform_indices = @transform_6, window_bounds = array<i64: 1, 8>}, {transform_indices = @transform_7, window_bounds = array<i64: 384, 8>}]} {
    %cst = arith.constant 0.000000e+00 : f32
    %0 = vector.broadcast %cst : f32 to vector<6x10x10x4xf32>
    %c0 = arith.constant 0 : index
    %c0_0 = arith.constant 0 : index
    %c0_1 = arith.constant 0 : index
    %c0_2 = arith.constant 0 : index
    %1 = vector.load %arg9[%c0, %c0_0, %c0_1, %c0_2] : memref<6x10x10x4xf32, #tpu.memory_space<vmem>>, vector<6x10x10x4xf32>
    tpu.vector_store %arg9[%c0, %c0_0, %c0_1, %c0_2], %0 {strides = array<i32>} : memref<6x10x10x4xf32, #tpu.memory_space<vmem>>, vector<6x10x10x4xf32>,
    %cst_3 = arith.constant 0.000000e+00 : f32
    %2 = vector.broadcast %cst_3 : f32 to vector<6x10x10x16xf32>
    %c0_4 = arith.constant 0 : index
    %c0_5 = arith.constant 0 : index
    %c0_6 = arith.constant 0 : index
    %c0_7 = arith.constant 0 : index
    %3 = vector.load %arg10[%c0_4, %c0_5, %c0_6, %c0_7] : memref<6x10x10x16xf32, #tpu.memory_space<vmem>>, vector<6x10x10x16xf32>
    tpu.vector_store %arg10[%c0_4, %c0_5, %c0_6, %c0_7], %2 {strides = array<i32>} : memref<6x10x10x16xf32, #tpu.memory_space<vmem>>, vector<6x10x10x16xf32>,
    %c0_8 = arith.constant 0 : index
    %c0_9 = arith.constant 0 : index
    %c0_10 = arith.constant 0 : index
    %c0_11 = arith.constant 0 : index
    %4 = vector.load %arg1[%c0_8, %c0_9, %c0_10, %c0_11] : memref<6x8x8x4xf32, #tpu.memory_space<vmem>>, vector<6x8x8x4xf32>
    %c0_12 = arith.constant 0 : index
    %c1 = arith.constant 1 : index
    %c1_13 = arith.constant 1 : index
    %c0_14 = arith.constant 0 : index
    %5 = vector.load %arg9[%c0_12, %c1, %c1_13, %c0_14] : memref<6x10x10x4xf32, #tpu.memory_space<vmem>>, vector<6x8x8x4xf32>
    tpu.vector_store %arg9[%c0_12, %c1, %c1_13, %c0_14], %4 {strides = array<i32>} : memref<6x10x10x4xf32, #tpu.memory_space<vmem>>, vector<6x8x8x4xf32>,
    %c0_15 = arith.constant 0 : index
    %c0_16 = arith.constant 0 : index
    %c0_17 = arith.constant 0 : index
    %c0_18 = arith.constant 0 : index
    %6 = vector.load %arg9[%c0_15, %c0_16, %c0_17, %c0_18] : memref<6x10x10x4xf32, #tpu.memory_space<vmem>>, vector<6x8x8x4xf32>
    %c0_19 = arith.constant 0 : index
    %c0_20 = arith.constant 0 : index
    %c1_21 = arith.constant 1 : index
    %c0_22 = arith.constant 0 : index
    %7 = vector.load %arg9[%c0_19, %c0_20, %c1_21, %c0_22] : memref<6x10x10x4xf32, #tpu.memory_space<vmem>>, vector<6x8x8x4xf32>
    %c0_23 = arith.constant 0 : index
    %c0_24 = arith.constant 0 : index
    %c2 = arith.constant 2 : index
    %c0_25 = arith.constant 0 : index
    %8 = vector.load %arg9[%c0_23, %c0_24, %c2, %c0_25] : memref<6x10x10x4xf32, #tpu.memory_space<vmem>>, vector<6x8x8x4xf32>
    %c0_26 = arith.constant 0 : index
    %c1_27 = arith.constant 1 : index
    %c0_28 = arith.constant 0 : index
    %c0_29 = arith.constant 0 : index
    %9 = vector.load %arg9[%c0_26, %c1_27, %c0_28, %c0_29] : memref<6x10x10x4xf32, #tpu.memory_space<vmem>>, vector<6x8x8x4xf32>
    %c0_30 = arith.constant 0 : index
    %c1_31 = arith.constant 1 : index
    %c1_32 = arith.constant 1 : index
    %c0_33 = arith.constant 0 : index
    %10 = vector.load %arg9[%c0_30, %c1_31, %c1_32, %c0_33] : memref<6x10x10x4xf32, #tpu.memory_space<vmem>>, vector<6x8x8x4xf32>
    %c0_34 = arith.constant 0 : index
    %c1_35 = arith.constant 1 : index
    %c2_36 = arith.constant 2 : index
    %c0_37 = arith.constant 0 : index
    %11 = vector.load %arg9[%c0_34, %c1_35, %c2_36, %c0_37] : memref<6x10x10x4xf32, #tpu.memory_space<vmem>>, vector<6x8x8x4xf32>
    %c0_38 = arith.constant 0 : index
    %c2_39 = arith.constant 2 : index
    %c0_40 = arith.constant 0 : index
    %c0_41 = arith.constant 0 : index
    %12 = vector.load %arg9[%c0_38, %c2_39, %c0_40, %c0_41] : memref<6x10x10x4xf32, #tpu.memory_space<vmem>>, vector<6x8x8x4xf32>
    %c0_42 = arith.constant 0 : index
    %c2_43 = arith.constant 2 : index
    %c1_44 = arith.constant 1 : index
    %c0_45 = arith.constant 0 : index
    %13 = vector.load %arg9[%c0_42, %c2_43, %c1_44, %c0_45] : memref<6x10x10x4xf32, #tpu.memory_space<vmem>>, vector<6x8x8x4xf32>
    %c0_46 = arith.constant 0 : index
    %c2_47 = arith.constant 2 : index
    %c2_48 = arith.constant 2 : index
    %c0_49 = arith.constant 0 : index
    %14 = vector.load %arg9[%c0_46, %c2_47, %c2_48, %c0_49] : memref<6x10x10x4xf32, #tpu.memory_space<vmem>>, vector<6x8x8x4xf32>
    %15 = tpu.concatenate %6, %7, %8, %9, %10, %11, %12, %13, %14 in 3 : vector<6x8x8x4xf32>, vector<6x8x8x4xf32>, vector<6x8x8x4xf32>, vector<6x8x8x4xf32>, vector<6x8x8x4xf32>, vector<6x8x8x4xf32>, vector<6x8x8x4xf32>, vector<6x8x8x4xf32>, vector<6x8x8x4xf32> -> vector<6x8x8x36xf32>
    %16 = vector.shape_cast %15 : vector<6x8x8x36xf32> to vector<384x36xf32>
    %c0_50 = arith.constant 0 : index
    %c0_51 = arith.constant 0 : index
    %17 = vector.load %arg2[%c0_50, %c0_51] : memref<36x16xf32, #tpu.memory_space<vmem>>, vector<36x16xf32>
    %cst_52 = arith.constant dense<0.000000e+00> : vector<384x16xf32>
    %18 = tpu.matmul %16, %17, %cst_52 {dimension_numbers = #tpu.dot_dimension_numbers<[1], [0], [0], [1], [0, 0, 1, 1], [], []>} : vector<384x36xf32>, vector<36x16xf32>, vector<384x16xf32> -> vector<384x16xf32>
    %c0_53 = arith.constant 0 : index
    %c0_54 = arith.constant 0 : index
    %19 = vector.load %arg3[%c0_53, %c0_54] : memref<1x16xf32, #tpu.memory_space<vmem>>, vector<1x16xf32>
    %20 = vector.broadcast %19 : vector<1x16xf32> to vector<384x16xf32>
    %21 = arith.mulf %18, %20 : vector<384x16xf32>
    %c0_55 = arith.constant 0 : index
    %c0_56 = arith.constant 0 : index
    %22 = vector.load %arg4[%c0_55, %c0_56] : memref<1x16xf32, #tpu.memory_space<vmem>>, vector<1x16xf32>
    %23 = vector.broadcast %22 : vector<1x16xf32> to vector<384x16xf32>
    %24 = arith.addf %21, %23 : vector<384x16xf32>
    %c0_57 = arith.constant 0 : index
    %c0_58 = arith.constant 0 : index
    %25 = vector.load %arg5[%c0_57, %c0_58] : memref<1x16xf32, #tpu.memory_space<vmem>>, vector<1x16xf32>
    %26 = vector.broadcast %25 : vector<1x16xf32> to vector<384x16xf32>
    %27 = arith.maximumf %24, %26 : vector<384x16xf32>
    %28 = vector.shape_cast %27 : vector<384x16xf32> to vector<6x8x8x16xf32>
    %c0_59 = arith.constant 0 : index
    %c1_60 = arith.constant 1 : index
    %c1_61 = arith.constant 1 : index
    %c0_62 = arith.constant 0 : index
    %29 = vector.load %arg10[%c0_59, %c1_60, %c1_61, %c0_62] : memref<6x10x10x16xf32, #tpu.memory_space<vmem>>, vector<6x8x8x16xf32>
    tpu.vector_store %arg10[%c0_59, %c1_60, %c1_61, %c0_62], %28 {strides = array<i32>} : memref<6x10x10x16xf32, #tpu.memory_space<vmem>>, vector<6x8x8x16xf32>,
    %c0_63 = arith.constant 0 : index
    %c0_64 = arith.constant 0 : index
    %c0_65 = arith.constant 0 : index
    %c0_66 = arith.constant 0 : index
    %30 = vector.load %arg10[%c0_63, %c0_64, %c0_65, %c0_66] : memref<6x10x10x16xf32, #tpu.memory_space<vmem>>, vector<6x8x8x16xf32>
    %c0_67 = arith.constant 0 : index
    %c0_68 = arith.constant 0 : index
    %c1_69 = arith.constant 1 : index
    %c0_70 = arith.constant 0 : index
    %31 = vector.load %arg10[%c0_67, %c0_68, %c1_69, %c0_70] : memref<6x10x10x16xf32, #tpu.memory_space<vmem>>, vector<6x8x8x16xf32>
    %c0_71 = arith.constant 0 : index
    %c0_72 = arith.constant 0 : index
    %c2_73 = arith.constant 2 : index
    %c0_74 = arith.constant 0 : index
    %32 = vector.load %arg10[%c0_71, %c0_72, %c2_73, %c0_74] : memref<6x10x10x16xf32, #tpu.memory_space<vmem>>, vector<6x8x8x16xf32>
    %c0_75 = arith.constant 0 : index
    %c1_76 = arith.constant 1 : index
    %c0_77 = arith.constant 0 : index
    %c0_78 = arith.constant 0 : index
    %33 = vector.load %arg10[%c0_75, %c1_76, %c0_77, %c0_78] : memref<6x10x10x16xf32, #tpu.memory_space<vmem>>, vector<6x8x8x16xf32>
    %c0_79 = arith.constant 0 : index
    %c1_80 = arith.constant 1 : index
    %c1_81 = arith.constant 1 : index
    %c0_82 = arith.constant 0 : index
    %34 = vector.load %arg10[%c0_79, %c1_80, %c1_81, %c0_82] : memref<6x10x10x16xf32, #tpu.memory_space<vmem>>, vector<6x8x8x16xf32>
    %c0_83 = arith.constant 0 : index
    %c1_84 = arith.constant 1 : index
    %c2_85 = arith.constant 2 : index
    %c0_86 = arith.constant 0 : index
    %35 = vector.load %arg10[%c0_83, %c1_84, %c2_85, %c0_86] : memref<6x10x10x16xf32, #tpu.memory_space<vmem>>, vector<6x8x8x16xf32>
    %c0_87 = arith.constant 0 : index
    %c2_88 = arith.constant 2 : index
    %c0_89 = arith.constant 0 : index
    %c0_90 = arith.constant 0 : index
    %36 = vector.load %arg10[%c0_87, %c2_88, %c0_89, %c0_90] : memref<6x10x10x16xf32, #tpu.memory_space<vmem>>, vector<6x8x8x16xf32>
    %c0_91 = arith.constant 0 : index
    %c2_92 = arith.constant 2 : index
    %c1_93 = arith.constant 1 : index
    %c0_94 = arith.constant 0 : index
    %37 = vector.load %arg10[%c0_91, %c2_92, %c1_93, %c0_94] : memref<6x10x10x16xf32, #tpu.memory_space<vmem>>, vector<6x8x8x16xf32>
    %c0_95 = arith.constant 0 : index
    %c2_96 = arith.constant 2 : index
    %c2_97 = arith.constant 2 : index
    %c0_98 = arith.constant 0 : index
    %38 = vector.load %arg10[%c0_95, %c2_96, %c2_97, %c0_98] : memref<6x10x10x16xf32, #tpu.memory_space<vmem>>, vector<6x8x8x16xf32>
    %39 = tpu.concatenate %30, %31, %32, %33, %34, %35, %36, %37, %38 in 3 : vector<6x8x8x16xf32>, vector<6x8x8x16xf32>, vector<6x8x8x16xf32>, vector<6x8x8x16xf32>, vector<6x8x8x16xf32>, vector<6x8x8x16xf32>, vector<6x8x8x16xf32>, vector<6x8x8x16xf32>, vector<6x8x8x16xf32> -> vector<6x8x8x144xf32>
    %40 = vector.shape_cast %39 : vector<6x8x8x144xf32> to vector<384x144xf32>
    %c0_99 = arith.constant 0 : index
    %c0_100 = arith.constant 0 : index
    %41 = vector.load %arg6[%c0_99, %c0_100] : memref<144x8xf32, #tpu.memory_space<vmem>>, vector<144x8xf32>
    %cst_101 = arith.constant dense<0.000000e+00> : vector<384x8xf32>
    %42 = tpu.matmul %40, %41, %cst_101 {dimension_numbers = #tpu.dot_dimension_numbers<[1], [0], [0], [1], [0, 0, 1, 1], [], []>} : vector<384x144xf32>, vector<144x8xf32>, vector<384x8xf32> -> vector<384x8xf32>
    %c0_102 = arith.constant 0 : index
    %c0_103 = arith.constant 0 : index
    %43 = vector.load %arg7[%c0_102, %c0_103] : memref<1x8xf32, #tpu.memory_space<vmem>>, vector<1x8xf32>
    %44 = vector.broadcast %43 : vector<1x8xf32> to vector<384x8xf32>
    %45 = arith.addf %42, %44 : vector<384x8xf32>
    %cst_104 = arith.constant 0.000000e+00 : f32
    %46 = vector.broadcast %cst_104 : f32 to vector<384x8xf32>
    %47 = arith.maximumf %45, %46 : vector<384x8xf32>
    %c0_105 = arith.constant 0 : index
    %c0_106 = arith.constant 0 : index
    %48 = vector.load %arg8[%c0_105, %c0_106] : memref<384x8xf32, #tpu.memory_space<vmem>>, vector<384x8xf32>
    tpu.vector_store %arg8[%c0_105, %c0_106], %47 {strides = array<i32>} : memref<384x8xf32, #tpu.memory_space<vmem>>, vector<384x8xf32>,
    return
  }
  func.func @transform_0(%arg0: i32) -> (i32, i32, i32, i32) {
    %c0_i32 = arith.constant 0 : i32
    %c0_i32_0 = arith.constant 0 : i32
    %c0_i32_1 = arith.constant 0 : i32
    %c0_i32_2 = arith.constant 0 : i32
    return %arg0, %c0_i32, %c0_i32_0, %c0_i32_1 : i32, i32, i32, i32
  }
  func.func @transform_1(%arg0: i32) -> (i32, i32) {
    %c0_i32 = arith.constant 0 : i32
    %c0_i32_0 = arith.constant 0 : i32
    %c0_i32_1 = arith.constant 0 : i32
    return %c0_i32, %c0_i32_0 : i32, i32
  }
  func.func @transform_2(%arg0: i32) -> (i32, i32) {
    %c0_i32 = arith.constant 0 : i32
    %c0_i32_0 = arith.constant 0 : i32
    %c0_i32_1 = arith.constant 0 : i32
    return %c0_i32, %c0_i32_0 : i32, i32
  }
  func.func @transform_3(%arg0: i32) -> (i32, i32) {
    %c0_i32 = arith.constant 0 : i32
    %c0_i32_0 = arith.constant 0 : i32
    %c0_i32_1 = arith.constant 0 : i32
    return %c0_i32, %c0_i32_0 : i32, i32
  }
  func.func @transform_4(%arg0: i32) -> (i32, i32) {
    %c0_i32 = arith.constant 0 : i32
    %c0_i32_0 = arith.constant 0 : i32
    %c0_i32_1 = arith.constant 0 : i32
    return %c0_i32, %c0_i32_0 : i32, i32
  }
  func.func @transform_5(%arg0: i32) -> (i32, i32) {
    %c0_i32 = arith.constant 0 : i32
    %c0_i32_0 = arith.constant 0 : i32
    %c0_i32_1 = arith.constant 0 : i32
    return %c0_i32, %c0_i32_0 : i32, i32
  }
  func.func @transform_6(%arg0: i32) -> (i32, i32) {
    %c0_i32 = arith.constant 0 : i32
    %c0_i32_0 = arith.constant 0 : i32
    %c0_i32_1 = arith.constant 0 : i32
    return %c0_i32, %c0_i32_0 : i32, i32
  }
  func.func @transform_7(%arg0: i32) -> (i32, i32) {
    %c0_i32 = arith.constant 0 : i32
    %c0_i32_0 = arith.constant 0 : i32
    return %arg0, %c0_i32 : i32, i32
  }
}

</mosaic_0001>

<llo_original>
// kernel: tpu_custom_call.1
$region0: #{tpu_custom_call.1}
  #allocation0 [shape = 'u32[]', space=smem, size = 0x4, offset = 0x4, fixed_abs, tag = 'smem constant byte address 0x4 - core index']
  #allocation1 [shape = 'u32[144,128]{1,0:T(1,128)}', space=vmem, size = 0x12000, scoped, tag = 'internal scratch']
  #allocation2 [shape = 'f32[6,10,10,4]{3,2,1,0:T(8,128)}', space=vmem, size = 0x78000, scoped, tag = 'scratch operand']
  #allocation3 [shape = 'f32[6,10,10,16]{3,2,1,0:T(8,128)}', space=vmem, size = 0x78000, scoped, tag = 'scratch operand']
  %s0 = inlined_call_operand.vmem [shape: f32[6,8,8,4], index: 0, kind: input, shape index: {}]
  %s1 = inlined_call_operand.vmem [shape: f32[36,16], index: 1, kind: input, shape index: {}]
  %s2 = inlined_call_operand.vmem [shape: f32[1,16], index: 2, kind: input, shape index: {}]
  %s3 = inlined_call_operand.vmem [shape: f32[1,16], index: 3, kind: input, shape index: {}]
  %s4 = inlined_call_operand.vmem [shape: f32[1,16], index: 4, kind: input, shape index: {}]
  %s5 = inlined_call_operand.vmem [shape: f32[144,8], index: 5, kind: input, shape index: {}]
  %s6 = inlined_call_operand.vmem [shape: f32[1,8], index: 6, kind: input, shape index: {}]
  %s7 = inlined_call_operand.vmem [shape: f32[384,8], index: 7, kind: output, shape index: {}]
  %s8 = sld [smem:[#allocation0]]
  $region38: #{tpu_custom_call.1} parent=0
    _
  %s10 = ssub.s32 1, %s8
  %s11 = scalar_select 0, %s10, %s8
  // Predicated region
  $region2: #{tpu_custom_call.1} parent=0 // pred_check
    _
  $region3: #{tpu_custom_call.1} parent=0 // pred_check_branch
    %13 = sbr.rel (0) target = $region5
  $region4: #{tpu_custom_call.1} parent=0 // pred_region
    _
  $region5: #{tpu_custom_call.1} parent=0 // pred_fallthru
    _
  // Predicated region
  $region6: #{tpu_custom_call.1} parent=0 // pred_check
    _
  $region7: #{tpu_custom_call.1} parent=0 // pred_check_branch
    %15 = sbr.rel (0) target = $region9
  $region8: #{tpu_custom_call.1} parent=0 // pred_region
    _
  $region9: #{tpu_custom_call.1} parent=0 // pred_fallthru
    _
  // Predicated region
  $region10: #{tpu_custom_call.1} parent=0 // pred_check
    _
  $region11: #{tpu_custom_call.1} parent=0 // pred_check_branch
    %17 = sbr.rel (0) target = $region13
  $region12: #{tpu_custom_call.1} parent=0 // pred_region
    _
  $region13: #{tpu_custom_call.1} parent=0 // pred_fallthru
    _
  // Predicated region
  $region14: #{tpu_custom_call.1} parent=0 // pred_check
    _
  $region15: #{tpu_custom_call.1} parent=0 // pred_check_branch
    %19 = sbr.rel (0) target = $region17
  $region16: #{tpu_custom_call.1} parent=0 // pred_region
    _
  $region17: #{tpu_custom_call.1} parent=0 // pred_fallthru
    _
  // Predicated region
  $region18: #{tpu_custom_call.1} parent=0 // pred_check
    _
  $region19: #{tpu_custom_call.1} parent=0 // pred_check_branch
    %21 = sbr.rel (0) target = $region21
  $region20: #{tpu_custom_call.1} parent=0 // pred_region
    _
  $region21: #{tpu_custom_call.1} parent=0 // pred_fallthru
    _
  // Predicated region
  $region22: #{tpu_custom_call.1} parent=0 // pred_check
    _
  $region23: #{tpu_custom_call.1} parent=0 // pred_check_branch
    %23 = sbr.rel (0) target = $region25
  $region24: #{tpu_custom_call.1} parent=0 // pred_region
    _
  $region25: #{tpu_custom_call.1} parent=0 // pred_fallthru
    _
  // Predicated region
  $region26: #{tpu_custom_call.1} parent=0 // pred_check
    _
  $region27: #{tpu_custom_call.1} parent=0 // pred_check_branch
    %25 = sbr.rel (0) target = $region29
  $region28: #{tpu_custom_call.1} parent=0 // pred_region
    _
  $region29: #{tpu_custom_call.1} parent=0 // pred_fallthru
    _
  %vm26 = vcmask 31744
  %27 = vst.msk [vmem:[#allocation2] sm:$0xff] %vm26, 0.0
  %vm28 = vcmask 25600
  %29 = vst.msk [vmem:[#allocation2 + $0x8] sm:$0x3] %vm28, 0.0
  %30 = vst.msk [vmem:[#allocation2 + $0x10] sm:$0xff] %vm26, 0.0
  %31 = vst.msk [vmem:[#allocation2 + $0x18] sm:$0x3] %vm28, 0.0
  %32 = vst.msk [vmem:[#allocation2 + $0x20] sm:$0xff] %vm26, 0.0
  %33 = vst.msk [vmem:[#allocation2 + $0x28] sm:$0x3] %vm28, 0.0
  %34 = vst.msk [vmem:[#allocation2 + $0x30] sm:$0xff] %vm26, 0.0
  %35 = vst.msk [vmem:[#allocation2 + $0x38] sm:$0x3] %vm28, 0.0
  %36 = vst.msk [vmem:[#allocation2 + $0x40] sm:$0xff] %vm26, 0.0
  %37 = vst.msk [vmem:[#allocation2 + $0x48] sm:$0x3] %vm28, 0.0
  %38 = vst.msk [vmem:[#allocation2 + $0x50] sm:$0xff] %vm26, 0.0
  %39 = vst.msk [vmem:[#allocation2 + $0x58] sm:$0x3] %vm28, 0.0
  %40 = vst.msk [vmem:[#allocation2 + $0x60] sm:$0xff] %vm26, 0.0
  %41 = vst.msk [vmem:[#allocation2 + $0x68] sm:$0x3] %vm28, 0.0
  %42 = vst.msk [vmem:[#allocation2 + $0x70] sm:$0xff] %vm26, 0.0
  %43 = vst.msk [vmem:[#allocation2 + $0x78] sm:$0x3] %vm28, 0.0
  %44 = vst.msk [vmem:[#allocation2 + $0x80] sm:$0xff] %vm26, 0.0
  %45 = vst.msk [vmem:[#allocation2 + $0x88] sm:$0x3] %vm28, 0.0
  %46 = vst.msk [vmem:[#allocation2 + $0x90] sm:$0xff] %vm26, 0.0
  %47 = vst.msk [vmem:[#allocation2 + $0x98] sm:$0x3] %vm28, 0.0
  %48 = vst.msk [vmem:[#allocation2 + $0xa0] sm:$0xff] %vm26, 0.0
  %49 = vst.msk [vmem:[#allocation2 + $0xa8] sm:$0x3] %vm28, 0.0
  %50 = vst.msk [vmem:[#allocation2 + $0xb0] sm:$0xff] %vm26, 0.0
  %51 = vst.msk [vmem:[#allocation2 + $0xb8] sm:$0x3] %vm28, 0.0
  %52 = vst.msk [vmem:[#allocation2 + $0xc0] sm:$0xff] %vm26, 0.0
  %53 = vst.msk [vmem:[#allocation2 + $0xc8] sm:$0x3] %vm28, 0.0
  %54 = vst.msk [vmem:[#allocation2 + $0xd0] sm:$0xff] %vm26, 0.0
  %55 = vst.msk [vmem:[#allocation2 + $0xd8] sm:$0x3] %vm28, 0.0
  %56 = vst.msk [vmem:[#allocation2 + $0xe0] sm:$0xff] %vm26, 0.0
  %57 = vst.msk [vmem:[#allocation2 + $0xe8] sm:$0x3] %vm28, 0.0
  %58 = vst.msk [vmem:[#allocation2 + $0xf0] sm:$0xff] %vm26, 0.0
  %59 = vst.msk [vmem:[#allocation2 + $0xf8] sm:$0x3] %vm28, 0.0
  %60 = vst.msk [vmem:[#allocation2 + $0x100] sm:$0xff] %vm26, 0.0
  %61 = vst.msk [vmem:[#allocation2 + $0x108] sm:$0x3] %vm28, 0.0
  %62 = vst.msk [vmem:[#allocation2 + $0x110] sm:$0xff] %vm26, 0.0
  %63 = vst.msk [vmem:[#allocation2 + $0x118] sm:$0x3] %vm28, 0.0
  %64 = vst.msk [vmem:[#allocation2 + $0x120] sm:$0xff] %vm26, 0.0
  %65 = vst.msk [vmem:[#allocation2 + $0x128] sm:$0x3] %vm28, 0.0
  %66 = vst.msk [vmem:[#allocation2 + $0x130] sm:$0xff] %vm26, 0.0
  %67 = vst.msk [vmem:[#allocation2 + $0x138] sm:$0x3] %vm28, 0.0
  %68 = vst.msk [vmem:[#allocation2 + $0x140] sm:$0xff] %vm26, 0.0
  %69 = vst.msk [vmem:[#allocation2 + $0x148] sm:$0x3] %vm28, 0.0
  %70 = vst.msk [vmem:[#allocation2 + $0x150] sm:$0xff] %vm26, 0.0
  %71 = vst.msk [vmem:[#allocation2 + $0x158] sm:$0x3] %vm28, 0.0
  %72 = vst.msk [vmem:[#allocation2 + $0x160] sm:$0xff] %vm26, 0.0
  %73 = vst.msk [vmem:[#allocation2 + $0x168] sm:$0x3] %vm28, 0.0
  %74 = vst.msk [vmem:[#allocation2 + $0x170] sm:$0xff] %vm26, 0.0
  %75 = vst.msk [vmem:[#allocation2 + $0x178] sm:$0x3] %vm28, 0.0
  %76 = vst.msk [vmem:[#allocation2 + $0x180] sm:$0xff] %vm26, 0.0
  %77 = vst.msk [vmem:[#allocation2 + $0x188] sm:$0x3] %vm28, 0.0
  %78 = vst.msk [vmem:[#allocation2 + $0x190] sm:$0xff] %vm26, 0.0
  %79 = vst.msk [vmem:[#allocation2 + $0x198] sm:$0x3] %vm28, 0.0
  %80 = vst.msk [vmem:[#allocation2 + $0x1a0] sm:$0xff] %vm26, 0.0
  %81 = vst.msk [vmem:[#allocation2 + $0x1a8] sm:$0x3] %vm28, 0.0
  %82 = vst.msk [vmem:[#allocation2 + $0x1b0] sm:$0xff] %vm26, 0.0
  %83 = vst.msk [vmem:[#allocation2 + $0x1b8] sm:$0x3] %vm28, 0.0
  %84 = vst.msk [vmem:[#allocation2 + $0x1c0] sm:$0xff] %vm26, 0.0
  %85 = vst.msk [vmem:[#allocation2 + $0x1c8] sm:$0x3] %vm28, 0.0
  %86 = vst.msk [vmem:[#allocation2 + $0x1d0] sm:$0xff] %vm26, 0.0
  %87 = vst.msk [vmem:[#allocation2 + $0x1d8] sm:$0x3] %vm28, 0.0
  %88 = vst.msk [vmem:[#allocation2 + $0x1e0] sm:$0xff] %vm26, 0.0
  %89 = vst.msk [vmem:[#allocation2 + $0x1e8] sm:$0x3] %vm28, 0.0
  %90 = vst.msk [vmem:[#allocation2 + $0x1f0] sm:$0xff] %vm26, 0.0
  %91 = vst.msk [vmem:[#allocation2 + $0x1f8] sm:$0x3] %vm28, 0.0
  %92 = vst.msk [vmem:[#allocation2 + $0x200] sm:$0xff] %vm26, 0.0
  %93 = vst.msk [vmem:[#allocation2 + $0x208] sm:$0x3] %vm28, 0.0
  %94 = vst.msk [vmem:[#allocation2 + $0x210] sm:$0xff] %vm26, 0.0
  %95 = vst.msk [vmem:[#allocation2 + $0x218] sm:$0x3] %vm28, 0.0
  %96 = vst.msk [vmem:[#allocation2 + $0x220] sm:$0xff] %vm26, 0.0
  %97 = vst.msk [vmem:[#allocation2 + $0x228] sm:$0x3] %vm28, 0.0
  %98 = vst.msk [vmem:[#allocation2 + $0x230] sm:$0xff] %vm26, 0.0
  %99 = vst.msk [vmem:[#allocation2 + $0x238] sm:$0x3] %vm28, 0.0
  %100 = vst.msk [vmem:[#allocation2 + $0x240] sm:$0xff] %vm26, 0.0
  %101 = vst.msk [vmem:[#allocation2 + $0x248] sm:$0x3] %vm28, 0.0
  %102 = vst.msk [vmem:[#allocation2 + $0x250] sm:$0xff] %vm26, 0.0
  %103 = vst.msk [vmem:[#allocation2 + $0x258] sm:$0x3] %vm28, 0.0
  %104 = vst.msk [vmem:[#allocation2 + $0x260] sm:$0xff] %vm26, 0.0
  %105 = vst.msk [vmem:[#allocation2 + $0x268] sm:$0x3] %vm28, 0.0
  %106 = vst.msk [vmem:[#allocation2 + $0x270] sm:$0xff] %vm26, 0.0
  %107 = vst.msk [vmem:[#allocation2 + $0x278] sm:$0x3] %vm28, 0.0
  %108 = vst.msk [vmem:[#allocation2 + $0x280] sm:$0xff] %vm26, 0.0
  %109 = vst.msk [vmem:[#allocation2 + $0x288] sm:$0x3] %vm28, 0.0
  %110 = vst.msk [vmem:[#allocation2 + $0x290] sm:$0xff] %vm26, 0.0
  %111 = vst.msk [vmem:[#allocation2 + $0x298] sm:$0x3] %vm28, 0.0
  %112 = vst.msk [vmem:[#allocation2 + $0x2a0] sm:$0xff] %vm26, 0.0
  %113 = vst.msk [vmem:[#allocation2 + $0x2a8] sm:$0x3] %vm28, 0.0
  %114 = vst.msk [vmem:[#allocation2 + $0x2b0] sm:$0xff] %vm26, 0.0
  %115 = vst.msk [vmem:[#allocation2 + $0x2b8] sm:$0x3] %vm28, 0.0
  %116 = vst.msk [vmem:[#allocation2 + $0x2c0] sm:$0xff] %vm26, 0.0
  %117 = vst.msk [vmem:[#allocation2 + $0x2c8] sm:$0x3] %vm28, 0.0
  %118 = vst.msk [vmem:[#allocation2 + $0x2d0] sm:$0xff] %vm26, 0.0
  %119 = vst.msk [vmem:[#allocation2 + $0x2d8] sm:$0x3] %vm28, 0.0
  %120 = vst.msk [vmem:[#allocation2 + $0x2e0] sm:$0xff] %vm26, 0.0
  %121 = vst.msk [vmem:[#allocation2 + $0x2e8] sm:$0x3] %vm28, 0.0
  %122 = vst.msk [vmem:[#allocation2 + $0x2f0] sm:$0xff] %vm26, 0.0
  %123 = vst.msk [vmem:[#allocation2 + $0x2f8] sm:$0x3] %vm28, 0.0
  %124 = vst.msk [vmem:[#allocation2 + $0x300] sm:$0xff] %vm26, 0.0
  %125 = vst.msk [vmem:[#allocation2 + $0x308] sm:$0x3] %vm28, 0.0
  %126 = vst.msk [vmem:[#allocation2 + $0x310] sm:$0xff] %vm26, 0.0
  %127 = vst.msk [vmem:[#allocation2 + $0x318] sm:$0x3] %vm28, 0.0
  %128 = vst.msk [vmem:[#allocation2 + $0x320] sm:$0xff] %vm26, 0.0
  %129 = vst.msk [vmem:[#allocation2 + $0x328] sm:$0x3] %vm28, 0.0
  %130 = vst.msk [vmem:[#allocation2 + $0x330] sm:$0xff] %vm26, 0.0
  %131 = vst.msk [vmem:[#allocation2 + $0x338] sm:$0x3] %vm28, 0.0
  %132 = vst.msk [vmem:[#allocation2 + $0x340] sm:$0xff] %vm26, 0.0
  %133 = vst.msk [vmem:[#allocation2 + $0x348] sm:$0x3] %vm28, 0.0
  %134 = vst.msk [vmem:[#allocation2 + $0x350] sm:$0xff] %vm26, 0.0
  %135 = vst.msk [vmem:[#allocation2 + $0x358] sm:$0x3] %vm28, 0.0
  %136 = vst.msk [vmem:[#allocation2 + $0x360] sm:$0xff] %vm26, 0.0
  %137 = vst.msk [vmem:[#allocation2 + $0x368] sm:$0x3] %vm28, 0.0
  %138 = vst.msk [vmem:[#allocation2 + $0x370] sm:$0xff] %vm26, 0.0
  %139 = vst.msk [vmem:[#allocation2 + $0x378] sm:$0x3] %vm28, 0.0
  %140 = vst.msk [vmem:[#allocation2 + $0x380] sm:$0xff] %vm26, 0.0
  %141 = vst.msk [vmem:[#allocation2 + $0x388] sm:$0x3] %vm28, 0.0
  %142 = vst.msk [vmem:[#allocation2 + $0x390] sm:$0xff] %vm26, 0.0
  %143 = vst.msk [vmem:[#allocation2 + $0x398] sm:$0x3] %vm28, 0.0
  %144 = vst.msk [vmem:[#allocation2 + $0x3a0] sm:$0xff] %vm26, 0.0
  %145 = vst.msk [vmem:[#allocation2 + $0x3a8] sm:$0x3] %vm28, 0.0
  %146 = vst.msk [vmem:[#allocation2 + $0x3b0] sm:$0xff] %vm26, 0.0
  %147 = vst.msk [vmem:[#allocation2 + $0x3b8] sm:$0x3] %vm28, 0.0
  %vm148 = vcmask 130048
  %149 = vst.msk [vmem:[#allocation3] sm:$0xff] %vm148, 0.0
  %vm150 = vcmask 123904
  %151 = vst.msk [vmem:[#allocation3 + $0x8] sm:$0x3] %vm150, 0.0
  %152 = vst.msk [vmem:[#allocation3 + $0x10] sm:$0xff] %vm148, 0.0
  %153 = vst.msk [vmem:[#allocation3 + $0x18] sm:$0x3] %vm150, 0.0
  %154 = vst.msk [vmem:[#allocation3 + $0x20] sm:$0xff] %vm148, 0.0
  %155 = vst.msk [vmem:[#allocation3 + $0x28] sm:$0x3] %vm150, 0.0
  %156 = vst.msk [vmem:[#allocation3 + $0x30] sm:$0xff] %vm148, 0.0
  %157 = vst.msk [vmem:[#allocation3 + $0x38] sm:$0x3] %vm150, 0.0
  %158 = vst.msk [vmem:[#allocation3 + $0x40] sm:$0xff] %vm148, 0.0
  %159 = vst.msk [vmem:[#allocation3 + $0x48] sm:$0x3] %vm150, 0.0
  %160 = vst.msk [vmem:[#allocation3 + $0x50] sm:$0xff] %vm148, 0.0
  %161 = vst.msk [vmem:[#allocation3 + $0x58] sm:$0x3] %vm150, 0.0
  %162 = vst.msk [vmem:[#allocation3 + $0x60] sm:$0xff] %vm148, 0.0
  %163 = vst.msk [vmem:[#allocation3 + $0x68] sm:$0x3] %vm150, 0.0
  %164 = vst.msk [vmem:[#allocation3 + $0x70] sm:$0xff] %vm148, 0.0
  %165 = vst.msk [vmem:[#allocation3 + $0x78] sm:$0x3] %vm150, 0.0
  %166 = vst.msk [vmem:[#allocation3 + $0x80] sm:$0xff] %vm148, 0.0
  %167 = vst.msk [vmem:[#allocation3 + $0x88] sm:$0x3] %vm150, 0.0
  %168 = vst.msk [vmem:[#allocation3 + $0x90] sm:$0xff] %vm148, 0.0
  %169 = vst.msk [vmem:[#allocation3 + $0x98] sm:$0x3] %vm150, 0.0
  %170 = vst.msk [vmem:[#allocation3 + $0xa0] sm:$0xff] %vm148, 0.0
  %171 = vst.msk [vmem:[#allocation3 + $0xa8] sm:$0x3] %vm150, 0.0
  %172 = vst.msk [vmem:[#allocation3 + $0xb0] sm:$0xff] %vm148, 0.0
  %173 = vst.msk [vmem:[#allocation3 + $0xb8] sm:$0x3] %vm150, 0.0
  %174 = vst.msk [vmem:[#allocation3 + $0xc0] sm:$0xff] %vm148, 0.0
  %175 = vst.msk [vmem:[#allocation3 + $0xc8] sm:$0x3] %vm150, 0.0
  %176 = vst.msk [vmem:[#allocation3 + $0xd0] sm:$0xff] %vm148, 0.0
  %177 = vst.msk [vmem:[#allocation3 + $0xd8] sm:$0x3] %vm150, 0.0
  %178 = vst.msk [vmem:[#allocation3 + $0xe0] sm:$0xff] %vm148, 0.0
  %179 = vst.msk [vmem:[#allocation3 + $0xe8] sm:$0x3] %vm150, 0.0
  %180 = vst.msk [vmem:[#allocation3 + $0xf0] sm:$0xff] %vm148, 0.0
  %181 = vst.msk [vmem:[#allocation3 + $0xf8] sm:$0x3] %vm150, 0.0
  %182 = vst.msk [vmem:[#allocation3 + $0x100] sm:$0xff] %vm148, 0.0
  %183 = vst.msk [vmem:[#allocation3 + $0x108] sm:$0x3] %vm150, 0.0
  %184 = vst.msk [vmem:[#allocation3 + $0x110] sm:$0xff] %vm148, 0.0
  %185 = vst.msk [vmem:[#allocation3 + $0x118] sm:$0x3] %vm150, 0.0
  %186 = vst.msk [vmem:[#allocation3 + $0x120] sm:$0xff] %vm148, 0.0
  %187 = vst.msk [vmem:[#allocation3 + $0x128] sm:$0x3] %vm150, 0.0
  %188 = vst.msk [vmem:[#allocation3 + $0x130] sm:$0xff] %vm148, 0.0
  %189 = vst.msk [vmem:[#allocation3 + $0x138] sm:$0x3] %vm150, 0.0
  %190 = vst.msk [vmem:[#allocation3 + $0x140] sm:$0xff] %vm148, 0.0
  %191 = vst.msk [vmem:[#allocation3 + $0x148] sm:$0x3] %vm150, 0.0
  %192 = vst.msk [vmem:[#allocation3 + $0x150] sm:$0xff] %vm148, 0.0
  %193 = vst.msk [vmem:[#allocation3 + $0x158] sm:$0x3] %vm150, 0.0
  %194 = vst.msk [vmem:[#allocation3 + $0x160] sm:$0xff] %vm148, 0.0
  %195 = vst.msk [vmem:[#allocation3 + $0x168] sm:$0x3] %vm150, 0.0
  %196 = vst.msk [vmem:[#allocation3 + $0x170] sm:$0xff] %vm148, 0.0
  %197 = vst.msk [vmem:[#allocation3 + $0x178] sm:$0x3] %vm150, 0.0
  %198 = vst.msk [vmem:[#allocation3 + $0x180] sm:$0xff] %vm148, 0.0
  %199 = vst.msk [vmem:[#allocation3 + $0x188] sm:$0x3] %vm150, 0.0
  %200 = vst.msk [vmem:[#allocation3 + $0x190] sm:$0xff] %vm148, 0.0
  %201 = vst.msk [vmem:[#allocation3 + $0x198] sm:$0x3] %vm150, 0.0
  %202 = vst.msk [vmem:[#allocation3 + $0x1a0] sm:$0xff] %vm148, 0.0
  %203 = vst.msk [vmem:[#allocation3 + $0x1a8] sm:$0x3] %vm150, 0.0
  %204 = vst.msk [vmem:[#allocation3 + $0x1b0] sm:$0xff] %vm148, 0.0
  %205 = vst.msk [vmem:[#allocation3 + $0x1b8] sm:$0x3] %vm150, 0.0
  %206 = vst.msk [vmem:[#allocation3 + $0x1c0] sm:$0xff] %vm148, 0.0
  %207 = vst.msk [vmem:[#allocation3 + $0x1c8] sm:$0x3] %vm150, 0.0
  %208 = vst.msk [vmem:[#allocation3 + $0x1d0] sm:$0xff] %vm148, 0.0
  %209 = vst.msk [vmem:[#allocation3 + $0x1d8] sm:$0x3] %vm150, 0.0
  %210 = vst.msk [vmem:[#allocation3 + $0x1e0] sm:$0xff] %vm148, 0.0
  %211 = vst.msk [vmem:[#allocation3 + $0x1e8] sm:$0x3] %vm150, 0.0
  %212 = vst.msk [vmem:[#allocation3 + $0x1f0] sm:$0xff] %vm148, 0.0
  %213 = vst.msk [vmem:[#allocation3 + $0x1f8] sm:$0x3] %vm150, 0.0
  %214 = vst.msk [vmem:[#allocation3 + $0x200] sm:$0xff] %vm148, 0.0
  %215 = vst.msk [vmem:[#allocation3 + $0x208] sm:$0x3] %vm150, 0.0
  %216 = vst.msk [vmem:[#allocation3 + $0x210] sm:$0xff] %vm148, 0.0
  %217 = vst.msk [vmem:[#allocation3 + $0x218] sm:$0x3] %vm150, 0.0
  %218 = vst.msk [vmem:[#allocation3 + $0x220] sm:$0xff] %vm148, 0.0
  %219 = vst.msk [vmem:[#allocation3 + $0x228] sm:$0x3] %vm150, 0.0
  %220 = vst.msk [vmem:[#allocation3 + $0x230] sm:$0xff] %vm148, 0.0
  %221 = vst.msk [vmem:[#allocation3 + $0x238] sm:$0x3] %vm150, 0.0
  %222 = vst.msk [vmem:[#allocation3 + $0x240] sm:$0xff] %vm148, 0.0
  %223 = vst.msk [vmem:[#allocation3 + $0x248] sm:$0x3] %vm150, 0.0
  %224 = vst.msk [vmem:[#allocation3 + $0x250] sm:$0xff] %vm148, 0.0
  %225 = vst.msk [vmem:[#allocation3 + $0x258] sm:$0x3] %vm150, 0.0
  %226 = vst.msk [vmem:[#allocation3 + $0x260] sm:$0xff] %vm148, 0.0
  %227 = vst.msk [vmem:[#allocation3 + $0x268] sm:$0x3] %vm150, 0.0
  %228 = vst.msk [vmem:[#allocation3 + $0x270] sm:$0xff] %vm148, 0.0
  %229 = vst.msk [vmem:[#allocation3 + $0x278] sm:$0x3] %vm150, 0.0
  %230 = vst.msk [vmem:[#allocation3 + $0x280] sm:$0xff] %vm148, 0.0
  %231 = vst.msk [vmem:[#allocation3 + $0x288] sm:$0x3] %vm150, 0.0
  %232 = vst.msk [vmem:[#allocation3 + $0x290] sm:$0xff] %vm148, 0.0
  %233 = vst.msk [vmem:[#allocation3 + $0x298] sm:$0x3] %vm150, 0.0
  %234 = vst.msk [vmem:[#allocation3 + $0x2a0] sm:$0xff] %vm148, 0.0
  %235 = vst.msk [vmem:[#allocation3 + $0x2a8] sm:$0x3] %vm150, 0.0
  %236 = vst.msk [vmem:[#allocation3 + $0x2b0] sm:$0xff] %vm148, 0.0
  %237 = vst.msk [vmem:[#allocation3 + $0x2b8] sm:$0x3] %vm150, 0.0
  %238 = vst.msk [vmem:[#allocation3 + $0x2c0] sm:$0xff] %vm148, 0.0
  %239 = vst.msk [vmem:[#allocation3 + $0x2c8] sm:$0x3] %vm150, 0.0
  %240 = vst.msk [vmem:[#allocation3 + $0x2d0] sm:$0xff] %vm148, 0.0
  %241 = vst.msk [vmem:[#allocation3 + $0x2d8] sm:$0x3] %vm150, 0.0
  %242 = vst.msk [vmem:[#allocation3 + $0x2e0] sm:$0xff] %vm148, 0.0
  %243 = vst.msk [vmem:[#allocation3 + $0x2e8] sm:$0x3] %vm150, 0.0
  %244 = vst.msk [vmem:[#allocation3 + $0x2f0] sm:$0xff] %vm148, 0.0
  %245 = vst.msk [vmem:[#allocation3 + $0x2f8] sm:$0x3] %vm150, 0.0
  %246 = vst.msk [vmem:[#allocation3 + $0x300] sm:$0xff] %vm148, 0.0
  %247 = vst.msk [vmem:[#allocation3 + $0x308] sm:$0x3] %vm150, 0.0
  %248 = vst.msk [vmem:[#allocation3 + $0x310] sm:$0xff] %vm148, 0.0
  %249 = vst.msk [vmem:[#allocation3 + $0x318] sm:$0x3] %vm150, 0.0
  %250 = vst.msk [vmem:[#allocation3 + $0x320] sm:$0xff] %vm148, 0.0
  %251 = vst.msk [vmem:[#allocation3 + $0x328] sm:$0x3] %vm150, 0.0
  %252 = vst.msk [vmem:[#allocation3 + $0x330] sm:$0xff] %vm148, 0.0
  %253 = vst.msk [vmem:[#allocation3 + $0x338] sm:$0x3] %vm150, 0.0
  %254 = vst.msk [vmem:[#allocation3 + $0x340] sm:$0xff] %vm148, 0.0
  %255 = vst.msk [vmem:[#allocation3 + $0x348] sm:$0x3] %vm150, 0.0
  %256 = vst.msk [vmem:[#allocation3 + $0x350] sm:$0xff] %vm148, 0.0
  %257 = vst.msk [vmem:[#allocation3 + $0x358] sm:$0x3] %vm150, 0.0
  %258 = vst.msk [vmem:[#allocation3 + $0x360] sm:$0xff] %vm148, 0.0
  %259 = vst.msk [vmem:[#allocation3 + $0x368] sm:$0x3] %vm150, 0.0
  %260 = vst.msk [vmem:[#allocation3 + $0x370] sm:$0xff] %vm148, 0.0
  %261 = vst.msk [vmem:[#allocation3 + $0x378] sm:$0x3] %vm150, 0.0
  %262 = vst.msk [vmem:[#allocation3 + $0x380] sm:$0xff] %vm148, 0.0
  %263 = vst.msk [vmem:[#allocation3 + $0x388] sm:$0x3] %vm150, 0.0
  %264 = vst.msk [vmem:[#allocation3 + $0x390] sm:$0xff] %vm148, 0.0
  %265 = vst.msk [vmem:[#allocation3 + $0x398] sm:$0x3] %vm150, 0.0
  %266 = vst.msk [vmem:[#allocation3 + $0x3a0] sm:$0xff] %vm148, 0.0
  %267 = vst.msk [vmem:[#allocation3 + $0x3a8] sm:$0x3] %vm150, 0.0
  %268 = vst.msk [vmem:[#allocation3 + $0x3b0] sm:$0xff] %vm148, 0.0
  %269 = vst.msk [vmem:[#allocation3 + $0x3b8] sm:$0x3] %vm150, 0.0
  %v270 = vld [vmem:[%s0] sm:$0xff]
  %v271 = vld [vmem:[%s0 + $0x8] sm:$0xff]
  %v272 = vld [vmem:[%s0 + $0x10] sm:$0xff]
  %v273 = vld [vmem:[%s0 + $0x18] sm:$0xff]
  %v274 = vld [vmem:[%s0 + $0x20] sm:$0xff]
  %v275 = vld [vmem:[%s0 + $0x28] sm:$0xff]
  %v276 = vld [vmem:[%s0 + $0x30] sm:$0xff]
  %v277 = vld [vmem:[%s0 + $0x38] sm:$0xff]
  %v278 = vld [vmem:[%s0 + $0x40] sm:$0xff]
  %v279 = vld [vmem:[%s0 + $0x48] sm:$0xff]
  %v280 = vld [vmem:[%s0 + $0x50] sm:$0xff]
  %v281 = vld [vmem:[%s0 + $0x58] sm:$0xff]
  %v282 = vld [vmem:[%s0 + $0x60] sm:$0xff]
  %v283 = vld [vmem:[%s0 + $0x68] sm:$0xff]
  %v284 = vld [vmem:[%s0 + $0x70] sm:$0xff]
  %v285 = vld [vmem:[%s0 + $0x78] sm:$0xff]
  %v286 = vld [vmem:[%s0 + $0x80] sm:$0xff]
  %v287 = vld [vmem:[%s0 + $0x88] sm:$0xff]
  %v288 = vld [vmem:[%s0 + $0x90] sm:$0xff]
  %v289 = vld [vmem:[%s0 + $0x98] sm:$0xff]
  %v290 = vld [vmem:[%s0 + $0xa0] sm:$0xff]
  %v291 = vld [vmem:[%s0 + $0xa8] sm:$0xff]
  %v292 = vld [vmem:[%s0 + $0xb0] sm:$0xff]
  %v293 = vld [vmem:[%s0 + $0xb8] sm:$0xff]
  %v294 = vld [vmem:[%s0 + $0xc0] sm:$0xff]
  %v295 = vld [vmem:[%s0 + $0xc8] sm:$0xff]
  %v296 = vld [vmem:[%s0 + $0xd0] sm:$0xff]
  %v297 = vld [vmem:[%s0 + $0xd8] sm:$0xff]
  %v298 = vld [vmem:[%s0 + $0xe0] sm:$0xff]
  %v299 = vld [vmem:[%s0 + $0xe8] sm:$0xff]
  %v300 = vld [vmem:[%s0 + $0xf0] sm:$0xff]
  %v301 = vld [vmem:[%s0 + $0xf8] sm:$0xff]
  %v302 = vld [vmem:[%s0 + $0x100] sm:$0xff]
  %v303 = vld [vmem:[%s0 + $0x108] sm:$0xff]
  %v304 = vld [vmem:[%s0 + $0x110] sm:$0xff]
  %v305 = vld [vmem:[%s0 + $0x118] sm:$0xff]
  %v306 = vld [vmem:[%s0 + $0x120] sm:$0xff]
  %v307 = vld [vmem:[%s0 + $0x128] sm:$0xff]
  %v308 = vld [vmem:[%s0 + $0x130] sm:$0xff]
  %v309 = vld [vmem:[%s0 + $0x138] sm:$0xff]
  %v310 = vld [vmem:[%s0 + $0x140] sm:$0xff]
  %v311 = vld [vmem:[%s0 + $0x148] sm:$0xff]
  %v312 = vld [vmem:[%s0 + $0x150] sm:$0xff]
  %v313 = vld [vmem:[%s0 + $0x158] sm:$0xff]
  %v314 = vld [vmem:[%s0 + $0x160] sm:$0xff]
  %v315 = vld [vmem:[%s0 + $0x168] sm:$0xff]
  %v316 = vld [vmem:[%s0 + $0x170] sm:$0xff]
  %v317 = vld [vmem:[%s0 + $0x178] sm:$0xff]
  %s318 = scalar_lea.vmem [#allocation2], 16
  %319 = vst.msk [vmem:[%s318 + $0x1] sm:$0xff] %vm26, %v270
  %320 = vst.msk [vmem:[%s318 + $0x11] sm:$0xff] %vm26, %v271
  %321 = vst.msk [vmem:[%s318 + $0x21] sm:$0xff] %vm26, %v272
  %322 = vst.msk [vmem:[%s318 + $0x31] sm:$0xff] %vm26, %v273
  %323 = vst.msk [vmem:[%s318 + $0x41] sm:$0xff] %vm26, %v274
  %324 = vst.msk [vmem:[%s318 + $0x51] sm:$0xff] %vm26, %v275
  %325 = vst.msk [vmem:[%s318 + $0x61] sm:$0xff] %vm26, %v276
  %326 = vst.msk [vmem:[%s318 + $0x71] sm:$0xff] %vm26, %v277
  %327 = vst.msk [vmem:[%s318 + $0xa1] sm:$0xff] %vm26, %v278
  %328 = vst.msk [vmem:[%s318 + $0xb1] sm:$0xff] %vm26, %v279
  %329 = vst.msk [vmem:[%s318 + $0xc1] sm:$0xff] %vm26, %v280
  %330 = vst.msk [vmem:[%s318 + $0xd1] sm:$0xff] %vm26, %v281
  %331 = vst.msk [vmem:[%s318 + $0xe1] sm:$0xff] %vm26, %v282
  %332 = vst.msk [vmem:[%s318 + $0xf1] sm:$0xff] %vm26, %v283
  %333 = vst.msk [vmem:[%s318 + $0x101] sm:$0xff] %vm26, %v284
  %334 = vst.msk [vmem:[%s318 + $0x111] sm:$0xff] %vm26, %v285
  %335 = vst.msk [vmem:[%s318 + $0x141] sm:$0xff] %vm26, %v286
  %336 = vst.msk [vmem:[%s318 + $0x151] sm:$0xff] %vm26, %v287
  %337 = vst.msk [vmem:[%s318 + $0x161] sm:$0xff] %vm26, %v288
  %338 = vst.msk [vmem:[%s318 + $0x171] sm:$0xff] %vm26, %v289
  %339 = vst.msk [vmem:[%s318 + $0x181] sm:$0xff] %vm26, %v290
  %340 = vst.msk [vmem:[%s318 + $0x191] sm:$0xff] %vm26, %v291
  %341 = vst.msk [vmem:[%s318 + $0x1a1] sm:$0xff] %vm26, %v292
  %342 = vst.msk [vmem:[%s318 + $0x1b1] sm:$0xff] %vm26, %v293
  %343 = vst.msk [vmem:[%s318 + $0x1e1] sm:$0xff] %vm26, %v294
  %344 = vst.msk [vmem:[%s318 + $0x1f1] sm:$0xff] %vm26, %v295
  %345 = vst.msk [vmem:[%s318 + $0x201] sm:$0xff] %vm26, %v296
  %346 = vst.msk [vmem:[%s318 + $0x211] sm:$0xff] %vm26, %v297
  %347 = vst.msk [vmem:[%s318 + $0x221] sm:$0xff] %vm26, %v298
  %348 = vst.msk [vmem:[%s318 + $0x231] sm:$0xff] %vm26, %v299
  %349 = vst.msk [vmem:[%s318 + $0x241] sm:$0xff] %vm26, %v300
  %350 = vst.msk [vmem:[%s318 + $0x251] sm:$0xff] %vm26, %v301
  %351 = vst.msk [vmem:[%s318 + $0x281] sm:$0xff] %vm26, %v302
  %352 = vst.msk [vmem:[%s318 + $0x291] sm:$0xff] %vm26, %v303
  %353 = vst.msk [vmem:[%s318 + $0x2a1] sm:$0xff] %vm26, %v304
  %354 = vst.msk [vmem:[%s318 + $0x2b1] sm:$0xff] %vm26, %v305
  %355 = vst.msk [vmem:[%s318 + $0x2c1] sm:$0xff] %vm26, %v306
  %356 = vst.msk [vmem:[%s318 + $0x2d1] sm:$0xff] %vm26, %v307
  %357 = vst.msk [vmem:[%s318 + $0x2e1] sm:$0xff] %vm26, %v308
  %358 = vst.msk [vmem:[%s318 + $0x2f1] sm:$0xff] %vm26, %v309
  %359 = vst.msk [vmem:[%s318 + $0x321] sm:$0xff] %vm26, %v310
  %360 = vst.msk [vmem:[%s318 + $0x331] sm:$0xff] %vm26, %v311
  %361 = vst.msk [vmem:[%s318 + $0x341] sm:$0xff] %vm26, %v312
  %362 = vst.msk [vmem:[%s318 + $0x351] sm:$0xff] %vm26, %v313
  %363 = vst.msk [vmem:[%s318 + $0x361] sm:$0xff] %vm26, %v314
  %364 = vst.msk [vmem:[%s318 + $0x371] sm:$0xff] %vm26, %v315
  %365 = vst.msk [vmem:[%s318 + $0x381] sm:$0xff] %vm26, %v316
  %366 = vst.msk [vmem:[%s318 + $0x391] sm:$0xff] %vm26, %v317
  %v367 = vld [vmem:[#allocation2] sm:$0xff]
  %v368 = vld [vmem:[#allocation2 + $0x10] sm:$0xff]
  %v369 = vld [vmem:[#allocation2 + $0x20] sm:$0xff]
  %v370 = vld [vmem:[#allocation2 + $0x30] sm:$0xff]
  %v371 = vld [vmem:[#allocation2 + $0x40] sm:$0xff]
  %v372 = vld [vmem:[#allocation2 + $0x50] sm:$0xff]
  %v373 = vld [vmem:[#allocation2 + $0x60] sm:$0xff]
  %v374 = vld [vmem:[#allocation2 + $0x70] sm:$0xff]
  %v375 = vld [vmem:[#allocation2 + $0xa0] sm:$0xff]
  %v376 = vld [vmem:[#allocation2 + $0xb0] sm:$0xff]
  %v377 = vld [vmem:[#allocation2 + $0xc0] sm:$0xff]
  %v378 = vld [vmem:[#allocation2 + $0xd0] sm:$0xff]
  %v379 = vld [vmem:[#allocation2 + $0xe0] sm:$0xff]
  %v380 = vld [vmem:[#allocation2 + $0xf0] sm:$0xff]
  %v381 = vld [vmem:[#allocation2 + $0x100] sm:$0xff]
  %v382 = vld [vmem:[#allocation2 + $0x110] sm:$0xff]
  %v383 = vld [vmem:[#allocation2 + $0x140] sm:$0xff]
  %v384 = vld [vmem:[#allocation2 + $0x150] sm:$0xff]
  %v385 = vld [vmem:[#allocation2 + $0x160] sm:$0xff]
  %v386 = vld [vmem:[#allocation2 + $0x170] sm:$0xff]
  %v387 = vld [vmem:[#allocation2 + $0x180] sm:$0xff]
  %v388 = vld [vmem:[#allocation2 + $0x190] sm:$0xff]
  %v389 = vld [vmem:[#allocation2 + $0x1a0] sm:$0xff]
  %v390 = vld [vmem:[#allocation2 + $0x1b0] sm:$0xff]
  %v391 = vld [vmem:[#allocation2 + $0x1e0] sm:$0xff]
  %v392 = vld [vmem:[#allocation2 + $0x1f0] sm:$0xff]
  %v393 = vld [vmem:[#allocation2 + $0x200] sm:$0xff]
  %v394 = vld [vmem:[#allocation2 + $0x210] sm:$0xff]
  %v395 = vld [vmem:[#allocation2 + $0x220] sm:$0xff]
  %v396 = vld [vmem:[#allocation2 + $0x230] sm:$0xff]
  %v397 = vld [vmem:[#allocation2 + $0x240] sm:$0xff]
  %v398 = vld [vmem:[#allocation2 + $0x250] sm:$0xff]
  %v399 = vld [vmem:[#allocation2 + $0x280] sm:$0xff]
  %v400 = vld [vmem:[#allocation2 + $0x290] sm:$0xff]
  %v401 = vld [vmem:[#allocation2 + $0x2a0] sm:$0xff]
  %v402 = vld [vmem:[#allocation2 + $0x2b0] sm:$0xff]
  %v403 = vld [vmem:[#allocation2 + $0x2c0] sm:$0xff]
  %v404 = vld [vmem:[#allocation2 + $0x2d0] sm:$0xff]
  %v405 = vld [vmem:[#allocation2 + $0x2e0] sm:$0xff]
  %v406 = vld [vmem:[#allocation2 + $0x2f0] sm:$0xff]
  %v407 = vld [vmem:[#allocation2 + $0x320] sm:$0xff]
  %v408 = vld [vmem:[#allocation2 + $0x330] sm:$0xff]
  %v409 = vld [vmem:[#allocation2 + $0x340] sm:$0xff]
  %v410 = vld [vmem:[#allocation2 + $0x350] sm:$0xff]
  %v411 = vld [vmem:[#allocation2 + $0x360] sm:$0xff]
  %v412 = vld [vmem:[#allocation2 + $0x370] sm:$0xff]
  %v413 = vld [vmem:[#allocation2 + $0x380] sm:$0xff]
  %v414 = vld [vmem:[#allocation2 + $0x390] sm:$0xff]
  %v415 = vld [vmem:[#allocation2 + $0x1] sm:$0xff]
  %v416 = vld [vmem:[#allocation2 + $0x11] sm:$0xff]
  %v417 = vld [vmem:[#allocation2 + $0x21] sm:$0xff]
  %v418 = vld [vmem:[#allocation2 + $0x31] sm:$0xff]
  %v419 = vld [vmem:[#allocation2 + $0x41] sm:$0xff]
  %v420 = vld [vmem:[#allocation2 + $0x51] sm:$0xff]
  %v421 = vld [vmem:[#allocation2 + $0x61] sm:$0xff]
  %v422 = vld [vmem:[#allocation2 + $0x71] sm:$0xff]
  %v423 = vld [vmem:[#allocation2 + $0xa1] sm:$0xff]
  %v424 = vld [vmem:[#allocation2 + $0xb1] sm:$0xff]
  %v425 = vld [vmem:[#allocation2 + $0xc1] sm:$0xff]
  %v426 = vld [vmem:[#allocation2 + $0xd1] sm:$0xff]
  %v427 = vld [vmem:[#allocation2 + $0xe1] sm:$0xff]
  %v428 = vld [vmem:[#allocation2 + $0xf1] sm:$0xff]
  %v429 = vld [vmem:[#allocation2 + $0x101] sm:$0xff]
  %v430 = vld [vmem:[#allocation2 + $0x111] sm:$0xff]
  %v431 = vld [vmem:[#allocation2 + $0x141] sm:$0xff]
  %v432 = vld [vmem:[#allocation2 + $0x151] sm:$0xff]
  %v433 = vld [vmem:[#allocation2 + $0x161] sm:$0xff]
  %v434 = vld [vmem:[#allocation2 + $0x171] sm:$0xff]
  %v435 = vld [vmem:[#allocation2 + $0x181] sm:$0xff]
  %v436 = vld [vmem:[#allocation2 + $0x191] sm:$0xff]
  %v437 = vld [vmem:[#allocation2 + $0x1a1] sm:$0xff]
  %v438 = vld [vmem:[#allocation2 + $0x1b1] sm:$0xff]
  %v439 = vld [vmem:[#allocation2 + $0x1e1] sm:$0xff]
  %v440 = vld [vmem:[#allocation2 + $0x1f1] sm:$0xff]
  %v441 = vld [vmem:[#allocation2 + $0x201] sm:$0xff]
  %v442 = vld [vmem:[#allocation2 + $0x211] sm:$0xff]
  %v443 = vld [vmem:[#allocation2 + $0x221] sm:$0xff]
  %v444 = vld [vmem:[#allocation2 + $0x231] sm:$0xff]
  %v445 = vld [vmem:[#allocation2 + $0x241] sm:$0xff]
  %v446 = vld [vmem:[#allocation2 + $0x251] sm:$0xff]
  %v447 = vld [vmem:[#allocation2 + $0x281] sm:$0xff]
  %v448 = vld [vmem:[#allocation2 + $0x291] sm:$0xff]
  %v449 = vld [vmem:[#allocation2 + $0x2a1] sm:$0xff]
  %v450 = vld [vmem:[#allocation2 + $0x2b1] sm:$0xff]
  %v451 = vld [vmem:[#allocation2 + $0x2c1] sm:$0xff]
  %v452 = vld [vmem:[#allocation2 + $0x2d1] sm:$0xff]
  %v453 = vld [vmem:[#allocation2 + $0x2e1] sm:$0xff]
  %v454 = vld [vmem:[#allocation2 + $0x2f1] sm:$0xff]
  %v455 = vld [vmem:[#allocation2 + $0x321] sm:$0xff]
  %v456 = vld [vmem:[#allocation2 + $0x331] sm:$0xff]
  %v457 = vld [vmem:[#allocation2 + $0x341] sm:$0xff]
  %v458 = vld [vmem:[#allocation2 + $0x351] sm:$0xff]
  %v459 = vld [vmem:[#allocation2 + $0x361] sm:$0xff]
  %v460 = vld [vmem:[#allocation2 + $0x371] sm:$0xff]
  %v461 = vld [vmem:[#allocation2 + $0x381] sm:$0xff]
  %v462 = vld [vmem:[#allocation2 + $0x391] sm:$0xff]
  %v463 = vld [vmem:[#allocation2 + $0x2] sm:$0xff]
  %v464 = vld [vmem:[#allocation2 + $0x12] sm:$0xff]
  %v465 = vld [vmem:[#allocation2 + $0x22] sm:$0xff]
  %v466 = vld [vmem:[#allocation2 + $0x32] sm:$0xff]
  %v467 = vld [vmem:[#allocation2 + $0x42] sm:$0xff]
  %v468 = vld [vmem:[#allocation2 + $0x52] sm:$0xff]
  %v469 = vld [vmem:[#allocation2 + $0x62] sm:$0xff]
  %v470 = vld [vmem:[#allocation2 + $0x72] sm:$0xff]
  %v471 = vld [vmem:[#allocation2 + $0xa2] sm:$0xff]
  %v472 = vld [vmem:[#allocation2 + $0xb2] sm:$0xff]
  %v473 = vld [vmem:[#allocation2 + $0xc2] sm:$0xff]
  %v474 = vld [vmem:[#allocation2 + $0xd2] sm:$0xff]
  %v475 = vld [vmem:[#allocation2 + $0xe2] sm:$0xff]
  %v476 = vld [vmem:[#allocation2 + $0xf2] sm:$0xff]
  %v477 = vld [vmem:[#allocation2 + $0x102] sm:$0xff]
  %v478 = vld [vmem:[#allocation2 + $0x112] sm:$0xff]
  %v479 = vld [vmem:[#allocation2 + $0x142] sm:$0xff]
  %v480 = vld [vmem:[#allocation2 + $0x152] sm:$0xff]
  %v481 = vld [vmem:[#allocation2 + $0x162] sm:$0xff]
  %v482 = vld [vmem:[#allocation2 + $0x172] sm:$0xff]
  %v483 = vld [vmem:[#allocation2 + $0x182] sm:$0xff]
  %v484 = vld [vmem:[#allocation2 + $0x192] sm:$0xff]
  %v485 = vld [vmem:[#allocation2 + $0x1a2] sm:$0xff]
  %v486 = vld [vmem:[#allocation2 + $0x1b2] sm:$0xff]
  %v487 = vld [vmem:[#allocation2 + $0x1e2] sm:$0xff]
  %v488 = vld [vmem:[#allocation2 + $0x1f2] sm:$0xff]
  %v489 = vld [vmem:[#allocation2 + $0x202] sm:$0xff]
  %v490 = vld [vmem:[#allocation2 + $0x212] sm:$0xff]
  %v491 = vld [vmem:[#allocation2 + $0x222] sm:$0xff]
  %v492 = vld [vmem:[#allocation2 + $0x232] sm:$0xff]
  %v493 = vld [vmem:[#allocation2 + $0x242] sm:$0xff]
  %v494 = vld [vmem:[#allocation2 + $0x252] sm:$0xff]
  %v495 = vld [vmem:[#allocation2 + $0x282] sm:$0xff]
  %v496 = vld [vmem:[#allocation2 + $0x292] sm:$0xff]
  %v497 = vld [vmem:[#allocation2 + $0x2a2] sm:$0xff]
  %v498 = vld [vmem:[#allocation2 + $0x2b2] sm:$0xff]
  %v499 = vld [vmem:[#allocation2 + $0x2c2] sm:$0xff]
  %v500 = vld [vmem:[#allocation2 + $0x2d2] sm:$0xff]
  %v501 = vld [vmem:[#allocation2 + $0x2e2] sm:$0xff]
  %v502 = vld [vmem:[#allocation2 + $0x2f2] sm:$0xff]
  %v503 = vld [vmem:[#allocation2 + $0x322] sm:$0xff]
  %v504 = vld [vmem:[#allocation2 + $0x332] sm:$0xff]
  %v505 = vld [vmem:[#allocation2 + $0x342] sm:$0xff]
  %v506 = vld [vmem:[#allocation2 + $0x352] sm:$0xff]
  %v507 = vld [vmem:[#allocation2 + $0x362] sm:$0xff]
  %v508 = vld [vmem:[#allocation2 + $0x372] sm:$0xff]
  %v509 = vld [vmem:[#allocation2 + $0x382] sm:$0xff]
  %v510 = vld [vmem:[#allocation2 + $0x392] sm:$0xff]
  %v511 = vld [vmem:[%s318] sm:$0xff]
  %v512 = vld [vmem:[%s318 + $0x10] sm:$0xff]
  %v513 = vld [vmem:[%s318 + $0x20] sm:$0xff]
  %v514 = vld [vmem:[%s318 + $0x30] sm:$0xff]
  %v515 = vld [vmem:[%s318 + $0x40] sm:$0xff]
  %v516 = vld [vmem:[%s318 + $0x50] sm:$0xff]
  %v517 = vld [vmem:[%s318 + $0x60] sm:$0xff]
  %v518 = vld [vmem:[%s318 + $0x70] sm:$0xff]
  %v519 = vld [vmem:[%s318 + $0xa0] sm:$0xff]
  %v520 = vld [vmem:[%s318 + $0xb0] sm:$0xff]
  %v521 = vld [vmem:[%s318 + $0xc0] sm:$0xff]
  %v522 = vld [vmem:[%s318 + $0xd0] sm:$0xff]
  %v523 = vld [vmem:[%s318 + $0xe0] sm:$0xff]
  %v524 = vld [vmem:[%s318 + $0xf0] sm:$0xff]
  %v525 = vld [vmem:[%s318 + $0x100] sm:$0xff]
  %v526 = vld [vmem:[%s318 + $0x110] sm:$0xff]
  %v527 = vld [vmem:[%s318 + $0x140] sm:$0xff]
  %v528 = vld [vmem:[%s318 + $0x150] sm:$0xff]
  %v529 = vld [vmem:[%s318 + $0x160] sm:$0xff]
  %v530 = vld [vmem:[%s318 + $0x170] sm:$0xff]
  %v531 = vld [vmem:[%s318 + $0x180] sm:$0xff]
  %v532 = vld [vmem:[%s318 + $0x190] sm:$0xff]
  %v533 = vld [vmem:[%s318 + $0x1a0] sm:$0xff]
  %v534 = vld [vmem:[%s318 + $0x1b0] sm:$0xff]
  %v535 = vld [vmem:[%s318 + $0x1e0] sm:$0xff]
  %v536 = vld [vmem:[%s318 + $0x1f0] sm:$0xff]
  %v537 = vld [vmem:[%s318 + $0x200] sm:$0xff]
  %v538 = vld [vmem:[%s318 + $0x210] sm:$0xff]
  %v539 = vld [vmem:[%s318 + $0x220] sm:$0xff]
  %v540 = vld [vmem:[%s318 + $0x230] sm:$0xff]
  %v541 = vld [vmem:[%s318 + $0x240] sm:$0xff]
  %v542 = vld [vmem:[%s318 + $0x250] sm:$0xff]
  %v543 = vld [vmem:[%s318 + $0x280] sm:$0xff]
  %v544 = vld [vmem:[%s318 + $0x290] sm:$0xff]
  %v545 = vld [vmem:[%s318 + $0x2a0] sm:$0xff]
  %v546 = vld [vmem:[%s318 + $0x2b0] sm:$0xff]
  %v547 = vld [vmem:[%s318 + $0x2c0] sm:$0xff]
  %v548 = vld [vmem:[%s318 + $0x2d0] sm:$0xff]
  %v549 = vld [vmem:[%s318 + $0x2e0] sm:$0xff]
  %v550 = vld [vmem:[%s318 + $0x2f0] sm:$0xff]
  %v551 = vld [vmem:[%s318 + $0x320] sm:$0xff]
  %v552 = vld [vmem:[%s318 + $0x330] sm:$0xff]
  %v553 = vld [vmem:[%s318 + $0x340] sm:$0xff]
  %v554 = vld [vmem:[%s318 + $0x350] sm:$0xff]
  %v555 = vld [vmem:[%s318 + $0x360] sm:$0xff]
  %v556 = vld [vmem:[%s318 + $0x370] sm:$0xff]
  %v557 = vld [vmem:[%s318 + $0x380] sm:$0xff]
  %v558 = vld [vmem:[%s318 + $0x390] sm:$0xff]
  %v559 = vld [vmem:[%s318 + $0x1] sm:$0xff]
  %v560 = vld [vmem:[%s318 + $0x11] sm:$0xff]
  %v561 = vld [vmem:[%s318 + $0x21] sm:$0xff]
  %v562 = vld [vmem:[%s318 + $0x31] sm:$0xff]
  %v563 = vld [vmem:[%s318 + $0x41] sm:$0xff]
  %v564 = vld [vmem:[%s318 + $0x51] sm:$0xff]
  %v565 = vld [vmem:[%s318 + $0x61] sm:$0xff]
  %v566 = vld [vmem:[%s318 + $0x71] sm:$0xff]
  %v567 = vld [vmem:[%s318 + $0xa1] sm:$0xff]
  %v568 = vld [vmem:[%s318 + $0xb1] sm:$0xff]
  %v569 = vld [vmem:[%s318 + $0xc1] sm:$0xff]
  %v570 = vld [vmem:[%s318 + $0xd1] sm:$0xff]
  %v571 = vld [vmem:[%s318 + $0xe1] sm:$0xff]
  %v572 = vld [vmem:[%s318 + $0xf1] sm:$0xff]
  %v573 = vld [vmem:[%s318 + $0x101] sm:$0xff]
  %v574 = vld [vmem:[%s318 + $0x111] sm:$0xff]
  %v575 = vld [vmem:[%s318 + $0x141] sm:$0xff]
  %v576 = vld [vmem:[%s318 + $0x151] sm:$0xff]
  %v577 = vld [vmem:[%s318 + $0x161] sm:$0xff]
  %v578 = vld [vmem:[%s318 + $0x171] sm:$0xff]
  %v579 = vld [vmem:[%s318 + $0x181] sm:$0xff]
  %v580 = vld [vmem:[%s318 + $0x191] sm:$0xff]
  %v581 = vld [vmem:[%s318 + $0x1a1] sm:$0xff]
  %v582 = vld [vmem:[%s318 + $0x1b1] sm:$0xff]
  %v583 = vld [vmem:[%s318 + $0x1e1] sm:$0xff]
  %v584 = vld [vmem:[%s318 + $0x1f1] sm:$0xff]
  %v585 = vld [vmem:[%s318 + $0x201] sm:$0xff]
  %v586 = vld [vmem:[%s318 + $0x211] sm:$0xff]
  %v587 = vld [vmem:[%s318 + $0x221] sm:$0xff]
  %v588 = vld [vmem:[%s318 + $0x231] sm:$0xff]
  %v589 = vld [vmem:[%s318 + $0x241] sm:$0xff]
  %v590 = vld [vmem:[%s318 + $0x251] sm:$0xff]
  %v591 = vld [vmem:[%s318 + $0x281] sm:$0xff]
  %v592 = vld [vmem:[%s318 + $0x291] sm:$0xff]
  %v593 = vld [vmem:[%s318 + $0x2a1] sm:$0xff]
  %v594 = vld [vmem:[%s318 + $0x2b1] sm:$0xff]
  %v595 = vld [vmem:[%s318 + $0x2c1] sm:$0xff]
  %v596 = vld [vmem:[%s318 + $0x2d1] sm:$0xff]
  %v597 = vld [vmem:[%s318 + $0x2e1] sm:$0xff]
  %v598 = vld [vmem:[%s318 + $0x2f1] sm:$0xff]
  %v599 = vld [vmem:[%s318 + $0x321] sm:$0xff]
  %v600 = vld [vmem:[%s318 + $0x331] sm:$0xff]
  %v601 = vld [vmem:[%s318 + $0x341] sm:$0xff]
  %v602 = vld [vmem:[%s318 + $0x351] sm:$0xff]
  %v603 = vld [vmem:[%s318 + $0x361] sm:$0xff]
  %v604 = vld [vmem:[%s318 + $0x371] sm:$0xff]
  %v605 = vld [vmem:[%s318 + $0x381] sm:$0xff]
  %v606 = vld [vmem:[%s318 + $0x391] sm:$0xff]
  %v607 = vld [vmem:[%s318 + $0x2] sm:$0xff]
  %v608 = vld [vmem:[%s318 + $0x12] sm:$0xff]
  %v609 = vld [vmem:[%s318 + $0x22] sm:$0xff]
  %v610 = vld [vmem:[%s318 + $0x32] sm:$0xff]
  %v611 = vld [vmem:[%s318 + $0x42] sm:$0xff]
  %v612 = vld [vmem:[%s318 + $0x52] sm:$0xff]
  %v613 = vld [vmem:[%s318 + $0x62] sm:$0xff]
  %v614 = vld [vmem:[%s318 + $0x72] sm:$0xff]
  %v615 = vld [vmem:[%s318 + $0xa2] sm:$0xff]
  %v616 = vld [vmem:[%s318 + $0xb2] sm:$0xff]
  %v617 = vld [vmem:[%s318 + $0xc2] sm:$0xff]
  %v618 = vld [vmem:[%s318 + $0xd2] sm:$0xff]
  %v619 = vld [vmem:[%s318 + $0xe2] sm:$0xff]
  %v620 = vld [vmem:[%s318 + $0xf2] sm:$0xff]
  %v621 = vld [vmem:[%s318 + $0x102] sm:$0xff]
  %v622 = vld [vmem:[%s318 + $0x112] sm:$0xff]
  %v623 = vld [vmem:[%s318 + $0x142] sm:$0xff]
  %v624 = vld [vmem:[%s318 + $0x152] sm:$0xff]
  %v625 = vld [vmem:[%s318 + $0x162] sm:$0xff]
  %v626 = vld [vmem:[%s318 + $0x172] sm:$0xff]
  %v627 = vld [vmem:[%s318 + $0x182] sm:$0xff]
  %v628 = vld [vmem:[%s318 + $0x192] sm:$0xff]
  %v629 = vld [vmem:[%s318 + $0x1a2] sm:$0xff]
  %v630 = vld [vmem:[%s318 + $0x1b2] sm:$0xff]
  %v631 = vld [vmem:[%s318 + $0x1e2] sm:$0xff]
  %v632 = vld [vmem:[%s318 + $0x1f2] sm:$0xff]
  %v633 = vld [vmem:[%s318 + $0x202] sm:$0xff]
  %v634 = vld [vmem:[%s318 + $0x212] sm:$0xff]
  %v635 = vld [vmem:[%s318 + $0x222] sm:$0xff]
  %v636 = vld [vmem:[%s318 + $0x232] sm:$0xff]
  %v637 = vld [vmem:[%s318 + $0x242] sm:$0xff]
  %v638 = vld [vmem:[%s318 + $0x252] sm:$0xff]
  %v639 = vld [vmem:[%s318 + $0x282] sm:$0xff]
  %v640 = vld [vmem:[%s318 + $0x292] sm:$0xff]
  %v641 = vld [vmem:[%s318 + $0x2a2] sm:$0xff]
  %v642 = vld [vmem:[%s318 + $0x2b2] sm:$0xff]
  %v643 = vld [vmem:[%s318 + $0x2c2] sm:$0xff]
  %v644 = vld [vmem:[%s318 + $0x2d2] sm:$0xff]
  %v645 = vld [vmem:[%s318 + $0x2e2] sm:$0xff]
  %v646 = vld [vmem:[%s318 + $0x2f2] sm:$0xff]
  %v647 = vld [vmem:[%s318 + $0x322] sm:$0xff]
  %v648 = vld [vmem:[%s318 + $0x332] sm:$0xff]
  %v649 = vld [vmem:[%s318 + $0x342] sm:$0xff]
  %v650 = vld [vmem:[%s318 + $0x352] sm:$0xff]
  %v651 = vld [vmem:[%s318 + $0x362] sm:$0xff]
  %v652 = vld [vmem:[%s318 + $0x372] sm:$0xff]
  %v653 = vld [vmem:[%s318 + $0x382] sm:$0xff]
  %v654 = vld [vmem:[%s318 + $0x392] sm:$0xff]
  %s655 = scalar_lea.vmem [#allocation2], 32
  %v656 = vld [vmem:[%s655] sm:$0xff]
  %v657 = vld [vmem:[%s655 + $0x10] sm:$0xff]
  %v658 = vld [vmem:[%s655 + $0x20] sm:$0xff]
  %v659 = vld [vmem:[%s655 + $0x30] sm:$0xff]
  %v660 = vld [vmem:[%s655 + $0x40] sm:$0xff]
  %v661 = vld [vmem:[%s655 + $0x50] sm:$0xff]
  %v662 = vld [vmem:[%s655 + $0x60] sm:$0xff]
  %v663 = vld [vmem:[%s655 + $0x70] sm:$0xff]
  %v664 = vld [vmem:[%s655 + $0xa0] sm:$0xff]
  %v665 = vld [vmem:[%s655 + $0xb0] sm:$0xff]
  %v666 = vld [vmem:[%s655 + $0xc0] sm:$0xff]
  %v667 = vld [vmem:[%s655 + $0xd0] sm:$0xff]
  %v668 = vld [vmem:[%s655 + $0xe0] sm:$0xff]
  %v669 = vld [vmem:[%s655 + $0xf0] sm:$0xff]
  %v670 = vld [vmem:[%s655 + $0x100] sm:$0xff]
  %v671 = vld [vmem:[%s655 + $0x110] sm:$0xff]
  %v672 = vld [vmem:[%s655 + $0x140] sm:$0xff]
  %v673 = vld [vmem:[%s655 + $0x150] sm:$0xff]
  %v674 = vld [vmem:[%s655 + $0x160] sm:$0xff]
  %v675 = vld [vmem:[%s655 + $0x170] sm:$0xff]
  %v676 = vld [vmem:[%s655 + $0x180] sm:$0xff]
  %v677 = vld [vmem:[%s655 + $0x190] sm:$0xff]
  %v678 = vld [vmem:[%s655 + $0x1a0] sm:$0xff]
  %v679 = vld [vmem:[%s655 + $0x1b0] sm:$0xff]
  %v680 = vld [vmem:[%s655 + $0x1e0] sm:$0xff]
  %v681 = vld [vmem:[%s655 + $0x1f0] sm:$0xff]
  %v682 = vld [vmem:[%s655 + $0x200] sm:$0xff]
  %v683 = vld [vmem:[%s655 + $0x210] sm:$0xff]
  %v684 = vld [vmem:[%s655 + $0x220] sm:$0xff]
  %v685 = vld [vmem:[%s655 + $0x230] sm:$0xff]
  %v686 = vld [vmem:[%s655 + $0x240] sm:$0xff]
  %v687 = vld [vmem:[%s655 + $0x250] sm:$0xff]
  %v688 = vld [vmem:[%s655 + $0x280] sm:$0xff]
  %v689 = vld [vmem:[%s655 + $0x290] sm:$0xff]
  %v690 = vld [vmem:[%s655 + $0x2a0] sm:$0xff]
  %v691 = vld [vmem:[%s655 + $0x2b0] sm:$0xff]
  %v692 = vld [vmem:[%s655 + $0x2c0] sm:$0xff]
  %v693 = vld [vmem:[%s655 + $0x2d0] sm:$0xff]
  %v694 = vld [vmem:[%s655 + $0x2e0] sm:$0xff]
  %v695 = vld [vmem:[%s655 + $0x2f0] sm:$0xff]
  %v696 = vld [vmem:[%s655 + $0x320] sm:$0xff]
  %v697 = vld [vmem:[%s655 + $0x330] sm:$0xff]
  %v698 = vld [vmem:[%s655 + $0x340] sm:$0xff]
  %v699 = vld [vmem:[%s655 + $0x350] sm:$0xff]
  %v700 = vld [vmem:[%s655 + $0x360] sm:$0xff]
  %v701 = vld [vmem:[%s655 + $0x370] sm:$0xff]
  %v702 = vld [vmem:[%s655 + $0x380] sm:$0xff]
  %v703 = vld [vmem:[%s655 + $0x390] sm:$0xff]
  %v704 = vld [vmem:[%s655 + $0x1] sm:$0xff]
  %v705 = vld [vmem:[%s655 + $0x11] sm:$0xff]
  %v706 = vld [vmem:[%s655 + $0x21] sm:$0xff]
  %v707 = vld [vmem:[%s655 + $0x31] sm:$0xff]
  %v708 = vld [vmem:[%s655 + $0x41] sm:$0xff]
  %v709 = vld [vmem:[%s655 + $0x51] sm:$0xff]
  %v710 = vld [vmem:[%s655 + $0x61] sm:$0xff]
  %v711 = vld [vmem:[%s655 + $0x71] sm:$0xff]
  %v712 = vld [vmem:[%s655 + $0xa1] sm:$0xff]
  %v713 = vld [vmem:[%s655 + $0xb1] sm:$0xff]
  %v714 = vld [vmem:[%s655 + $0xc1] sm:$0xff]
  %v715 = vld [vmem:[%s655 + $0xd1] sm:$0xff]
  %v716 = vld [vmem:[%s655 + $0xe1] sm:$0xff]
  %v717 = vld [vmem:[%s655 + $0xf1] sm:$0xff]
  %v718 = vld [vmem:[%s655 + $0x101] sm:$0xff]
  %v719 = vld [vmem:[%s655 + $0x111] sm:$0xff]
  %v720 = vld [vmem:[%s655 + $0x141] sm:$0xff]
  %v721 = vld [vmem:[%s655 + $0x151] sm:$0xff]
  %v722 = vld [vmem:[%s655 + $0x161] sm:$0xff]
  %v723 = vld [vmem:[%s655 + $0x171] sm:$0xff]
  %v724 = vld [vmem:[%s655 + $0x181] sm:$0xff]
  %v725 = vld [vmem:[%s655 + $0x191] sm:$0xff]
  %v726 = vld [vmem:[%s655 + $0x1a1] sm:$0xff]
  %v727 = vld [vmem:[%s655 + $0x1b1] sm:$0xff]
  %v728 = vld [vmem:[%s655 + $0x1e1] sm:$0xff]
  %v729 = vld [vmem:[%s655 + $0x1f1] sm:$0xff]
  %v730 = vld [vmem:[%s655 + $0x201] sm:$0xff]
  %v731 = vld [vmem:[%s655 + $0x211] sm:$0xff]
  %v732 = vld [vmem:[%s655 + $0x221] sm:$0xff]
  %v733 = vld [vmem:[%s655 + $0x231] sm:$0xff]
  %v734 = vld [vmem:[%s655 + $0x241] sm:$0xff]
  %v735 = vld [vmem:[%s655 + $0x251] sm:$0xff]
  %v736 = vld [vmem:[%s655 + $0x281] sm:$0xff]
  %v737 = vld [vmem:[%s655 + $0x291] sm:$0xff]
  %v738 = vld [vmem:[%s655 + $0x2a1] sm:$0xff]
  %v739 = vld [vmem:[%s655 + $0x2b1] sm:$0xff]
  %v740 = vld [vmem:[%s655 + $0x2c1] sm:$0xff]
  %v741 = vld [vmem:[%s655 + $0x2d1] sm:$0xff]
  %v742 = vld [vmem:[%s655 + $0x2e1] sm:$0xff]
  %v743 = vld [vmem:[%s655 + $0x2f1] sm:$0xff]
  %v744 = vld [vmem:[%s655 + $0x321] sm:$0xff]
  %v745 = vld [vmem:[%s655 + $0x331] sm:$0xff]
  %v746 = vld [vmem:[%s655 + $0x341] sm:$0xff]
  %v747 = vld [vmem:[%s655 + $0x351] sm:$0xff]
  %v748 = vld [vmem:[%s655 + $0x361] sm:$0xff]
  %v749 = vld [vmem:[%s655 + $0x371] sm:$0xff]
  %v750 = vld [vmem:[%s655 + $0x381] sm:$0xff]
  %v751 = vld [vmem:[%s655 + $0x391] sm:$0xff]
  %v752 = vld [vmem:[%s655 + $0x2] sm:$0xff]
  %v753 = vld [vmem:[%s655 + $0x12] sm:$0xff]
  %v754 = vld [vmem:[%s655 + $0x22] sm:$0xff]
  %v755 = vld [vmem:[%s655 + $0x32] sm:$0xff]
  %v756 = vld [vmem:[%s655 + $0x42] sm:$0xff]
  %v757 = vld [vmem:[%s655 + $0x52] sm:$0xff]
  %v758 = vld [vmem:[%s655 + $0x62] sm:$0xff]
  %v759 = vld [vmem:[%s655 + $0x72] sm:$0xff]
  %v760 = vld [vmem:[%s655 + $0xa2] sm:$0xff]
  %v761 = vld [vmem:[%s655 + $0xb2] sm:$0xff]
  %v762 = vld [vmem:[%s655 + $0xc2] sm:$0xff]
  %v763 = vld [vmem:[%s655 + $0xd2] sm:$0xff]
  %v764 = vld [vmem:[%s655 + $0xe2] sm:$0xff]
  %v765 = vld [vmem:[%s655 + $0xf2] sm:$0xff]
  %v766 = vld [vmem:[%s655 + $0x102] sm:$0xff]
  %v767 = vld [vmem:[%s655 + $0x112] sm:$0xff]
  %v768 = vld [vmem:[%s655 + $0x142] sm:$0xff]
  %v769 = vld [vmem:[%s655 + $0x152] sm:$0xff]
  %v770 = vld [vmem:[%s655 + $0x162] sm:$0xff]
  %v771 = vld [vmem:[%s655 + $0x172] sm:$0xff]
  %v772 = vld [vmem:[%s655 + $0x182] sm:$0xff]
  %v773 = vld [vmem:[%s655 + $0x192] sm:$0xff]
  %v774 = vld [vmem:[%s655 + $0x1a2] sm:$0xff]
  %v775 = vld [vmem:[%s655 + $0x1b2] sm:$0xff]
  %v776 = vld [vmem:[%s655 + $0x1e2] sm:$0xff]
  %v777 = vld [vmem:[%s655 + $0x1f2] sm:$0xff]
  %v778 = vld [vmem:[%s655 + $0x202] sm:$0xff]
  %v779 = vld [vmem:[%s655 + $0x212] sm:$0xff]
  %v780 = vld [vmem:[%s655 + $0x222] sm:$0xff]
  %v781 = vld [vmem:[%s655 + $0x232] sm:$0xff]
  %v782 = vld [vmem:[%s655 + $0x242] sm:$0xff]
  %v783 = vld [vmem:[%s655 + $0x252] sm:$0xff]
  %v784 = vld [vmem:[%s655 + $0x282] sm:$0xff]
  %v785 = vld [vmem:[%s655 + $0x292] sm:$0xff]
  %v786 = vld [vmem:[%s655 + $0x2a2] sm:$0xff]
  %v787 = vld [vmem:[%s655 + $0x2b2] sm:$0xff]
  %v788 = vld [vmem:[%s655 + $0x2c2] sm:$0xff]
  %v789 = vld [vmem:[%s655 + $0x2d2] sm:$0xff]
  %v790 = vld [vmem:[%s655 + $0x2e2] sm:$0xff]
  %v791 = vld [vmem:[%s655 + $0x2f2] sm:$0xff]
  %v792 = vld [vmem:[%s655 + $0x322] sm:$0xff]
  %v793 = vld [vmem:[%s655 + $0x332] sm:$0xff]
  %v794 = vld [vmem:[%s655 + $0x342] sm:$0xff]
  %v795 = vld [vmem:[%s655 + $0x352] sm:$0xff]
  %v796 = vld [vmem:[%s655 + $0x362] sm:$0xff]
  %v797 = vld [vmem:[%s655 + $0x372] sm:$0xff]
  %v798 = vld [vmem:[%s655 + $0x382] sm:$0xff]
  %v799 = vld [vmem:[%s655 + $0x392] sm:$0xff]
  %848 = vrot.lane.b32.xlu0 %v415, 4
  %v849 = vpop.permute.xlu0 %848
  %850 = vrot.lane.b32.xlu0 %v416, 4
  %v851 = vpop.permute.xlu0 %850
  %852 = vrot.lane.b32.xlu0 %v417, 4
  %v853 = vpop.permute.xlu0 %852
  %854 = vrot.lane.b32.xlu0 %v418, 4
  %v855 = vpop.permute.xlu0 %854
  %856 = vrot.lane.b32.xlu0 %v419, 4
  %v857 = vpop.permute.xlu0 %856
  %858 = vrot.lane.b32.xlu0 %v420, 4
  %v859 = vpop.permute.xlu0 %858
  %860 = vrot.lane.b32.xlu0 %v421, 4
  %v861 = vpop.permute.xlu0 %860
  %862 = vrot.lane.b32.xlu0 %v422, 4
  %v863 = vpop.permute.xlu0 %862
  %864 = vrot.lane.b32.xlu0 %v423, 4
  %v865 = vpop.permute.xlu0 %864
  %866 = vrot.lane.b32.xlu0 %v424, 4
  %v867 = vpop.permute.xlu0 %866
  %868 = vrot.lane.b32.xlu0 %v425, 4
  %v869 = vpop.permute.xlu0 %868
  %870 = vrot.lane.b32.xlu0 %v426, 4
  %v871 = vpop.permute.xlu0 %870
  %872 = vrot.lane.b32.xlu0 %v427, 4
  %v873 = vpop.permute.xlu0 %872
  %874 = vrot.lane.b32.xlu0 %v428, 4
  %v875 = vpop.permute.xlu0 %874
  %876 = vrot.lane.b32.xlu0 %v429, 4
  %v877 = vpop.permute.xlu0 %876
  %878 = vrot.lane.b32.xlu0 %v430, 4
  %v879 = vpop.permute.xlu0 %878
  %880 = vrot.lane.b32.xlu0 %v431, 4
  %v881 = vpop.permute.xlu0 %880
  %882 = vrot.lane.b32.xlu0 %v432, 4
  %v883 = vpop.permute.xlu0 %882
  %884 = vrot.lane.b32.xlu0 %v433, 4
  %v885 = vpop.permute.xlu0 %884
  %886 = vrot.lane.b32.xlu0 %v434, 4
  %v887 = vpop.permute.xlu0 %886
  %888 = vrot.lane.b32.xlu0 %v435, 4
  %v889 = vpop.permute.xlu0 %888
  %890 = vrot.lane.b32.xlu0 %v436, 4
  %v891 = vpop.permute.xlu0 %890
  %892 = vrot.lane.b32.xlu0 %v437, 4
  %v893 = vpop.permute.xlu0 %892
  %894 = vrot.lane.b32.xlu0 %v438, 4
  %v895 = vpop.permute.xlu0 %894
  %896 = vrot.lane.b32.xlu0 %v439, 4
  %v897 = vpop.permute.xlu0 %896
  %898 = vrot.lane.b32.xlu0 %v440, 4
  %v899 = vpop.permute.xlu0 %898
  %900 = vrot.lane.b32.xlu0 %v441, 4
  %v901 = vpop.permute.xlu0 %900
  %902 = vrot.lane.b32.xlu0 %v442, 4
  %v903 = vpop.permute.xlu0 %902
  %904 = vrot.lane.b32.xlu0 %v443, 4
  %v905 = vpop.permute.xlu0 %904
  %906 = vrot.lane.b32.xlu0 %v444, 4
  %v907 = vpop.permute.xlu0 %906
  %908 = vrot.lane.b32.xlu0 %v445, 4
  %v909 = vpop.permute.xlu0 %908
  %910 = vrot.lane.b32.xlu0 %v446, 4
  %v911 = vpop.permute.xlu0 %910
  %912 = vrot.lane.b32.xlu0 %v447, 4
  %v913 = vpop.permute.xlu0 %912
  %914 = vrot.lane.b32.xlu0 %v448, 4
  %v915 = vpop.permute.xlu0 %914
  %916 = vrot.lane.b32.xlu0 %v449, 4
  %v917 = vpop.permute.xlu0 %916
  %918 = vrot.lane.b32.xlu0 %v450, 4
  %v919 = vpop.permute.xlu0 %918
  %920 = vrot.lane.b32.xlu0 %v451, 4
  %v921 = vpop.permute.xlu0 %920
  %922 = vrot.lane.b32.xlu0 %v452, 4
  %v923 = vpop.permute.xlu0 %922
  %924 = vrot.lane.b32.xlu0 %v453, 4
  %v925 = vpop.permute.xlu0 %924
  %926 = vrot.lane.b32.xlu0 %v454, 4
  %v927 = vpop.permute.xlu0 %926
  %928 = vrot.lane.b32.xlu0 %v455, 4
  %v929 = vpop.permute.xlu0 %928
  %930 = vrot.lane.b32.xlu0 %v456, 4
  %v931 = vpop.permute.xlu0 %930
  %932 = vrot.lane.b32.xlu0 %v457, 4
  %v933 = vpop.permute.xlu0 %932
  %934 = vrot.lane.b32.xlu0 %v458, 4
  %v935 = vpop.permute.xlu0 %934
  %936 = vrot.lane.b32.xlu0 %v459, 4
  %v937 = vpop.permute.xlu0 %936
  %938 = vrot.lane.b32.xlu0 %v460, 4
  %v939 = vpop.permute.xlu0 %938
  %940 = vrot.lane.b32.xlu0 %v461, 4
  %v941 = vpop.permute.xlu0 %940
  %942 = vrot.lane.b32.xlu0 %v462, 4
  %v943 = vpop.permute.xlu0 %942
  %1040 = vrot.lane.b32.xlu0 %v463, 8
  %v1041 = vpop.permute.xlu0 %1040
  %1042 = vrot.lane.b32.xlu0 %v464, 8
  %v1043 = vpop.permute.xlu0 %1042
  %1044 = vrot.lane.b32.xlu0 %v465, 8
  %v1045 = vpop.permute.xlu0 %1044
  %1046 = vrot.lane.b32.xlu0 %v466, 8
  %v1047 = vpop.permute.xlu0 %1046
  %1048 = vrot.lane.b32.xlu0 %v467, 8
  %v1049 = vpop.permute.xlu0 %1048
  %1050 = vrot.lane.b32.xlu0 %v468, 8
  %v1051 = vpop.permute.xlu0 %1050
  %1052 = vrot.lane.b32.xlu0 %v469, 8
  %v1053 = vpop.permute.xlu0 %1052
  %1054 = vrot.lane.b32.xlu0 %v470, 8
  %v1055 = vpop.permute.xlu0 %1054
  %1056 = vrot.lane.b32.xlu0 %v471, 8
  %v1057 = vpop.permute.xlu0 %1056
  %1058 = vrot.lane.b32.xlu0 %v472, 8
  %v1059 = vpop.permute.xlu0 %1058
  %1060 = vrot.lane.b32.xlu0 %v473, 8
  %v1061 = vpop.permute.xlu0 %1060
  %1062 = vrot.lane.b32.xlu0 %v474, 8
  %v1063 = vpop.permute.xlu0 %1062
  %1064 = vrot.lane.b32.xlu0 %v475, 8
  %v1065 = vpop.permute.xlu0 %1064
  %1066 = vrot.lane.b32.xlu0 %v476, 8
  %v1067 = vpop.permute.xlu0 %1066
  %1068 = vrot.lane.b32.xlu0 %v477, 8
  %v1069 = vpop.permute.xlu0 %1068
  %1070 = vrot.lane.b32.xlu0 %v478, 8
  %v1071 = vpop.permute.xlu0 %1070
  %1072 = vrot.lane.b32.xlu0 %v479, 8
  %v1073 = vpop.permute.xlu0 %1072
  %1074 = vrot.lane.b32.xlu0 %v480, 8
  %v1075 = vpop.permute.xlu0 %1074
  %1076 = vrot.lane.b32.xlu0 %v481, 8
  %v1077 = vpop.permute.xlu0 %1076
  %1078 = vrot.lane.b32.xlu0 %v482, 8
  %v1079 = vpop.permute.xlu0 %1078
  %1080 = vrot.lane.b32.xlu0 %v483, 8
  %v1081 = vpop.permute.xlu0 %1080
  %1082 = vrot.lane.b32.xlu0 %v484, 8
  %v1083 = vpop.permute.xlu0 %1082
  %1084 = vrot.lane.b32.xlu0 %v485, 8
  %v1085 = vpop.permute.xlu0 %1084
  %1086 = vrot.lane.b32.xlu0 %v486, 8
  %v1087 = vpop.permute.xlu0 %1086
  %1088 = vrot.lane.b32.xlu0 %v487, 8
  %v1089 = vpop.permute.xlu0 %1088
  %1090 = vrot.lane.b32.xlu0 %v488, 8
  %v1091 = vpop.permute.xlu0 %1090
  %1092 = vrot.lane.b32.xlu0 %v489, 8
  %v1093 = vpop.permute.xlu0 %1092
  %1094 = vrot.lane.b32.xlu0 %v490, 8
  %v1095 = vpop.permute.xlu0 %1094
  %1096 = vrot.lane.b32.xlu0 %v491, 8
  %v1097 = vpop.permute.xlu0 %1096
  %1098 = vrot.lane.b32.xlu0 %v492, 8
  %v1099 = vpop.permute.xlu0 %1098
  %1100 = vrot.lane.b32.xlu0 %v493, 8
  %v1101 = vpop.permute.xlu0 %1100
  %1102 = vrot.lane.b32.xlu0 %v494, 8
  %v1103 = vpop.permute.xlu0 %1102
  %1104 = vrot.lane.b32.xlu0 %v495, 8
  %v1105 = vpop.permute.xlu0 %1104
  %1106 = vrot.lane.b32.xlu0 %v496, 8
  %v1107 = vpop.permute.xlu0 %1106
  %1108 = vrot.lane.b32.xlu0 %v497, 8
  %v1109 = vpop.permute.xlu0 %1108
  %1110 = vrot.lane.b32.xlu0 %v498, 8
  %v1111 = vpop.permute.xlu0 %1110
  %1112 = vrot.lane.b32.xlu0 %v499, 8
  %v1113 = vpop.permute.xlu0 %1112
  %1114 = vrot.lane.b32.xlu0 %v500, 8
  %v1115 = vpop.permute.xlu0 %1114
  %1116 = vrot.lane.b32.xlu0 %v501, 8
  %v1117 = vpop.permute.xlu0 %1116
  %1118 = vrot.lane.b32.xlu0 %v502, 8
  %v1119 = vpop.permute.xlu0 %1118
  %1120 = vrot.lane.b32.xlu0 %v503, 8
  %v1121 = vpop.permute.xlu0 %1120
  %1122 = vrot.lane.b32.xlu0 %v504, 8
  %v1123 = vpop.permute.xlu0 %1122
  %1124 = vrot.lane.b32.xlu0 %v505, 8
  %v1125 = vpop.permute.xlu0 %1124
  %1126 = vrot.lane.b32.xlu0 %v506, 8
  %v1127 = vpop.permute.xlu0 %1126
  %1128 = vrot.lane.b32.xlu0 %v507, 8
  %v1129 = vpop.permute.xlu0 %1128
  %1130 = vrot.lane.b32.xlu0 %v508, 8
  %v1131 = vpop.permute.xlu0 %1130
  %1132 = vrot.lane.b32.xlu0 %v509, 8
  %v1133 = vpop.permute.xlu0 %1132
  %1134 = vrot.lane.b32.xlu0 %v510, 8
  %v1135 = vpop.permute.xlu0 %1134
  %1232 = vrot.lane.b32.xlu0 %v511, 12
  %v1233 = vpop.permute.xlu0 %1232
  %1234 = vrot.lane.b32.xlu0 %v512, 12
  %v1235 = vpop.permute.xlu0 %1234
  %1236 = vrot.lane.b32.xlu0 %v513, 12
  %v1237 = vpop.permute.xlu0 %1236
  %1238 = vrot.lane.b32.xlu0 %v514, 12
  %v1239 = vpop.permute.xlu0 %1238
  %1240 = vrot.lane.b32.xlu0 %v515, 12
  %v1241 = vpop.permute.xlu0 %1240
  %1242 = vrot.lane.b32.xlu0 %v516, 12
  %v1243 = vpop.permute.xlu0 %1242
  %1244 = vrot.lane.b32.xlu0 %v517, 12
  %v1245 = vpop.permute.xlu0 %1244
  %1246 = vrot.lane.b32.xlu0 %v518, 12
  %v1247 = vpop.permute.xlu0 %1246
  %1248 = vrot.lane.b32.xlu0 %v519, 12
  %v1249 = vpop.permute.xlu0 %1248
  %1250 = vrot.lane.b32.xlu0 %v520, 12
  %v1251 = vpop.permute.xlu0 %1250
  %1252 = vrot.lane.b32.xlu0 %v521, 12
  %v1253 = vpop.permute.xlu0 %1252
  %1254 = vrot.lane.b32.xlu0 %v522, 12
  %v1255 = vpop.permute.xlu0 %1254
  %1256 = vrot.lane.b32.xlu0 %v523, 12
  %v1257 = vpop.permute.xlu0 %1256
  %1258 = vrot.lane.b32.xlu0 %v524, 12
  %v1259 = vpop.permute.xlu0 %1258
  %1260 = vrot.lane.b32.xlu0 %v525, 12
  %v1261 = vpop.permute.xlu0 %1260
  %1262 = vrot.lane.b32.xlu0 %v526, 12
  %v1263 = vpop.permute.xlu0 %1262
  %1264 = vrot.lane.b32.xlu0 %v527, 12
  %v1265 = vpop.permute.xlu0 %1264
  %1266 = vrot.lane.b32.xlu0 %v528, 12
  %v1267 = vpop.permute.xlu0 %1266
  %1268 = vrot.lane.b32.xlu0 %v529, 12
  %v1269 = vpop.permute.xlu0 %1268
  %1270 = vrot.lane.b32.xlu0 %v530, 12
  %v1271 = vpop.permute.xlu0 %1270
  %1272 = vrot.lane.b32.xlu0 %v531, 12
  %v1273 = vpop.permute.xlu0 %1272
  %1274 = vrot.lane.b32.xlu0 %v532, 12
  %v1275 = vpop.permute.xlu0 %1274
  %1276 = vrot.lane.b32.xlu0 %v533, 12
  %v1277 = vpop.permute.xlu0 %1276
  %1278 = vrot.lane.b32.xlu0 %v534, 12
  %v1279 = vpop.permute.xlu0 %1278
  %1280 = vrot.lane.b32.xlu0 %v535, 12
  %v1281 = vpop.permute.xlu0 %1280
  %1282 = vrot.lane.b32.xlu0 %v536, 12
  %v1283 = vpop.permute.xlu0 %1282
  %1284 = vrot.lane.b32.xlu0 %v537, 12
  %v1285 = vpop.permute.xlu0 %1284
  %1286 = vrot.lane.b32.xlu0 %v538, 12
  %v1287 = vpop.permute.xlu0 %1286
  %1288 = vrot.lane.b32.xlu0 %v539, 12
  %v1289 = vpop.permute.xlu0 %1288
  %1290 = vrot.lane.b32.xlu0 %v540, 12
  %v1291 = vpop.permute.xlu0 %1290
  %1292 = vrot.lane.b32.xlu0 %v541, 12
  %v1293 = vpop.permute.xlu0 %1292
  %1294 = vrot.lane.b32.xlu0 %v542, 12
  %v1295 = vpop.permute.xlu0 %1294
  %1296 = vrot.lane.b32.xlu0 %v543, 12
  %v1297 = vpop.permute.xlu0 %1296
  %1298 = vrot.lane.b32.xlu0 %v544, 12
  %v1299 = vpop.permute.xlu0 %1298
  %1300 = vrot.lane.b32.xlu0 %v545, 12
  %v1301 = vpop.permute.xlu0 %1300
  %1302 = vrot.lane.b32.xlu0 %v546, 12
  %v1303 = vpop.permute.xlu0 %1302
  %1304 = vrot.lane.b32.xlu0 %v547, 12
  %v1305 = vpop.permute.xlu0 %1304
  %1306 = vrot.lane.b32.xlu0 %v548, 12
  %v1307 = vpop.permute.xlu0 %1306
  %1308 = vrot.lane.b32.xlu0 %v549, 12
  %v1309 = vpop.permute.xlu0 %1308
  %1310 = vrot.lane.b32.xlu0 %v550, 12
  %v1311 = vpop.permute.xlu0 %1310
  %1312 = vrot.lane.b32.xlu0 %v551, 12
  %v1313 = vpop.permute.xlu0 %1312
  %1314 = vrot.lane.b32.xlu0 %v552, 12
  %v1315 = vpop.permute.xlu0 %1314
  %1316 = vrot.lane.b32.xlu0 %v553, 12
  %v1317 = vpop.permute.xlu0 %1316
  %1318 = vrot.lane.b32.xlu0 %v554, 12
  %v1319 = vpop.permute.xlu0 %1318
  %1320 = vrot.lane.b32.xlu0 %v555, 12
  %v1321 = vpop.permute.xlu0 %1320
  %1322 = vrot.lane.b32.xlu0 %v556, 12
  %v1323 = vpop.permute.xlu0 %1322
  %1324 = vrot.lane.b32.xlu0 %v557, 12
  %v1325 = vpop.permute.xlu0 %1324
  %1326 = vrot.lane.b32.xlu0 %v558, 12
  %v1327 = vpop.permute.xlu0 %1326
  %1424 = vrot.lane.b32.xlu0 %v559, 16
  %v1425 = vpop.permute.xlu0 %1424
  %1426 = vrot.lane.b32.xlu0 %v560, 16
  %v1427 = vpop.permute.xlu0 %1426
  %1428 = vrot.lane.b32.xlu0 %v561, 16
  %v1429 = vpop.permute.xlu0 %1428
  %1430 = vrot.lane.b32.xlu0 %v562, 16
  %v1431 = vpop.permute.xlu0 %1430
  %1432 = vrot.lane.b32.xlu0 %v563, 16
  %v1433 = vpop.permute.xlu0 %1432
  %1434 = vrot.lane.b32.xlu0 %v564, 16
  %v1435 = vpop.permute.xlu0 %1434
  %1436 = vrot.lane.b32.xlu0 %v565, 16
  %v1437 = vpop.permute.xlu0 %1436
  %1438 = vrot.lane.b32.xlu0 %v566, 16
  %v1439 = vpop.permute.xlu0 %1438
  %1440 = vrot.lane.b32.xlu0 %v567, 16
  %v1441 = vpop.permute.xlu0 %1440
  %1442 = vrot.lane.b32.xlu0 %v568, 16
  %v1443 = vpop.permute.xlu0 %1442
  %1444 = vrot.lane.b32.xlu0 %v569, 16
  %v1445 = vpop.permute.xlu0 %1444
  %1446 = vrot.lane.b32.xlu0 %v570, 16
  %v1447 = vpop.permute.xlu0 %1446
  %1448 = vrot.lane.b32.xlu0 %v571, 16
  %v1449 = vpop.permute.xlu0 %1448
  %1450 = vrot.lane.b32.xlu0 %v572, 16
  %v1451 = vpop.permute.xlu0 %1450
  %1452 = vrot.lane.b32.xlu0 %v573, 16
  %v1453 = vpop.permute.xlu0 %1452
  %1454 = vrot.lane.b32.xlu0 %v574, 16
  %v1455 = vpop.permute.xlu0 %1454
  %1456 = vrot.lane.b32.xlu0 %v575, 16
  %v1457 = vpop.permute.xlu0 %1456
  %1458 = vrot.lane.b32.xlu0 %v576, 16
  %v1459 = vpop.permute.xlu0 %1458
  %1460 = vrot.lane.b32.xlu0 %v577, 16
  %v1461 = vpop.permute.xlu0 %1460
  %1462 = vrot.lane.b32.xlu0 %v578, 16
  %v1463 = vpop.permute.xlu0 %1462
  %1464 = vrot.lane.b32.xlu0 %v579, 16
  %v1465 = vpop.permute.xlu0 %1464
  %1466 = vrot.lane.b32.xlu0 %v580, 16
  %v1467 = vpop.permute.xlu0 %1466
  %1468 = vrot.lane.b32.xlu0 %v581, 16
  %v1469 = vpop.permute.xlu0 %1468
  %1470 = vrot.lane.b32.xlu0 %v582, 16
  %v1471 = vpop.permute.xlu0 %1470
  %1472 = vrot.lane.b32.xlu0 %v583, 16
  %v1473 = vpop.permute.xlu0 %1472
  %1474 = vrot.lane.b32.xlu0 %v584, 16
  %v1475 = vpop.permute.xlu0 %1474
  %1476 = vrot.lane.b32.xlu0 %v585, 16
  %v1477 = vpop.permute.xlu0 %1476
  %1478 = vrot.lane.b32.xlu0 %v586, 16
  %v1479 = vpop.permute.xlu0 %1478
  %1480 = vrot.lane.b32.xlu0 %v587, 16
  %v1481 = vpop.permute.xlu0 %1480
  %1482 = vrot.lane.b32.xlu0 %v588, 16
  %v1483 = vpop.permute.xlu0 %1482
  %1484 = vrot.lane.b32.xlu0 %v589, 16
  %v1485 = vpop.permute.xlu0 %1484
  %1486 = vrot.lane.b32.xlu0 %v590, 16
  %v1487 = vpop.permute.xlu0 %1486
  %1488 = vrot.lane.b32.xlu0 %v591, 16
  %v1489 = vpop.permute.xlu0 %1488
  %1490 = vrot.lane.b32.xlu0 %v592, 16
  %v1491 = vpop.permute.xlu0 %1490
  %1492 = vrot.lane.b32.xlu0 %v593, 16
  %v1493 = vpop.permute.xlu0 %1492
  %1494 = vrot.lane.b32.xlu0 %v594, 16
  %v1495 = vpop.permute.xlu0 %1494
  %1496 = vrot.lane.b32.xlu0 %v595, 16
  %v1497 = vpop.permute.xlu0 %1496
  %1498 = vrot.lane.b32.xlu0 %v596, 16
  %v1499 = vpop.permute.xlu0 %1498
  %1500 = vrot.lane.b32.xlu0 %v597, 16
  %v1501 = vpop.permute.xlu0 %1500
  %1502 = vrot.lane.b32.xlu0 %v598, 16
  %v1503 = vpop.permute.xlu0 %1502
  %1504 = vrot.lane.b32.xlu0 %v599, 16
  %v1505 = vpop.permute.xlu0 %1504
  %1506 = vrot.lane.b32.xlu0 %v600, 16
  %v1507 = vpop.permute.xlu0 %1506
  %1508 = vrot.lane.b32.xlu0 %v601, 16
  %v1509 = vpop.permute.xlu0 %1508
  %1510 = vrot.lane.b32.xlu0 %v602, 16
  %v1511 = vpop.permute.xlu0 %1510
  %1512 = vrot.lane.b32.xlu0 %v603, 16
  %v1513 = vpop.permute.xlu0 %1512
  %1514 = vrot.lane.b32.xlu0 %v604, 16
  %v1515 = vpop.permute.xlu0 %1514
  %1516 = vrot.lane.b32.xlu0 %v605, 16
  %v1517 = vpop.permute.xlu0 %1516
  %1518 = vrot.lane.b32.xlu0 %v606, 16
  %v1519 = vpop.permute.xlu0 %1518
  %1616 = vrot.lane.b32.xlu0 %v607, 20
  %v1617 = vpop.permute.xlu0 %1616
  %1618 = vrot.lane.b32.xlu0 %v608, 20
  %v1619 = vpop.permute.xlu0 %1618
  %1620 = vrot.lane.b32.xlu0 %v609, 20
  %v1621 = vpop.permute.xlu0 %1620
  %1622 = vrot.lane.b32.xlu0 %v610, 20
  %v1623 = vpop.permute.xlu0 %1622
  %1624 = vrot.lane.b32.xlu0 %v611, 20
  %v1625 = vpop.permute.xlu0 %1624
  %1626 = vrot.lane.b32.xlu0 %v612, 20
  %v1627 = vpop.permute.xlu0 %1626
  %1628 = vrot.lane.b32.xlu0 %v613, 20
  %v1629 = vpop.permute.xlu0 %1628
  %1630 = vrot.lane.b32.xlu0 %v614, 20
  %v1631 = vpop.permute.xlu0 %1630
  %1632 = vrot.lane.b32.xlu0 %v615, 20
  %v1633 = vpop.permute.xlu0 %1632
  %1634 = vrot.lane.b32.xlu0 %v616, 20
  %v1635 = vpop.permute.xlu0 %1634
  %1636 = vrot.lane.b32.xlu0 %v617, 20
  %v1637 = vpop.permute.xlu0 %1636
  %1638 = vrot.lane.b32.xlu0 %v618, 20
  %v1639 = vpop.permute.xlu0 %1638
  %1640 = vrot.lane.b32.xlu0 %v619, 20
  %v1641 = vpop.permute.xlu0 %1640
  %1642 = vrot.lane.b32.xlu0 %v620, 20
  %v1643 = vpop.permute.xlu0 %1642
  %1644 = vrot.lane.b32.xlu0 %v621, 20
  %v1645 = vpop.permute.xlu0 %1644
  %1646 = vrot.lane.b32.xlu0 %v622, 20
  %v1647 = vpop.permute.xlu0 %1646
  %1648 = vrot.lane.b32.xlu0 %v623, 20
  %v1649 = vpop.permute.xlu0 %1648
  %1650 = vrot.lane.b32.xlu0 %v624, 20
  %v1651 = vpop.permute.xlu0 %1650
  %1652 = vrot.lane.b32.xlu0 %v625, 20
  %v1653 = vpop.permute.xlu0 %1652
  %1654 = vrot.lane.b32.xlu0 %v626, 20
  %v1655 = vpop.permute.xlu0 %1654
  %1656 = vrot.lane.b32.xlu0 %v627, 20
  %v1657 = vpop.permute.xlu0 %1656
  %1658 = vrot.lane.b32.xlu0 %v628, 20
  %v1659 = vpop.permute.xlu0 %1658
  %1660 = vrot.lane.b32.xlu0 %v629, 20
  %v1661 = vpop.permute.xlu0 %1660
  %1662 = vrot.lane.b32.xlu0 %v630, 20
  %v1663 = vpop.permute.xlu0 %1662
  %1664 = vrot.lane.b32.xlu0 %v631, 20
  %v1665 = vpop.permute.xlu0 %1664
  %1666 = vrot.lane.b32.xlu0 %v632, 20
  %v1667 = vpop.permute.xlu0 %1666
  %1668 = vrot.lane.b32.xlu0 %v633, 20
  %v1669 = vpop.permute.xlu0 %1668
  %1670 = vrot.lane.b32.xlu0 %v634, 20
  %v1671 = vpop.permute.xlu0 %1670
  %1672 = vrot.lane.b32.xlu0 %v635, 20
  %v1673 = vpop.permute.xlu0 %1672
  %1674 = vrot.lane.b32.xlu0 %v636, 20
  %v1675 = vpop.permute.xlu0 %1674
  %1676 = vrot.lane.b32.xlu0 %v637, 20
  %v1677 = vpop.permute.xlu0 %1676
  %1678 = vrot.lane.b32.xlu0 %v638, 20
  %v1679 = vpop.permute.xlu0 %1678
  %1680 = vrot.lane.b32.xlu0 %v639, 20
  %v1681 = vpop.permute.xlu0 %1680
  %1682 = vrot.lane.b32.xlu0 %v640, 20
  %v1683 = vpop.permute.xlu0 %1682
  %1684 = vrot.lane.b32.xlu0 %v641, 20
  %v1685 = vpop.permute.xlu0 %1684
  %1686 = vrot.lane.b32.xlu0 %v642, 20
  %v1687 = vpop.permute.xlu0 %1686
  %1688 = vrot.lane.b32.xlu0 %v643, 20
  %v1689 = vpop.permute.xlu0 %1688
  %1690 = vrot.lane.b32.xlu0 %v644, 20
  %v1691 = vpop.permute.xlu0 %1690
  %1692 = vrot.lane.b32.xlu0 %v645, 20
  %v1693 = vpop.permute.xlu0 %1692
  %1694 = vrot.lane.b32.xlu0 %v646, 20
  %v1695 = vpop.permute.xlu0 %1694
  %1696 = vrot.lane.b32.xlu0 %v647, 20
  %v1697 = vpop.permute.xlu0 %1696
  %1698 = vrot.lane.b32.xlu0 %v648, 20
  %v1699 = vpop.permute.xlu0 %1698
  %1700 = vrot.lane.b32.xlu0 %v649, 20
  %v1701 = vpop.permute.xlu0 %1700
  %1702 = vrot.lane.b32.xlu0 %v650, 20
  %v1703 = vpop.permute.xlu0 %1702
  %1704 = vrot.lane.b32.xlu0 %v651, 20
  %v1705 = vpop.permute.xlu0 %1704
  %1706 = vrot.lane.b32.xlu0 %v652, 20
  %v1707 = vpop.permute.xlu0 %1706
  %1708 = vrot.lane.b32.xlu0 %v653, 20
  %v1709 = vpop.permute.xlu0 %1708
  %1710 = vrot.lane.b32.xlu0 %v654, 20
  %v1711 = vpop.permute.xlu0 %1710
  %1808 = vrot.lane.b32.xlu0 %v656, 24
  %v1809 = vpop.permute.xlu0 %1808
  %1810 = vrot.lane.b32.xlu0 %v657, 24
  %v1811 = vpop.permute.xlu0 %1810
  %1812 = vrot.lane.b32.xlu0 %v658, 24
  %v1813 = vpop.permute.xlu0 %1812
  %1814 = vrot.lane.b32.xlu0 %v659, 24
  %v1815 = vpop.permute.xlu0 %1814
  %1816 = vrot.lane.b32.xlu0 %v660, 24
  %v1817 = vpop.permute.xlu0 %1816
  %1818 = vrot.lane.b32.xlu0 %v661, 24
  %v1819 = vpop.permute.xlu0 %1818
  %1820 = vrot.lane.b32.xlu0 %v662, 24
  %v1821 = vpop.permute.xlu0 %1820
  %1822 = vrot.lane.b32.xlu0 %v663, 24
  %v1823 = vpop.permute.xlu0 %1822
  %1824 = vrot.lane.b32.xlu0 %v664, 24
  %v1825 = vpop.permute.xlu0 %1824
  %1826 = vrot.lane.b32.xlu0 %v665, 24
  %v1827 = vpop.permute.xlu0 %1826
  %1828 = vrot.lane.b32.xlu0 %v666, 24
  %v1829 = vpop.permute.xlu0 %1828
  %1830 = vrot.lane.b32.xlu0 %v667, 24
  %v1831 = vpop.permute.xlu0 %1830
  %1832 = vrot.lane.b32.xlu0 %v668, 24
  %v1833 = vpop.permute.xlu0 %1832
  %1834 = vrot.lane.b32.xlu0 %v669, 24
  %v1835 = vpop.permute.xlu0 %1834
  %1836 = vrot.lane.b32.xlu0 %v670, 24
  %v1837 = vpop.permute.xlu0 %1836
  %1838 = vrot.lane.b32.xlu0 %v671, 24
  %v1839 = vpop.permute.xlu0 %1838
  %1840 = vrot.lane.b32.xlu0 %v672, 24
  %v1841 = vpop.permute.xlu0 %1840
  %1842 = vrot.lane.b32.xlu0 %v673, 24
  %v1843 = vpop.permute.xlu0 %1842
  %1844 = vrot.lane.b32.xlu0 %v674, 24
  %v1845 = vpop.permute.xlu0 %1844
  %1846 = vrot.lane.b32.xlu0 %v675, 24
  %v1847 = vpop.permute.xlu0 %1846
  %1848 = vrot.lane.b32.xlu0 %v676, 24
  %v1849 = vpop.permute.xlu0 %1848
  %1850 = vrot.lane.b32.xlu0 %v677, 24
  %v1851 = vpop.permute.xlu0 %1850
  %1852 = vrot.lane.b32.xlu0 %v678, 24
  %v1853 = vpop.permute.xlu0 %1852
  %1854 = vrot.lane.b32.xlu0 %v679, 24
  %v1855 = vpop.permute.xlu0 %1854
  %1856 = vrot.lane.b32.xlu0 %v680, 24
  %v1857 = vpop.permute.xlu0 %1856
  %1858 = vrot.lane.b32.xlu0 %v681, 24
  %v1859 = vpop.permute.xlu0 %1858
  %1860 = vrot.lane.b32.xlu0 %v682, 24
  %v1861 = vpop.permute.xlu0 %1860
  %1862 = vrot.lane.b32.xlu0 %v683, 24
  %v1863 = vpop.permute.xlu0 %1862
  %1864 = vrot.lane.b32.xlu0 %v684, 24
  %v1865 = vpop.permute.xlu0 %1864
  %1866 = vrot.lane.b32.xlu0 %v685, 24
  %v1867 = vpop.permute.xlu0 %1866
  %1868 = vrot.lane.b32.xlu0 %v686, 24
  %v1869 = vpop.permute.xlu0 %1868
  %1870 = vrot.lane.b32.xlu0 %v687, 24
  %v1871 = vpop.permute.xlu0 %1870
  %1872 = vrot.lane.b32.xlu0 %v688, 24
  %v1873 = vpop.permute.xlu0 %1872
  %1874 = vrot.lane.b32.xlu0 %v689, 24
  %v1875 = vpop.permute.xlu0 %1874
  %1876 = vrot.lane.b32.xlu0 %v690, 24
  %v1877 = vpop.permute.xlu0 %1876
  %1878 = vrot.lane.b32.xlu0 %v691, 24
  %v1879 = vpop.permute.xlu0 %1878
  %1880 = vrot.lane.b32.xlu0 %v692, 24
  %v1881 = vpop.permute.xlu0 %1880
  %1882 = vrot.lane.b32.xlu0 %v693, 24
  %v1883 = vpop.permute.xlu0 %1882
  %1884 = vrot.lane.b32.xlu0 %v694, 24
  %v1885 = vpop.permute.xlu0 %1884
  %1886 = vrot.lane.b32.xlu0 %v695, 24
  %v1887 = vpop.permute.xlu0 %1886
  %1888 = vrot.lane.b32.xlu0 %v696, 24
  %v1889 = vpop.permute.xlu0 %1888
  %1890 = vrot.lane.b32.xlu0 %v697, 24
  %v1891 = vpop.permute.xlu0 %1890
  %1892 = vrot.lane.b32.xlu0 %v698, 24
  %v1893 = vpop.permute.xlu0 %1892
  %1894 = vrot.lane.b32.xlu0 %v699, 24
  %v1895 = vpop.permute.xlu0 %1894
  %1896 = vrot.lane.b32.xlu0 %v700, 24
  %v1897 = vpop.permute.xlu0 %1896
  %1898 = vrot.lane.b32.xlu0 %v701, 24
  %v1899 = vpop.permute.xlu0 %1898
  %1900 = vrot.lane.b32.xlu0 %v702, 24
  %v1901 = vpop.permute.xlu0 %1900
  %1902 = vrot.lane.b32.xlu0 %v703, 24
  %v1903 = vpop.permute.xlu0 %1902
  %2000 = vrot.lane.b32.xlu0 %v704, 28
  %v2001 = vpop.permute.xlu0 %2000
  %2002 = vrot.lane.b32.xlu0 %v705, 28
  %v2003 = vpop.permute.xlu0 %2002
  %2004 = vrot.lane.b32.xlu0 %v706, 28
  %v2005 = vpop.permute.xlu0 %2004
  %2006 = vrot.lane.b32.xlu0 %v707, 28
  %v2007 = vpop.permute.xlu0 %2006
  %2008 = vrot.lane.b32.xlu0 %v708, 28
  %v2009 = vpop.permute.xlu0 %2008
  %2010 = vrot.lane.b32.xlu0 %v709, 28
  %v2011 = vpop.permute.xlu0 %2010
  %2012 = vrot.lane.b32.xlu0 %v710, 28
  %v2013 = vpop.permute.xlu0 %2012
  %2014 = vrot.lane.b32.xlu0 %v711, 28
  %v2015 = vpop.permute.xlu0 %2014
  %2016 = vrot.lane.b32.xlu0 %v712, 28
  %v2017 = vpop.permute.xlu0 %2016
  %2018 = vrot.lane.b32.xlu0 %v713, 28
  %v2019 = vpop.permute.xlu0 %2018
  %2020 = vrot.lane.b32.xlu0 %v714, 28
  %v2021 = vpop.permute.xlu0 %2020
  %2022 = vrot.lane.b32.xlu0 %v715, 28
  %v2023 = vpop.permute.xlu0 %2022
  %2024 = vrot.lane.b32.xlu0 %v716, 28
  %v2025 = vpop.permute.xlu0 %2024
  %2026 = vrot.lane.b32.xlu0 %v717, 28
  %v2027 = vpop.permute.xlu0 %2026
  %2028 = vrot.lane.b32.xlu0 %v718, 28
  %v2029 = vpop.permute.xlu0 %2028
  %2030 = vrot.lane.b32.xlu0 %v719, 28
  %v2031 = vpop.permute.xlu0 %2030
  %2032 = vrot.lane.b32.xlu0 %v720, 28
  %v2033 = vpop.permute.xlu0 %2032
  %2034 = vrot.lane.b32.xlu0 %v721, 28
  %v2035 = vpop.permute.xlu0 %2034
  %2036 = vrot.lane.b32.xlu0 %v722, 28
  %v2037 = vpop.permute.xlu0 %2036
  %2038 = vrot.lane.b32.xlu0 %v723, 28
  %v2039 = vpop.permute.xlu0 %2038
  %2040 = vrot.lane.b32.xlu0 %v724, 28
  %v2041 = vpop.permute.xlu0 %2040
  %2042 = vrot.lane.b32.xlu0 %v725, 28
  %v2043 = vpop.permute.xlu0 %2042
  %2044 = vrot.lane.b32.xlu0 %v726, 28
  %v2045 = vpop.permute.xlu0 %2044
  %2046 = vrot.lane.b32.xlu0 %v727, 28
  %v2047 = vpop.permute.xlu0 %2046
  %2048 = vrot.lane.b32.xlu0 %v728, 28
  %v2049 = vpop.permute.xlu0 %2048
  %2050 = vrot.lane.b32.xlu0 %v729, 28
  %v2051 = vpop.permute.xlu0 %2050
  %2052 = vrot.lane.b32.xlu0 %v730, 28
  %v2053 = vpop.permute.xlu0 %2052
  %2054 = vrot.lane.b32.xlu0 %v731, 28
  %v2055 = vpop.permute.xlu0 %2054
  %2056 = vrot.lane.b32.xlu0 %v732, 28
  %v2057 = vpop.permute.xlu0 %2056
  %2058 = vrot.lane.b32.xlu0 %v733, 28
  %v2059 = vpop.permute.xlu0 %2058
  %2060 = vrot.lane.b32.xlu0 %v734, 28
  %v2061 = vpop.permute.xlu0 %2060
  %2062 = vrot.lane.b32.xlu0 %v735, 28
  %v2063 = vpop.permute.xlu0 %2062
  %2064 = vrot.lane.b32.xlu0 %v736, 28
  %v2065 = vpop.permute.xlu0 %2064
  %2066 = vrot.lane.b32.xlu0 %v737, 28
  %v2067 = vpop.permute.xlu0 %2066
  %2068 = vrot.lane.b32.xlu0 %v738, 28
  %v2069 = vpop.permute.xlu0 %2068
  %2070 = vrot.lane.b32.xlu0 %v739, 28
  %v2071 = vpop.permute.xlu0 %2070
  %2072 = vrot.lane.b32.xlu0 %v740, 28
  %v2073 = vpop.permute.xlu0 %2072
  %2074 = vrot.lane.b32.xlu0 %v741, 28
  %v2075 = vpop.permute.xlu0 %2074
  %2076 = vrot.lane.b32.xlu0 %v742, 28
  %v2077 = vpop.permute.xlu0 %2076
  %2078 = vrot.lane.b32.xlu0 %v743, 28
  %v2079 = vpop.permute.xlu0 %2078
  %2080 = vrot.lane.b32.xlu0 %v744, 28
  %v2081 = vpop.permute.xlu0 %2080
  %2082 = vrot.lane.b32.xlu0 %v745, 28
  %v2083 = vpop.permute.xlu0 %2082
  %2084 = vrot.lane.b32.xlu0 %v746, 28
  %v2085 = vpop.permute.xlu0 %2084
  %2086 = vrot.lane.b32.xlu0 %v747, 28
  %v2087 = vpop.permute.xlu0 %2086
  %2088 = vrot.lane.b32.xlu0 %v748, 28
  %v2089 = vpop.permute.xlu0 %2088
  %2090 = vrot.lane.b32.xlu0 %v749, 28
  %v2091 = vpop.permute.xlu0 %2090
  %2092 = vrot.lane.b32.xlu0 %v750, 28
  %v2093 = vpop.permute.xlu0 %2092
  %2094 = vrot.lane.b32.xlu0 %v751, 28
  %v2095 = vpop.permute.xlu0 %2094
  %2192 = vrot.lane.b32.xlu0 %v752, 32
  %v2193 = vpop.permute.xlu0 %2192
  %2194 = vrot.lane.b32.xlu0 %v753, 32
  %v2195 = vpop.permute.xlu0 %2194
  %2196 = vrot.lane.b32.xlu0 %v754, 32
  %v2197 = vpop.permute.xlu0 %2196
  %2198 = vrot.lane.b32.xlu0 %v755, 32
  %v2199 = vpop.permute.xlu0 %2198
  %2200 = vrot.lane.b32.xlu0 %v756, 32
  %v2201 = vpop.permute.xlu0 %2200
  %2202 = vrot.lane.b32.xlu0 %v757, 32
  %v2203 = vpop.permute.xlu0 %2202
  %2204 = vrot.lane.b32.xlu0 %v758, 32
  %v2205 = vpop.permute.xlu0 %2204
  %2206 = vrot.lane.b32.xlu0 %v759, 32
  %v2207 = vpop.permute.xlu0 %2206
  %2208 = vrot.lane.b32.xlu0 %v760, 32
  %v2209 = vpop.permute.xlu0 %2208
  %2210 = vrot.lane.b32.xlu0 %v761, 32
  %v2211 = vpop.permute.xlu0 %2210
  %2212 = vrot.lane.b32.xlu0 %v762, 32
  %v2213 = vpop.permute.xlu0 %2212
  %2214 = vrot.lane.b32.xlu0 %v763, 32
  %v2215 = vpop.permute.xlu0 %2214
  %2216 = vrot.lane.b32.xlu0 %v764, 32
  %v2217 = vpop.permute.xlu0 %2216
  %2218 = vrot.lane.b32.xlu0 %v765, 32
  %v2219 = vpop.permute.xlu0 %2218
  %2220 = vrot.lane.b32.xlu0 %v766, 32
  %v2221 = vpop.permute.xlu0 %2220
  %2222 = vrot.lane.b32.xlu0 %v767, 32
  %v2223 = vpop.permute.xlu0 %2222
  %2224 = vrot.lane.b32.xlu0 %v768, 32
  %v2225 = vpop.permute.xlu0 %2224
  %2226 = vrot.lane.b32.xlu0 %v769, 32
  %v2227 = vpop.permute.xlu0 %2226
  %2228 = vrot.lane.b32.xlu0 %v770, 32
  %v2229 = vpop.permute.xlu0 %2228
  %2230 = vrot.lane.b32.xlu0 %v771, 32
  %v2231 = vpop.permute.xlu0 %2230
  %2232 = vrot.lane.b32.xlu0 %v772, 32
  %v2233 = vpop.permute.xlu0 %2232
  %2234 = vrot.lane.b32.xlu0 %v773, 32
  %v2235 = vpop.permute.xlu0 %2234
  %2236 = vrot.lane.b32.xlu0 %v774, 32
  %v2237 = vpop.permute.xlu0 %2236
  %2238 = vrot.lane.b32.xlu0 %v775, 32
  %v2239 = vpop.permute.xlu0 %2238
  %2240 = vrot.lane.b32.xlu0 %v776, 32
  %v2241 = vpop.permute.xlu0 %2240
  %2242 = vrot.lane.b32.xlu0 %v777, 32
  %v2243 = vpop.permute.xlu0 %2242
  %2244 = vrot.lane.b32.xlu0 %v778, 32
  %v2245 = vpop.permute.xlu0 %2244
  %2246 = vrot.lane.b32.xlu0 %v779, 32
  %v2247 = vpop.permute.xlu0 %2246
  %2248 = vrot.lane.b32.xlu0 %v780, 32
  %v2249 = vpop.permute.xlu0 %2248
  %2250 = vrot.lane.b32.xlu0 %v781, 32
  %v2251 = vpop.permute.xlu0 %2250
  %2252 = vrot.lane.b32.xlu0 %v782, 32
  %v2253 = vpop.permute.xlu0 %2252
  %2254 = vrot.lane.b32.xlu0 %v783, 32
  %v2255 = vpop.permute.xlu0 %2254
  %2256 = vrot.lane.b32.xlu0 %v784, 32
  %v2257 = vpop.permute.xlu0 %2256
  %2258 = vrot.lane.b32.xlu0 %v785, 32
  %v2259 = vpop.permute.xlu0 %2258
  %2260 = vrot.lane.b32.xlu0 %v786, 32
  %v2261 = vpop.permute.xlu0 %2260
  %2262 = vrot.lane.b32.xlu0 %v787, 32
  %v2263 = vpop.permute.xlu0 %2262
  %2264 = vrot.lane.b32.xlu0 %v788, 32
  %v2265 = vpop.permute.xlu0 %2264
  %2266 = vrot.lane.b32.xlu0 %v789, 32
  %v2267 = vpop.permute.xlu0 %2266
  %2268 = vrot.lane.b32.xlu0 %v790, 32
  %v2269 = vpop.permute.xlu0 %2268
  %2270 = vrot.lane.b32.xlu0 %v791, 32
  %v2271 = vpop.permute.xlu0 %2270
  %2272 = vrot.lane.b32.xlu0 %v792, 32
  %v2273 = vpop.permute.xlu0 %2272
  %2274 = vrot.lane.b32.xlu0 %v793, 32
  %v2275 = vpop.permute.xlu0 %2274
  %2276 = vrot.lane.b32.xlu0 %v794, 32
  %v2277 = vpop.permute.xlu0 %2276
  %2278 = vrot.lane.b32.xlu0 %v795, 32
  %v2279 = vpop.permute.xlu0 %2278
  %2280 = vrot.lane.b32.xlu0 %v796, 32
  %v2281 = vpop.permute.xlu0 %2280
  %2282 = vrot.lane.b32.xlu0 %v797, 32
  %v2283 = vpop.permute.xlu0 %2282
  %2284 = vrot.lane.b32.xlu0 %v798, 32
  %v2285 = vpop.permute.xlu0 %2284
  %2286 = vrot.lane.b32.xlu0 %v799, 32
  %v2287 = vpop.permute.xlu0 %2286
  %v2336 = vsel %vm26, %v367, %v849
  %v2337 = vsel %vm26, %v368, %v851
  %v2338 = vsel %vm26, %v369, %v853
  %v2339 = vsel %vm26, %v370, %v855
  %v2340 = vsel %vm26, %v371, %v857
  %v2341 = vsel %vm26, %v372, %v859
  %v2342 = vsel %vm26, %v373, %v861
  %v2343 = vsel %vm26, %v374, %v863
  %v2344 = vsel %vm26, %v375, %v865
  %v2345 = vsel %vm26, %v376, %v867
  %v2346 = vsel %vm26, %v377, %v869
  %v2347 = vsel %vm26, %v378, %v871
  %v2348 = vsel %vm26, %v379, %v873
  %v2349 = vsel %vm26, %v380, %v875
  %v2350 = vsel %vm26, %v381, %v877
  %v2351 = vsel %vm26, %v382, %v879
  %v2352 = vsel %vm26, %v383, %v881
  %v2353 = vsel %vm26, %v384, %v883
  %v2354 = vsel %vm26, %v385, %v885
  %v2355 = vsel %vm26, %v386, %v887
  %v2356 = vsel %vm26, %v387, %v889
  %v2357 = vsel %vm26, %v388, %v891
  %v2358 = vsel %vm26, %v389, %v893
  %v2359 = vsel %vm26, %v390, %v895
  %v2360 = vsel %vm26, %v391, %v897
  %v2361 = vsel %vm26, %v392, %v899
  %v2362 = vsel %vm26, %v393, %v901
  %v2363 = vsel %vm26, %v394, %v903
  %v2364 = vsel %vm26, %v395, %v905
  %v2365 = vsel %vm26, %v396, %v907
  %v2366 = vsel %vm26, %v397, %v909
  %v2367 = vsel %vm26, %v398, %v911
  %v2368 = vsel %vm26, %v399, %v913
  %v2369 = vsel %vm26, %v400, %v915
  %v2370 = vsel %vm26, %v401, %v917
  %v2371 = vsel %vm26, %v402, %v919
  %v2372 = vsel %vm26, %v403, %v921
  %v2373 = vsel %vm26, %v404, %v923
  %v2374 = vsel %vm26, %v405, %v925
  %v2375 = vsel %vm26, %v406, %v927
  %v2376 = vsel %vm26, %v407, %v929
  %v2377 = vsel %vm26, %v408, %v931
  %v2378 = vsel %vm26, %v409, %v933
  %v2379 = vsel %vm26, %v410, %v935
  %v2380 = vsel %vm26, %v411, %v937
  %v2381 = vsel %vm26, %v412, %v939
  %v2382 = vsel %vm26, %v413, %v941
  %v2383 = vsel %vm26, %v414, %v943
  %vm2384 = vcmask 64512
  %v2385 = vsel %vm2384, %v2336, %v1041
  %v2386 = vsel %vm2384, %v2337, %v1043
  %v2387 = vsel %vm2384, %v2338, %v1045
  %v2388 = vsel %vm2384, %v2339, %v1047
  %v2389 = vsel %vm2384, %v2340, %v1049
  %v2390 = vsel %vm2384, %v2341, %v1051
  %v2391 = vsel %vm2384, %v2342, %v1053
  %v2392 = vsel %vm2384, %v2343, %v1055
  %v2393 = vsel %vm2384, %v2344, %v1057
  %v2394 = vsel %vm2384, %v2345, %v1059
  %v2395 = vsel %vm2384, %v2346, %v1061
  %v2396 = vsel %vm2384, %v2347, %v1063
  %v2397 = vsel %vm2384, %v2348, %v1065
  %v2398 = vsel %vm2384, %v2349, %v1067
  %v2399 = vsel %vm2384, %v2350, %v1069
  %v2400 = vsel %vm2384, %v2351, %v1071
  %v2401 = vsel %vm2384, %v2352, %v1073
  %v2402 = vsel %vm2384, %v2353, %v1075
  %v2403 = vsel %vm2384, %v2354, %v1077
  %v2404 = vsel %vm2384, %v2355, %v1079
  %v2405 = vsel %vm2384, %v2356, %v1081
  %v2406 = vsel %vm2384, %v2357, %v1083
  %v2407 = vsel %vm2384, %v2358, %v1085
  %v2408 = vsel %vm2384, %v2359, %v1087
  %v2409 = vsel %vm2384, %v2360, %v1089
  %v2410 = vsel %vm2384, %v2361, %v1091
  %v2411 = vsel %vm2384, %v2362, %v1093
  %v2412 = vsel %vm2384, %v2363, %v1095
  %v2413 = vsel %vm2384, %v2364, %v1097
  %v2414 = vsel %vm2384, %v2365, %v1099
  %v2415 = vsel %vm2384, %v2366, %v1101
  %v2416 = vsel %vm2384, %v2367, %v1103
  %v2417 = vsel %vm2384, %v2368, %v1105
  %v2418 = vsel %vm2384, %v2369, %v1107
  %v2419 = vsel %vm2384, %v2370, %v1109
  %v2420 = vsel %vm2384, %v2371, %v1111
  %v2421 = vsel %vm2384, %v2372, %v1113
  %v2422 = vsel %vm2384, %v2373, %v1115
  %v2423 = vsel %vm2384, %v2374, %v1117
  %v2424 = vsel %vm2384, %v2375, %v1119
  %v2425 = vsel %vm2384, %v2376, %v1121
  %v2426 = vsel %vm2384, %v2377, %v1123
  %v2427 = vsel %vm2384, %v2378, %v1125
  %v2428 = vsel %vm2384, %v2379, %v1127
  %v2429 = vsel %vm2384, %v2380, %v1129
  %v2430 = vsel %vm2384, %v2381, %v1131
  %v2431 = vsel %vm2384, %v2382, %v1133
  %v2432 = vsel %vm2384, %v2383, %v1135
  %vm2433 = vcmask 97280
  %v2434 = vsel %vm2433, %v2385, %v1233
  %v2435 = vsel %vm2433, %v2386, %v1235
  %v2436 = vsel %vm2433, %v2387, %v1237
  %v2437 = vsel %vm2433, %v2388, %v1239
  %v2438 = vsel %vm2433, %v2389, %v1241
  %v2439 = vsel %vm2433, %v2390, %v1243
  %v2440 = vsel %vm2433, %v2391, %v1245
  %v2441 = vsel %vm2433, %v2392, %v1247
  %v2442 = vsel %vm2433, %v2393, %v1249
  %v2443 = vsel %vm2433, %v2394, %v1251
  %v2444 = vsel %vm2433, %v2395, %v1253
  %v2445 = vsel %vm2433, %v2396, %v1255
  %v2446 = vsel %vm2433, %v2397, %v1257
  %v2447 = vsel %vm2433, %v2398, %v1259
  %v2448 = vsel %vm2433, %v2399, %v1261
  %v2449 = vsel %vm2433, %v2400, %v1263
  %v2450 = vsel %vm2433, %v2401, %v1265
  %v2451 = vsel %vm2433, %v2402, %v1267
  %v2452 = vsel %vm2433, %v2403, %v1269
  %v2453 = vsel %vm2433, %v2404, %v1271
  %v2454 = vsel %vm2433, %v2405, %v1273
  %v2455 = vsel %vm2433, %v2406, %v1275
  %v2456 = vsel %vm2433, %v2407, %v1277
  %v2457 = vsel %vm2433, %v2408, %v1279
  %v2458 = vsel %vm2433, %v2409, %v1281
  %v2459 = vsel %vm2433, %v2410, %v1283
  %v2460 = vsel %vm2433, %v2411, %v1285
  %v2461 = vsel %vm2433, %v2412, %v1287
  %v2462 = vsel %vm2433, %v2413, %v1289
  %v2463 = vsel %vm2433, %v2414, %v1291
  %v2464 = vsel %vm2433, %v2415, %v1293
  %v2465 = vsel %vm2433, %v2416, %v1295
  %v2466 = vsel %vm2433, %v2417, %v1297
  %v2467 = vsel %vm2433, %v2418, %v1299
  %v2468 = vsel %vm2433, %v2419, %v1301
  %v2469 = vsel %vm2433, %v2420, %v1303
  %v2470 = vsel %vm2433, %v2421, %v1305
  %v2471 = vsel %vm2433, %v2422, %v1307
  %v2472 = vsel %vm2433, %v2423, %v1309
  %v2473 = vsel %vm2433, %v2424, %v1311
  %v2474 = vsel %vm2433, %v2425, %v1313
  %v2475 = vsel %vm2433, %v2426, %v1315
  %v2476 = vsel %vm2433, %v2427, %v1317
  %v2477 = vsel %vm2433, %v2428, %v1319
  %v2478 = vsel %vm2433, %v2429, %v1321
  %v2479 = vsel %vm2433, %v2430, %v1323
  %v2480 = vsel %vm2433, %v2431, %v1325
  %v2481 = vsel %vm2433, %v2432, %v1327
  %v2482 = vsel %vm148, %v2434, %v1425
  %v2483 = vsel %vm148, %v2435, %v1427
  %v2484 = vsel %vm148, %v2436, %v1429
  %v2485 = vsel %vm148, %v2437, %v1431
  %v2486 = vsel %vm148, %v2438, %v1433
  %v2487 = vsel %vm148, %v2439, %v1435
  %v2488 = vsel %vm148, %v2440, %v1437
  %v2489 = vsel %vm148, %v2441, %v1439
  %v2490 = vsel %vm148, %v2442, %v1441
  %v2491 = vsel %vm148, %v2443, %v1443
  %v2492 = vsel %vm148, %v2444, %v1445
  %v2493 = vsel %vm148, %v2445, %v1447
  %v2494 = vsel %vm148, %v2446, %v1449
  %v2495 = vsel %vm148, %v2447, %v1451
  %v2496 = vsel %vm148, %v2448, %v1453
  %v2497 = vsel %vm148, %v2449, %v1455
  %v2498 = vsel %vm148, %v2450, %v1457
  %v2499 = vsel %vm148, %v2451, %v1459
  %v2500 = vsel %vm148, %v2452, %v1461
  %v2501 = vsel %vm148, %v2453, %v1463
  %v2502 = vsel %vm148, %v2454, %v1465
  %v2503 = vsel %vm148, %v2455, %v1467
  %v2504 = vsel %vm148, %v2456, %v1469
  %v2505 = vsel %vm148, %v2457, %v1471
  %v2506 = vsel %vm148, %v2458, %v1473
  %v2507 = vsel %vm148, %v2459, %v1475
  %v2508 = vsel %vm148, %v2460, %v1477
  %v2509 = vsel %vm148, %v2461, %v1479
  %v2510 = vsel %vm148, %v2462, %v1481
  %v2511 = vsel %vm148, %v2463, %v1483
  %v2512 = vsel %vm148, %v2464, %v1485
  %v2513 = vsel %vm148, %v2465, %v1487
  %v2514 = vsel %vm148, %v2466, %v1489
  %v2515 = vsel %vm148, %v2467, %v1491
  %v2516 = vsel %vm148, %v2468, %v1493
  %v2517 = vsel %vm148, %v2469, %v1495
  %v2518 = vsel %vm148, %v2470, %v1497
  %v2519 = vsel %vm148, %v2471, %v1499
  %v2520 = vsel %vm148, %v2472, %v1501
  %v2521 = vsel %vm148, %v2473, %v1503
  %v2522 = vsel %vm148, %v2474, %v1505
  %v2523 = vsel %vm148, %v2475, %v1507
  %v2524 = vsel %vm148, %v2476, %v1509
  %v2525 = vsel %vm148, %v2477, %v1511
  %v2526 = vsel %vm148, %v2478, %v1513
  %v2527 = vsel %vm148, %v2479, %v1515
  %v2528 = vsel %vm148, %v2480, %v1517
  %v2529 = vsel %vm148, %v2481, %v1519
  %vm2530 = vcmask 162816
  %v2531 = vsel %vm2530, %v2482, %v1617
  %v2532 = vsel %vm2530, %v2483, %v1619
  %v2533 = vsel %vm2530, %v2484, %v1621
  %v2534 = vsel %vm2530, %v2485, %v1623
  %v2535 = vsel %vm2530, %v2486, %v1625
  %v2536 = vsel %vm2530, %v2487, %v1627
  %v2537 = vsel %vm2530, %v2488, %v1629
  %v2538 = vsel %vm2530, %v2489, %v1631
  %v2539 = vsel %vm2530, %v2490, %v1633
  %v2540 = vsel %vm2530, %v2491, %v1635
  %v2541 = vsel %vm2530, %v2492, %v1637
  %v2542 = vsel %vm2530, %v2493, %v1639
  %v2543 = vsel %vm2530, %v2494, %v1641
  %v2544 = vsel %vm2530, %v2495, %v1643
  %v2545 = vsel %vm2530, %v2496, %v1645
  %v2546 = vsel %vm2530, %v2497, %v1647
  %v2547 = vsel %vm2530, %v2498, %v1649
  %v2548 = vsel %vm2530, %v2499, %v1651
  %v2549 = vsel %vm2530, %v2500, %v1653
  %v2550 = vsel %vm2530, %v2501, %v1655
  %v2551 = vsel %vm2530, %v2502, %v1657
  %v2552 = vsel %vm2530, %v2503, %v1659
  %v2553 = vsel %vm2530, %v2504, %v1661
  %v2554 = vsel %vm2530, %v2505, %v1663
  %v2555 = vsel %vm2530, %v2506, %v1665
  %v2556 = vsel %vm2530, %v2507, %v1667
  %v2557 = vsel %vm2530, %v2508, %v1669
  %v2558 = vsel %vm2530, %v2509, %v1671
  %v2559 = vsel %vm2530, %v2510, %v1673
  %v2560 = vsel %vm2530, %v2511, %v1675
  %v2561 = vsel %vm2530, %v2512, %v1677
  %v2562 = vsel %vm2530, %v2513, %v1679
  %v2563 = vsel %vm2530, %v2514, %v1681
  %v2564 = vsel %vm2530, %v2515, %v1683
  %v2565 = vsel %vm2530, %v2516, %v1685
  %v2566 = vsel %vm2530, %v2517, %v1687
  %v2567 = vsel %vm2530, %v2518, %v1689
  %v2568 = vsel %vm2530, %v2519, %v1691
  %v2569 = vsel %vm2530, %v2520, %v1693
  %v2570 = vsel %vm2530, %v2521, %v1695
  %v2571 = vsel %vm2530, %v2522, %v1697
  %v2572 = vsel %vm2530, %v2523, %v1699
  %v2573 = vsel %vm2530, %v2524, %v1701
  %v2574 = vsel %vm2530, %v2525, %v1703
  %v2575 = vsel %vm2530, %v2526, %v1705
  %v2576 = vsel %vm2530, %v2527, %v1707
  %v2577 = vsel %vm2530, %v2528, %v1709
  %v2578 = vsel %vm2530, %v2529, %v1711
  %vm2579 = vcmask 195584
  %v2580 = vsel %vm2579, %v2531, %v1809
  %v2581 = vsel %vm2579, %v2532, %v1811
  %v2582 = vsel %vm2579, %v2533, %v1813
  %v2583 = vsel %vm2579, %v2534, %v1815
  %v2584 = vsel %vm2579, %v2535, %v1817
  %v2585 = vsel %vm2579, %v2536, %v1819
  %v2586 = vsel %vm2579, %v2537, %v1821
  %v2587 = vsel %vm2579, %v2538, %v1823
  %v2588 = vsel %vm2579, %v2539, %v1825
  %v2589 = vsel %vm2579, %v2540, %v1827
  %v2590 = vsel %vm2579, %v2541, %v1829
  %v2591 = vsel %vm2579, %v2542, %v1831
  %v2592 = vsel %vm2579, %v2543, %v1833
  %v2593 = vsel %vm2579, %v2544, %v1835
  %v2594 = vsel %vm2579, %v2545, %v1837
  %v2595 = vsel %vm2579, %v2546, %v1839
  %v2596 = vsel %vm2579, %v2547, %v1841
  %v2597 = vsel %vm2579, %v2548, %v1843
  %v2598 = vsel %vm2579, %v2549, %v1845
  %v2599 = vsel %vm2579, %v2550, %v1847
  %v2600 = vsel %vm2579, %v2551, %v1849
  %v2601 = vsel %vm2579, %v2552, %v1851
  %v2602 = vsel %vm2579, %v2553, %v1853
  %v2603 = vsel %vm2579, %v2554, %v1855
  %v2604 = vsel %vm2579, %v2555, %v1857
  %v2605 = vsel %vm2579, %v2556, %v1859
  %v2606 = vsel %vm2579, %v2557, %v1861
  %v2607 = vsel %vm2579, %v2558, %v1863
  %v2608 = vsel %vm2579, %v2559, %v1865
  %v2609 = vsel %vm2579, %v2560, %v1867
  %v2610 = vsel %vm2579, %v2561, %v1869
  %v2611 = vsel %vm2579, %v2562, %v1871
  %v2612 = vsel %vm2579, %v2563, %v1873
  %v2613 = vsel %vm2579, %v2564, %v1875
  %v2614 = vsel %vm2579, %v2565, %v1877
  %v2615 = vsel %vm2579, %v2566, %v1879
  %v2616 = vsel %vm2579, %v2567, %v1881
  %v2617 = vsel %vm2579, %v2568, %v1883
  %v2618 = vsel %vm2579, %v2569, %v1885
  %v2619 = vsel %vm2579, %v2570, %v1887
  %v2620 = vsel %vm2579, %v2571, %v1889
  %v2621 = vsel %vm2579, %v2572, %v1891
  %v2622 = vsel %vm2579, %v2573, %v1893
  %v2623 = vsel %vm2579, %v2574, %v1895
  %v2624 = vsel %vm2579, %v2575, %v1897
  %v2625 = vsel %vm2579, %v2576, %v1899
  %v2626 = vsel %vm2579, %v2577, %v1901
  %v2627 = vsel %vm2579, %v2578, %v1903
  %vm2628 = vcmask 228352
  %v2629 = vsel %vm2628, %v2580, %v2001
  %v2630 = vsel %vm2628, %v2581, %v2003
  %v2631 = vsel %vm2628, %v2582, %v2005
  %v2632 = vsel %vm2628, %v2583, %v2007
  %v2633 = vsel %vm2628, %v2584, %v2009
  %v2634 = vsel %vm2628, %v2585, %v2011
  %v2635 = vsel %vm2628, %v2586, %v2013
  %v2636 = vsel %vm2628, %v2587, %v2015
  %v2637 = vsel %vm2628, %v2588, %v2017
  %v2638 = vsel %vm2628, %v2589, %v2019
  %v2639 = vsel %vm2628, %v2590, %v2021
  %v2640 = vsel %vm2628, %v2591, %v2023
  %v2641 = vsel %vm2628, %v2592, %v2025
  %v2642 = vsel %vm2628, %v2593, %v2027
  %v2643 = vsel %vm2628, %v2594, %v2029
  %v2644 = vsel %vm2628, %v2595, %v2031
  %v2645 = vsel %vm2628, %v2596, %v2033
  %v2646 = vsel %vm2628, %v2597, %v2035
  %v2647 = vsel %vm2628, %v2598, %v2037
  %v2648 = vsel %vm2628, %v2599, %v2039
  %v2649 = vsel %vm2628, %v2600, %v2041
  %v2650 = vsel %vm2628, %v2601, %v2043
  %v2651 = vsel %vm2628, %v2602, %v2045
  %v2652 = vsel %vm2628, %v2603, %v2047
  %v2653 = vsel %vm2628, %v2604, %v2049
  %v2654 = vsel %vm2628, %v2605, %v2051
  %v2655 = vsel %vm2628, %v2606, %v2053
  %v2656 = vsel %vm2628, %v2607, %v2055
  %v2657 = vsel %vm2628, %v2608, %v2057
  %v2658 = vsel %vm2628, %v2609, %v2059
  %v2659 = vsel %vm2628, %v2610, %v2061
  %v2660 = vsel %vm2628, %v2611, %v2063
  %v2661 = vsel %vm2628, %v2612, %v2065
  %v2662 = vsel %vm2628, %v2613, %v2067
  %v2663 = vsel %vm2628, %v2614, %v2069
  %v2664 = vsel %vm2628, %v2615, %v2071
  %v2665 = vsel %vm2628, %v2616, %v2073
  %v2666 = vsel %vm2628, %v2617, %v2075
  %v2667 = vsel %vm2628, %v2618, %v2077
  %v2668 = vsel %vm2628, %v2619, %v2079
  %v2669 = vsel %vm2628, %v2620, %v2081
  %v2670 = vsel %vm2628, %v2621, %v2083
  %v2671 = vsel %vm2628, %v2622, %v2085
  %v2672 = vsel %vm2628, %v2623, %v2087
  %v2673 = vsel %vm2628, %v2624, %v2089
  %v2674 = vsel %vm2628, %v2625, %v2091
  %v2675 = vsel %vm2628, %v2626, %v2093
  %v2676 = vsel %vm2628, %v2627, %v2095
  %vm2677 = vcmask 261120
  %v2678 = vsel %vm2677, %v2629, %v2193
  %v2679 = vsel %vm2677, %v2630, %v2195
  %v2680 = vsel %vm2677, %v2631, %v2197
  %v2681 = vsel %vm2677, %v2632, %v2199
  %v2682 = vsel %vm2677, %v2633, %v2201
  %v2683 = vsel %vm2677, %v2634, %v2203
  %v2684 = vsel %vm2677, %v2635, %v2205
  %v2685 = vsel %vm2677, %v2636, %v2207
  %v2686 = vsel %vm2677, %v2637, %v2209
  %v2687 = vsel %vm2677, %v2638, %v2211
  %v2688 = vsel %vm2677, %v2639, %v2213
  %v2689 = vsel %vm2677, %v2640, %v2215
  %v2690 = vsel %vm2677, %v2641, %v2217
  %v2691 = vsel %vm2677, %v2642, %v2219
  %v2692 = vsel %vm2677, %v2643, %v2221
  %v2693 = vsel %vm2677, %v2644, %v2223
  %v2694 = vsel %vm2677, %v2645, %v2225
  %v2695 = vsel %vm2677, %v2646, %v2227
  %v2696 = vsel %vm2677, %v2647, %v2229
  %v2697 = vsel %vm2677, %v2648, %v2231
  %v2698 = vsel %vm2677, %v2649, %v2233
  %v2699 = vsel %vm2677, %v2650, %v2235
  %v2700 = vsel %vm2677, %v2651, %v2237
  %v2701 = vsel %vm2677, %v2652, %v2239
  %v2702 = vsel %vm2677, %v2653, %v2241
  %v2703 = vsel %vm2677, %v2654, %v2243
  %v2704 = vsel %vm2677, %v2655, %v2245
  %v2705 = vsel %vm2677, %v2656, %v2247
  %v2706 = vsel %vm2677, %v2657, %v2249
  %v2707 = vsel %vm2677, %v2658, %v2251
  %v2708 = vsel %vm2677, %v2659, %v2253
  %v2709 = vsel %vm2677, %v2660, %v2255
  %v2710 = vsel %vm2677, %v2661, %v2257
  %v2711 = vsel %vm2677, %v2662, %v2259
  %v2712 = vsel %vm2677, %v2663, %v2261
  %v2713 = vsel %vm2677, %v2664, %v2263
  %v2714 = vsel %vm2677, %v2665, %v2265
  %v2715 = vsel %vm2677, %v2666, %v2267
  %v2716 = vsel %vm2677, %v2667, %v2269
  %v2717 = vsel %vm2677, %v2668, %v2271
  %v2718 = vsel %vm2677, %v2669, %v2273
  %v2719 = vsel %vm2677, %v2670, %v2275
  %v2720 = vsel %vm2677, %v2671, %v2277
  %v2721 = vsel %vm2677, %v2672, %v2279
  %v2722 = vsel %vm2677, %v2673, %v2281
  %v2723 = vsel %vm2677, %v2674, %v2283
  %v2724 = vsel %vm2677, %v2675, %v2285
  %v2725 = vsel %vm2677, %v2676, %v2287
  %v2726 = vld [vmem:[%s1] sm:$0xff]
  %v2727 = vld [vmem:[%s1 + $0x8] sm:$0xff]
  %v2728 = vld [vmem:[%s1 + $0x10] sm:$0xff]
  %v2729 = vld [vmem:[%s1 + $0x18] sm:$0xff]
  %v2730 = vld [vmem:[%s1 + $0x20] sm:$0xf]
  %vm2731 = vcmask 293888
  %v2733 = vsel %vm2731, %v2678, 0
  %v2736 = vsel %vm2731, %v2679, 0
  %v2739 = vsel %vm2731, %v2680, 0
  %v2742 = vsel %vm2731, %v2681, 0
  %v2745 = vsel %vm2731, %v2682, 0
  %v2748 = vsel %vm2731, %v2683, 0
  %v2751 = vsel %vm2731, %v2684, 0
  %v2754 = vsel %vm2731, %v2685, 0
  %v2757 = vsel %vm2731, %v2686, 0
  %v2760 = vsel %vm2731, %v2687, 0
  %v2763 = vsel %vm2731, %v2688, 0
  %v2766 = vsel %vm2731, %v2689, 0
  %v2769 = vsel %vm2731, %v2690, 0
  %v2772 = vsel %vm2731, %v2691, 0
  %v2775 = vsel %vm2731, %v2692, 0
  %v2778 = vsel %vm2731, %v2693, 0
  %v2781 = vsel %vm2731, %v2694, 0
  %v2784 = vsel %vm2731, %v2695, 0
  %v2787 = vsel %vm2731, %v2696, 0
  %v2790 = vsel %vm2731, %v2697, 0
  %v2793 = vsel %vm2731, %v2698, 0
  %v2796 = vsel %vm2731, %v2699, 0
  %v2799 = vsel %vm2731, %v2700, 0
  %v2802 = vsel %vm2731, %v2701, 0
  %v2805 = vsel %vm2731, %v2702, 0
  %v2808 = vsel %vm2731, %v2703, 0
  %v2811 = vsel %vm2731, %v2704, 0
  %v2814 = vsel %vm2731, %v2705, 0
  %v2817 = vsel %vm2731, %v2706, 0
  %v2820 = vsel %vm2731, %v2707, 0
  %v2823 = vsel %vm2731, %v2708, 0
  %v2826 = vsel %vm2731, %v2709, 0
  %v2829 = vsel %vm2731, %v2710, 0
  %v2832 = vsel %vm2731, %v2711, 0
  %v2835 = vsel %vm2731, %v2712, 0
  %v2838 = vsel %vm2731, %v2713, 0
  %v2841 = vsel %vm2731, %v2714, 0
  %v2844 = vsel %vm2731, %v2715, 0
  %v2847 = vsel %vm2731, %v2716, 0
  %v2850 = vsel %vm2731, %v2717, 0
  %v2853 = vsel %vm2731, %v2718, 0
  %v2856 = vsel %vm2731, %v2719, 0
  %v2859 = vsel %vm2731, %v2720, 0
  %v2862 = vsel %vm2731, %v2721, 0
  %v2865 = vsel %vm2731, %v2722, 0
  %v2868 = vsel %vm2731, %v2723, 0
  %v2871 = vsel %vm2731, %v2724, 0
  %v2874 = vsel %vm2731, %v2725, 0
  %vm2876 = vcmask 1043456
  %v2878 = vsel %vm2876, %v2730, 0
  %2880 = vmatprep.subr.mxu0 0.0
  %2881 = vmatpush1.msra.mxu0 %v2726
  %2882 = vmatprep.subr.mxu0 0.0
  %2883 = vmatpush1.msra.mxu0 %v2727
  %2884 = vmatprep.subr.mxu0 0.0
  %2885 = vmatpush1.msra.mxu0 %v2728
  %2886 = vmatprep.subr.mxu0 0.0
  %2887 = vmatpush1.msra.mxu0 %v2729
  %2888 = vmatprep.subr.mxu0 0.0
  %2889 = vmatpush1.msra.mxu0 %v2878
  %2890 = vmatprep.subr.mxu0 0.0
  %2891 = vmatpush1.msra.mxu0 0.0
  %2892 = vmatprep.subr.mxu0 0.0
  %2893 = vmatpush1.msra.mxu0 0.0
  %2894 = vmatprep.subr.mxu0 0.0
  %2895 = vmatpush1.msra.mxu0 0.0
  %2896 = vmatprep.subr.mxu0 0.0
  %2897 = vmatpush1.msra.mxu0 0.0
  %2898 = vmatprep.subr.mxu0 0.0
  %2899 = vmatpush1.msra.mxu0 0.0
  %2900 = vmatprep.subr.mxu0 0.0
  %2901 = vmatpush1.msra.mxu0 0.0
  %2902 = vmatprep.subr.mxu0 0.0
  %2903 = vmatpush1.msra.mxu0 0.0
  %2904 = vmatprep.subr.mxu0 0.0
  %2905 = vmatpush1.msra.mxu0 0.0
  %2906 = vmatprep.subr.mxu0 0.0
  %2907 = vmatpush1.msra.mxu0 0.0
  %2908 = vmatprep.subr.mxu0 0.0
  %2909 = vmatpush1.msra.mxu0 0.0
  %2910 = vmatprep.subr.mxu0 0.0
  %2911 = vmatpush1.msra.mxu0 0.0
  %2912 = vmatprep.subr.mxu0 0.0
  %2913 = vmatpush1.msra.mxu0 0.0
  %2914 = vmatprep.subr.mxu0 0.0
  %2915 = vmatpush1.msra.mxu0 0.0
  %2916 = vmatprep.subr.mxu0 0.0
  %2917 = vmatpush1.msra.mxu0 0.0
  %2918 = vmatprep.subr.mxu0 0.0
  %2919 = vmatpush1.msra.mxu0 0.0
  %2920 = vmatprep.subr.mxu0 0.0
  %2921 = vmatpush1.msra.mxu0 0.0
  %2922 = vmatprep.subr.mxu0 0.0
  %2923 = vmatpush1.msra.mxu0 0.0
  %2924 = vmatprep.subr.mxu0 0.0
  %2925 = vmatpush1.msra.mxu0 0.0
  %2926 = vmatprep.subr.mxu0 0.0
  %2927 = vmatpush1.msra.mxu0 0.0
  %2928 = vmatprep.subr.mxu0 0.0
  %2929 = vmatpush1.msra.mxu0 0.0
  %2930 = vmatprep.subr.mxu0 0.0
  %2931 = vmatpush1.msra.mxu0 0.0
  %2932 = vmatprep.subr.mxu0 0.0
  %2933 = vmatpush1.msra.mxu0 0.0
  %2934 = vmatprep.subr.mxu0 0.0
  %2935 = vmatpush1.msra.mxu0 0.0
  %2936 = vmatprep.subr.mxu0 0.0
  %2937 = vmatpush1.msra.mxu0 0.0
  %2938 = vmatprep.subr.mxu0 0.0
  %2939 = vmatpush1.msra.mxu0 0.0
  %2940 = vmatprep.subr.mxu0 0.0
  %2941 = vmatpush1.msra.mxu0 0.0
  %2942 = vmatprep.subr.mxu0 0.0
  %2943 = vmatpush1.msra.mxu0 0.0
  %2944 = vmatprep.mubr.f32.mxu0 0.0
  %2945 = vmatmul.mubr.f32.gmra.mrb[0].mxu0 %v2733
  %v2946 = vpop.f32.mrb[0].mxu0
  %v2947 = vadd.f32 0.0, %v2946
  %v2948 = vpop.f32.mrb[0].mxu0
  %2949 = vmatprep.mubr.f32.mxu0 0.0
  %2950 = vmatmul.mubr.f32.gmra.mrb[0].mxu0 %v2736
  %v2951 = vpop.f32.mrb[0].mxu0
  %v2952 = vadd.f32 0.0, %v2951
  %v2953 = vpop.f32.mrb[0].mxu0
  %2954 = vmatprep.mubr.f32.mxu0 0.0
  %2955 = vmatmul.mubr.f32.gmra.mrb[0].mxu0 %v2739
  %v2956 = vpop.f32.mrb[0].mxu0
  %v2957 = vadd.f32 0.0, %v2956
  %v2958 = vpop.f32.mrb[0].mxu0
  %2959 = vmatprep.mubr.f32.mxu0 0.0
  %2960 = vmatmul.mubr.f32.gmra.mrb[0].mxu0 %v2742
  %v2961 = vpop.f32.mrb[0].mxu0
  %v2962 = vadd.f32 0.0, %v2961
  %v2963 = vpop.f32.mrb[0].mxu0
  %2964 = vmatprep.mubr.f32.mxu0 0.0
  %2965 = vmatmul.mubr.f32.gmra.mrb[0].mxu0 %v2745
  %v2966 = vpop.f32.mrb[0].mxu0
  %v2967 = vadd.f32 0.0, %v2966
  %v2968 = vpop.f32.mrb[0].mxu0
  %2969 = vmatprep.mubr.f32.mxu0 0.0
  %2970 = vmatmul.mubr.f32.gmra.mrb[0].mxu0 %v2748
  %v2971 = vpop.f32.mrb[0].mxu0
  %v2972 = vadd.f32 0.0, %v2971
  %v2973 = vpop.f32.mrb[0].mxu0
  %2974 = vmatprep.mubr.f32.mxu0 0.0
  %2975 = vmatmul.mubr.f32.gmra.mrb[0].mxu0 %v2751
  %v2976 = vpop.f32.mrb[0].mxu0
  %v2977 = vadd.f32 0.0, %v2976
  %v2978 = vpop.f32.mrb[0].mxu0
  %2979 = vmatprep.mubr.f32.mxu0 0.0
  %2980 = vmatmul.mubr.f32.gmra.mrb[0].mxu0 %v2754
  %v2981 = vpop.f32.mrb[0].mxu0
  %v2982 = vadd.f32 0.0, %v2981
  %v2983 = vpop.f32.mrb[0].mxu0
  %2984 = vmatprep.mubr.f32.mxu0 0.0
  %2985 = vmatmul.mubr.f32.gmra.mrb[0].mxu0 %v2757
  %v2986 = vpop.f32.mrb[0].mxu0
  %v2987 = vadd.f32 0.0, %v2986
  %v2988 = vpop.f32.mrb[0].mxu0
  %2989 = vmatprep.mubr.f32.mxu0 0.0
  %2990 = vmatmul.mubr.f32.gmra.mrb[0].mxu0 %v2760
  %v2991 = vpop.f32.mrb[0].mxu0
  %v2992 = vadd.f32 0.0, %v2991
  %v2993 = vpop.f32.mrb[0].mxu0
  %2994 = vmatprep.mubr.f32.mxu0 0.0
  %2995 = vmatmul.mubr.f32.gmra.mrb[0].mxu0 %v2763
  %v2996 = vpop.f32.mrb[0].mxu0
  %v2997 = vadd.f32 0.0, %v2996
  %v2998 = vpop.f32.mrb[0].mxu0
  %2999 = vmatprep.mubr.f32.mxu0 0.0
  %3000 = vmatmul.mubr.f32.gmra.mrb[0].mxu0 %v2766
  %v3001 = vpop.f32.mrb[0].mxu0
  %v3002 = vadd.f32 0.0, %v3001
  %v3003 = vpop.f32.mrb[0].mxu0
  %3004 = vmatprep.mubr.f32.mxu0 0.0
  %3005 = vmatmul.mubr.f32.gmra.mrb[0].mxu0 %v2769
  %v3006 = vpop.f32.mrb[0].mxu0
  %v3007 = vadd.f32 0.0, %v3006
  %v3008 = vpop.f32.mrb[0].mxu0
  %3009 = vmatprep.mubr.f32.mxu0 0.0
  %3010 = vmatmul.mubr.f32.gmra.mrb[0].mxu0 %v2772
  %v3011 = vpop.f32.mrb[0].mxu0
  %v3012 = vadd.f32 0.0, %v3011
  %v3013 = vpop.f32.mrb[0].mxu0
  %3014 = vmatprep.mubr.f32.mxu0 0.0
  %3015 = vmatmul.mubr.f32.gmra.mrb[0].mxu0 %v2775
  %v3016 = vpop.f32.mrb[0].mxu0
  %v3017 = vadd.f32 0.0, %v3016
  %v3018 = vpop.f32.mrb[0].mxu0
  %3019 = vmatprep.mubr.f32.mxu0 0.0
  %3020 = vmatmul.mubr.f32.gmra.mrb[0].mxu0 %v2778
  %v3021 = vpop.f32.mrb[0].mxu0
  %v3022 = vadd.f32 0.0, %v3021
  %v3023 = vpop.f32.mrb[0].mxu0
  %3024 = vmatprep.mubr.f32.mxu0 0.0
  %3025 = vmatmul.mubr.f32.gmra.mrb[0].mxu0 %v2781
  %v3026 = vpop.f32.mrb[0].mxu0
  %v3027 = vadd.f32 0.0, %v3026
  %v3028 = vpop.f32.mrb[0].mxu0
  %3029 = vmatprep.mubr.f32.mxu0 0.0
  %3030 = vmatmul.mubr.f32.gmra.mrb[0].mxu0 %v2784
  %v3031 = vpop.f32.mrb[0].mxu0
  %v3032 = vadd.f32 0.0, %v3031
  %v3033 = vpop.f32.mrb[0].mxu0
  %3034 = vmatprep.mubr.f32.mxu0 0.0
  %3035 = vmatmul.mubr.f32.gmra.mrb[0].mxu0 %v2787
  %v3036 = vpop.f32.mrb[0].mxu0
  %v3037 = vadd.f32 0.0, %v3036
  %v3038 = vpop.f32.mrb[0].mxu0
  %3039 = vmatprep.mubr.f32.mxu0 0.0
  %3040 = vmatmul.mubr.f32.gmra.mrb[0].mxu0 %v2790
  %v3041 = vpop.f32.mrb[0].mxu0
  %v3042 = vadd.f32 0.0, %v3041
  %v3043 = vpop.f32.mrb[0].mxu0
  %3044 = vmatprep.mubr.f32.mxu0 0.0
  %3045 = vmatmul.mubr.f32.gmra.mrb[0].mxu0 %v2793
  %v3046 = vpop.f32.mrb[0].mxu0
  %v3047 = vadd.f32 0.0, %v3046
  %v3048 = vpop.f32.mrb[0].mxu0
  %3049 = vmatprep.mubr.f32.mxu0 0.0
  %3050 = vmatmul.mubr.f32.gmra.mrb[0].mxu0 %v2796
  %v3051 = vpop.f32.mrb[0].mxu0
  %v3052 = vadd.f32 0.0, %v3051
  %v3053 = vpop.f32.mrb[0].mxu0
  %3054 = vmatprep.mubr.f32.mxu0 0.0
  %3055 = vmatmul.mubr.f32.gmra.mrb[0].mxu0 %v2799
  %v3056 = vpop.f32.mrb[0].mxu0
  %v3057 = vadd.f32 0.0, %v3056
  %v3058 = vpop.f32.mrb[0].mxu0
  %3059 = vmatprep.mubr.f32.mxu0 0.0
  %3060 = vmatmul.mubr.f32.gmra.mrb[0].mxu0 %v2802
  %v3061 = vpop.f32.mrb[0].mxu0
  %v3062 = vadd.f32 0.0, %v3061
  %v3063 = vpop.f32.mrb[0].mxu0
  %3064 = vmatprep.mubr.f32.mxu0 0.0
  %3065 = vmatmul.mubr.f32.gmra.mrb[0].mxu0 %v2805
  %v3066 = vpop.f32.mrb[0].mxu0
  %v3067 = vadd.f32 0.0, %v3066
  %v3068 = vpop.f32.mrb[0].mxu0
  %3069 = vmatprep.mubr.f32.mxu0 0.0
  %3070 = vmatmul.mubr.f32.gmra.mrb[0].mxu0 %v2808
  %v3071 = vpop.f32.mrb[0].mxu0
  %v3072 = vadd.f32 0.0, %v3071
  %v3073 = vpop.f32.mrb[0].mxu0
  %3074 = vmatprep.mubr.f32.mxu0 0.0
  %3075 = vmatmul.mubr.f32.gmra.mrb[0].mxu0 %v2811
  %v3076 = vpop.f32.mrb[0].mxu0
  %v3077 = vadd.f32 0.0, %v3076
  %v3078 = vpop.f32.mrb[0].mxu0
  %3079 = vmatprep.mubr.f32.mxu0 0.0
  %3080 = vmatmul.mubr.f32.gmra.mrb[0].mxu0 %v2814
  %v3081 = vpop.f32.mrb[0].mxu0
  %v3082 = vadd.f32 0.0, %v3081
  %v3083 = vpop.f32.mrb[0].mxu0
  %3084 = vmatprep.mubr.f32.mxu0 0.0
  %3085 = vmatmul.mubr.f32.gmra.mrb[0].mxu0 %v2817
  %v3086 = vpop.f32.mrb[0].mxu0
  %v3087 = vadd.f32 0.0, %v3086
  %v3088 = vpop.f32.mrb[0].mxu0
  %3089 = vmatprep.mubr.f32.mxu0 0.0
  %3090 = vmatmul.mubr.f32.gmra.mrb[0].mxu0 %v2820
  %v3091 = vpop.f32.mrb[0].mxu0
  %v3092 = vadd.f32 0.0, %v3091
  %v3093 = vpop.f32.mrb[0].mxu0
  %3094 = vmatprep.mubr.f32.mxu0 0.0
  %3095 = vmatmul.mubr.f32.gmra.mrb[0].mxu0 %v2823
  %v3096 = vpop.f32.mrb[0].mxu0
  %v3097 = vadd.f32 0.0, %v3096
  %v3098 = vpop.f32.mrb[0].mxu0
  %3099 = vmatprep.mubr.f32.mxu0 0.0
  %3100 = vmatmul.mubr.f32.gmra.mrb[0].mxu0 %v2826
  %v3101 = vpop.f32.mrb[0].mxu0
  %v3102 = vadd.f32 0.0, %v3101
  %v3103 = vpop.f32.mrb[0].mxu0
  %3104 = vmatprep.mubr.f32.mxu0 0.0
  %3105 = vmatmul.mubr.f32.gmra.mrb[0].mxu0 %v2829
  %v3106 = vpop.f32.mrb[0].mxu0
  %v3107 = vadd.f32 0.0, %v3106
  %v3108 = vpop.f32.mrb[0].mxu0
  %3109 = vmatprep.mubr.f32.mxu0 0.0
  %3110 = vmatmul.mubr.f32.gmra.mrb[0].mxu0 %v2832
  %v3111 = vpop.f32.mrb[0].mxu0
  %v3112 = vadd.f32 0.0, %v3111
  %v3113 = vpop.f32.mrb[0].mxu0
  %3114 = vmatprep.mubr.f32.mxu0 0.0
  %3115 = vmatmul.mubr.f32.gmra.mrb[0].mxu0 %v2835
  %v3116 = vpop.f32.mrb[0].mxu0
  %v3117 = vadd.f32 0.0, %v3116
  %v3118 = vpop.f32.mrb[0].mxu0
  %3119 = vmatprep.mubr.f32.mxu0 0.0
  %3120 = vmatmul.mubr.f32.gmra.mrb[0].mxu0 %v2838
  %v3121 = vpop.f32.mrb[0].mxu0
  %v3122 = vadd.f32 0.0, %v3121
  %v3123 = vpop.f32.mrb[0].mxu0
  %3124 = vmatprep.mubr.f32.mxu0 0.0
  %3125 = vmatmul.mubr.f32.gmra.mrb[0].mxu0 %v2841
  %v3126 = vpop.f32.mrb[0].mxu0
  %v3127 = vadd.f32 0.0, %v3126
  %v3128 = vpop.f32.mrb[0].mxu0
  %3129 = vmatprep.mubr.f32.mxu0 0.0
  %3130 = vmatmul.mubr.f32.gmra.mrb[0].mxu0 %v2844
  %v3131 = vpop.f32.mrb[0].mxu0
  %v3132 = vadd.f32 0.0, %v3131
  %v3133 = vpop.f32.mrb[0].mxu0
  %3134 = vmatprep.mubr.f32.mxu0 0.0
  %3135 = vmatmul.mubr.f32.gmra.mrb[0].mxu0 %v2847
  %v3136 = vpop.f32.mrb[0].mxu0
  %v3137 = vadd.f32 0.0, %v3136
  %v3138 = vpop.f32.mrb[0].mxu0
  %3139 = vmatprep.mubr.f32.mxu0 0.0
  %3140 = vmatmul.mubr.f32.gmra.mrb[0].mxu0 %v2850
  %v3141 = vpop.f32.mrb[0].mxu0
  %v3142 = vadd.f32 0.0, %v3141
  %v3143 = vpop.f32.mrb[0].mxu0
  %3144 = vmatprep.mubr.f32.mxu0 0.0
  %3145 = vmatmul.mubr.f32.gmra.mrb[0].mxu0 %v2853
  %v3146 = vpop.f32.mrb[0].mxu0
  %v3147 = vadd.f32 0.0, %v3146
  %v3148 = vpop.f32.mrb[0].mxu0
  %3149 = vmatprep.mubr.f32.mxu0 0.0
  %3150 = vmatmul.mubr.f32.gmra.mrb[0].mxu0 %v2856
  %v3151 = vpop.f32.mrb[0].mxu0
  %v3152 = vadd.f32 0.0, %v3151
  %v3153 = vpop.f32.mrb[0].mxu0
  %3154 = vmatprep.mubr.f32.mxu0 0.0
  %3155 = vmatmul.mubr.f32.gmra.mrb[0].mxu0 %v2859
  %v3156 = vpop.f32.mrb[0].mxu0
  %v3157 = vadd.f32 0.0, %v3156
  %v3158 = vpop.f32.mrb[0].mxu0
  %3159 = vmatprep.mubr.f32.mxu0 0.0
  %3160 = vmatmul.mubr.f32.gmra.mrb[0].mxu0 %v2862
  %v3161 = vpop.f32.mrb[0].mxu0
  %v3162 = vadd.f32 0.0, %v3161
  %v3163 = vpop.f32.mrb[0].mxu0
  %3164 = vmatprep.mubr.f32.mxu0 0.0
  %3165 = vmatmul.mubr.f32.gmra.mrb[0].mxu0 %v2865
  %v3166 = vpop.f32.mrb[0].mxu0
  %v3167 = vadd.f32 0.0, %v3166
  %v3168 = vpop.f32.mrb[0].mxu0
  %3169 = vmatprep.mubr.f32.mxu0 0.0
  %3170 = vmatmul.mubr.f32.gmra.mrb[0].mxu0 %v2868
  %v3171 = vpop.f32.mrb[0].mxu0
  %v3172 = vadd.f32 0.0, %v3171
  %v3173 = vpop.f32.mrb[0].mxu0
  %3174 = vmatprep.mubr.f32.mxu0 0.0
  %3175 = vmatmul.mubr.f32.gmra.mrb[0].mxu0 %v2871
  %v3176 = vpop.f32.mrb[0].mxu0
  %v3177 = vadd.f32 0.0, %v3176
  %v3178 = vpop.f32.mrb[0].mxu0
  %3179 = vmatprep.mubr.f32.mxu0 0.0
  %3180 = vmatmul.mubr.f32.gmra.mrb[0].mxu0 %v2874
  %v3181 = vpop.f32.mrb[0].mxu0
  %v3182 = vadd.f32 0.0, %v3181
  %v3183 = vpop.f32.mrb[0].mxu0
  %3184 = vdwg.mxu0
  %v3185 = vld [vmem:[%s2] sm:$0x1]
  %v3187 = vlaneseq
  %v3188 = vshrl.u32 %v3187, 7
  %v3189 = vsub.s32 0, %v3188
  %v3190 = vrot.slane %v3185, %v3189
  %v3192 = vmul.f32 %v2947, %v3190
  %v3193 = vmul.f32 %v2952, %v3190
  %v3194 = vmul.f32 %v2957, %v3190
  %v3195 = vmul.f32 %v2962, %v3190
  %v3196 = vmul.f32 %v2967, %v3190
  %v3197 = vmul.f32 %v2972, %v3190
  %v3198 = vmul.f32 %v2977, %v3190
  %v3199 = vmul.f32 %v2982, %v3190
  %v3200 = vmul.f32 %v2987, %v3190
  %v3201 = vmul.f32 %v2992, %v3190
  %v3202 = vmul.f32 %v2997, %v3190
  %v3203 = vmul.f32 %v3002, %v3190
  %v3204 = vmul.f32 %v3007, %v3190
  %v3205 = vmul.f32 %v3012, %v3190
  %v3206 = vmul.f32 %v3017, %v3190
  %v3207 = vmul.f32 %v3022, %v3190
  %v3208 = vmul.f32 %v3027, %v3190
  %v3209 = vmul.f32 %v3032, %v3190
  %v3210 = vmul.f32 %v3037, %v3190
  %v3211 = vmul.f32 %v3042, %v3190
  %v3212 = vmul.f32 %v3047, %v3190
  %v3213 = vmul.f32 %v3052, %v3190
  %v3214 = vmul.f32 %v3057, %v3190
  %v3215 = vmul.f32 %v3062, %v3190
  %v3216 = vmul.f32 %v3067, %v3190
  %v3217 = vmul.f32 %v3072, %v3190
  %v3218 = vmul.f32 %v3077, %v3190
  %v3219 = vmul.f32 %v3082, %v3190
  %v3220 = vmul.f32 %v3087, %v3190
  %v3221 = vmul.f32 %v3092, %v3190
  %v3222 = vmul.f32 %v3097, %v3190
  %v3223 = vmul.f32 %v3102, %v3190
  %v3224 = vmul.f32 %v3107, %v3190
  %v3225 = vmul.f32 %v3112, %v3190
  %v3226 = vmul.f32 %v3117, %v3190
  %v3227 = vmul.f32 %v3122, %v3190
  %v3228 = vmul.f32 %v3127, %v3190
  %v3229 = vmul.f32 %v3132, %v3190
  %v3230 = vmul.f32 %v3137, %v3190
  %v3231 = vmul.f32 %v3142, %v3190
  %v3232 = vmul.f32 %v3147, %v3190
  %v3233 = vmul.f32 %v3152, %v3190
  %v3234 = vmul.f32 %v3157, %v3190
  %v3235 = vmul.f32 %v3162, %v3190
  %v3236 = vmul.f32 %v3167, %v3190
  %v3237 = vmul.f32 %v3172, %v3190
  %v3238 = vmul.f32 %v3177, %v3190
  %v3239 = vmul.f32 %v3182, %v3190
  %v3240 = vld [vmem:[%s3] sm:$0x1]
  %v3242 = vlaneseq
  %v3243 = vshrl.u32 %v3242, 7
  %v3244 = vsub.s32 0, %v3243
  %v3245 = vrot.slane %v3240, %v3244
  %v3247 = vadd.f32 %v3192, %v3245
  %v3248 = vadd.f32 %v3193, %v3245
  %v3249 = vadd.f32 %v3194, %v3245
  %v3250 = vadd.f32 %v3195, %v3245
  %v3251 = vadd.f32 %v3196, %v3245
  %v3252 = vadd.f32 %v3197, %v3245
  %v3253 = vadd.f32 %v3198, %v3245
  %v3254 = vadd.f32 %v3199, %v3245
  %v3255 = vadd.f32 %v3200, %v3245
  %v3256 = vadd.f32 %v3201, %v3245
  %v3257 = vadd.f32 %v3202, %v3245
  %v3258 = vadd.f32 %v3203, %v3245
  %v3259 = vadd.f32 %v3204, %v3245
  %v3260 = vadd.f32 %v3205, %v3245
  %v3261 = vadd.f32 %v3206, %v3245
  %v3262 = vadd.f32 %v3207, %v3245
  %v3263 = vadd.f32 %v3208, %v3245
  %v3264 = vadd.f32 %v3209, %v3245
  %v3265 = vadd.f32 %v3210, %v3245
  %v3266 = vadd.f32 %v3211, %v3245
  %v3267 = vadd.f32 %v3212, %v3245
  %v3268 = vadd.f32 %v3213, %v3245
  %v3269 = vadd.f32 %v3214, %v3245
  %v3270 = vadd.f32 %v3215, %v3245
  %v3271 = vadd.f32 %v3216, %v3245
  %v3272 = vadd.f32 %v3217, %v3245
  %v3273 = vadd.f32 %v3218, %v3245
  %v3274 = vadd.f32 %v3219, %v3245
  %v3275 = vadd.f32 %v3220, %v3245
  %v3276 = vadd.f32 %v3221, %v3245
  %v3277 = vadd.f32 %v3222, %v3245
  %v3278 = vadd.f32 %v3223, %v3245
  %v3279 = vadd.f32 %v3224, %v3245
  %v3280 = vadd.f32 %v3225, %v3245
  %v3281 = vadd.f32 %v3226, %v3245
  %v3282 = vadd.f32 %v3227, %v3245
  %v3283 = vadd.f32 %v3228, %v3245
  %v3284 = vadd.f32 %v3229, %v3245
  %v3285 = vadd.f32 %v3230, %v3245
  %v3286 = vadd.f32 %v3231, %v3245
  %v3287 = vadd.f32 %v3232, %v3245
  %v3288 = vadd.f32 %v3233, %v3245
  %v3289 = vadd.f32 %v3234, %v3245
  %v3290 = vadd.f32 %v3235, %v3245
  %v3291 = vadd.f32 %v3236, %v3245
  %v3292 = vadd.f32 %v3237, %v3245
  %v3293 = vadd.f32 %v3238, %v3245
  %v3294 = vadd.f32 %v3239, %v3245
  %v3295 = vld [vmem:[%s4] sm:$0x1]
  %v3297 = vlaneseq
  %v3298 = vshrl.u32 %v3297, 7
  %v3299 = vsub.s32 0, %v3298
  %v3300 = vrot.slane %v3295, %v3299
  %v3302 = vmax.f32 %v3247, %v3300
  %v3303 = vmax.f32 %v3248, %v3300
  %v3304 = vmax.f32 %v3249, %v3300
  %v3305 = vmax.f32 %v3250, %v3300
  %v3306 = vmax.f32 %v3251, %v3300
  %v3307 = vmax.f32 %v3252, %v3300
  %v3308 = vmax.f32 %v3253, %v3300
  %v3309 = vmax.f32 %v3254, %v3300
  %v3310 = vmax.f32 %v3255, %v3300
  %v3311 = vmax.f32 %v3256, %v3300
  %v3312 = vmax.f32 %v3257, %v3300
  %v3313 = vmax.f32 %v3258, %v3300
  %v3314 = vmax.f32 %v3259, %v3300
  %v3315 = vmax.f32 %v3260, %v3300
  %v3316 = vmax.f32 %v3261, %v3300
  %v3317 = vmax.f32 %v3262, %v3300
  %v3318 = vmax.f32 %v3263, %v3300
  %v3319 = vmax.f32 %v3264, %v3300
  %v3320 = vmax.f32 %v3265, %v3300
  %v3321 = vmax.f32 %v3266, %v3300
  %v3322 = vmax.f32 %v3267, %v3300
  %v3323 = vmax.f32 %v3268, %v3300
  %v3324 = vmax.f32 %v3269, %v3300
  %v3325 = vmax.f32 %v3270, %v3300
  %v3326 = vmax.f32 %v3271, %v3300
  %v3327 = vmax.f32 %v3272, %v3300
  %v3328 = vmax.f32 %v3273, %v3300
  %v3329 = vmax.f32 %v3274, %v3300
  %v3330 = vmax.f32 %v3275, %v3300
  %v3331 = vmax.f32 %v3276, %v3300
  %v3332 = vmax.f32 %v3277, %v3300
  %v3333 = vmax.f32 %v3278, %v3300
  %v3334 = vmax.f32 %v3279, %v3300
  %v3335 = vmax.f32 %v3280, %v3300
  %v3336 = vmax.f32 %v3281, %v3300
  %v3337 = vmax.f32 %v3282, %v3300
  %v3338 = vmax.f32 %v3283, %v3300
  %v3339 = vmax.f32 %v3284, %v3300
  %v3340 = vmax.f32 %v3285, %v3300
  %v3341 = vmax.f32 %v3286, %v3300
  %v3342 = vmax.f32 %v3287, %v3300
  %v3343 = vmax.f32 %v3288, %v3300
  %v3344 = vmax.f32 %v3289, %v3300
  %v3345 = vmax.f32 %v3290, %v3300
  %v3346 = vmax.f32 %v3291, %v3300
  %v3347 = vmax.f32 %v3292, %v3300
  %v3348 = vmax.f32 %v3293, %v3300
  %v3349 = vmax.f32 %v3294, %v3300
  %s3350 = scalar_lea.vmem [#allocation3], 16
  %3351 = vst.msk [vmem:[%s3350 + $0x1] sm:$0xff] %vm148, %v3302
  %3352 = vst.msk [vmem:[%s3350 + $0x11] sm:$0xff] %vm148, %v3303
  %3353 = vst.msk [vmem:[%s3350 + $0x21] sm:$0xff] %vm148, %v3304
  %3354 = vst.msk [vmem:[%s3350 + $0x31] sm:$0xff] %vm148, %v3305
  %3355 = vst.msk [vmem:[%s3350 + $0x41] sm:$0xff] %vm148, %v3306
  %3356 = vst.msk [vmem:[%s3350 + $0x51] sm:$0xff] %vm148, %v3307
  %3357 = vst.msk [vmem:[%s3350 + $0x61] sm:$0xff] %vm148, %v3308
  %3358 = vst.msk [vmem:[%s3350 + $0x71] sm:$0xff] %vm148, %v3309
  %3359 = vst.msk [vmem:[%s3350 + $0xa1] sm:$0xff] %vm148, %v3310
  %3360 = vst.msk [vmem:[%s3350 + $0xb1] sm:$0xff] %vm148, %v3311
  %3361 = vst.msk [vmem:[%s3350 + $0xc1] sm:$0xff] %vm148, %v3312
  %3362 = vst.msk [vmem:[%s3350 + $0xd1] sm:$0xff] %vm148, %v3313
  %3363 = vst.msk [vmem:[%s3350 + $0xe1] sm:$0xff] %vm148, %v3314
  %3364 = vst.msk [vmem:[%s3350 + $0xf1] sm:$0xff] %vm148, %v3315
  %3365 = vst.msk [vmem:[%s3350 + $0x101] sm:$0xff] %vm148, %v3316
  %3366 = vst.msk [vmem:[%s3350 + $0x111] sm:$0xff] %vm148, %v3317
  %3367 = vst.msk [vmem:[%s3350 + $0x141] sm:$0xff] %vm148, %v3318
  %3368 = vst.msk [vmem:[%s3350 + $0x151] sm:$0xff] %vm148, %v3319
  %3369 = vst.msk [vmem:[%s3350 + $0x161] sm:$0xff] %vm148, %v3320
  %3370 = vst.msk [vmem:[%s3350 + $0x171] sm:$0xff] %vm148, %v3321
  %3371 = vst.msk [vmem:[%s3350 + $0x181] sm:$0xff] %vm148, %v3322
  %3372 = vst.msk [vmem:[%s3350 + $0x191] sm:$0xff] %vm148, %v3323
  %3373 = vst.msk [vmem:[%s3350 + $0x1a1] sm:$0xff] %vm148, %v3324
  %3374 = vst.msk [vmem:[%s3350 + $0x1b1] sm:$0xff] %vm148, %v3325
  %3375 = vst.msk [vmem:[%s3350 + $0x1e1] sm:$0xff] %vm148, %v3326
  %3376 = vst.msk [vmem:[%s3350 + $0x1f1] sm:$0xff] %vm148, %v3327
  %3377 = vst.msk [vmem:[%s3350 + $0x201] sm:$0xff] %vm148, %v3328
  %3378 = vst.msk [vmem:[%s3350 + $0x211] sm:$0xff] %vm148, %v3329
  %3379 = vst.msk [vmem:[%s3350 + $0x221] sm:$0xff] %vm148, %v3330
  %3380 = vst.msk [vmem:[%s3350 + $0x231] sm:$0xff] %vm148, %v3331
  %3381 = vst.msk [vmem:[%s3350 + $0x241] sm:$0xff] %vm148, %v3332
  %3382 = vst.msk [vmem:[%s3350 + $0x251] sm:$0xff] %vm148, %v3333
  %3383 = vst.msk [vmem:[%s3350 + $0x281] sm:$0xff] %vm148, %v3334
  %3384 = vst.msk [vmem:[%s3350 + $0x291] sm:$0xff] %vm148, %v3335
  %3385 = vst.msk [vmem:[%s3350 + $0x2a1] sm:$0xff] %vm148, %v3336
  %3386 = vst.msk [vmem:[%s3350 + $0x2b1] sm:$0xff] %vm148, %v3337
  %3387 = vst.msk [vmem:[%s3350 + $0x2c1] sm:$0xff] %vm148, %v3338
  %3388 = vst.msk [vmem:[%s3350 + $0x2d1] sm:$0xff] %vm148, %v3339
  %3389 = vst.msk [vmem:[%s3350 + $0x2e1] sm:$0xff] %vm148, %v3340
  %3390 = vst.msk [vmem:[%s3350 + $0x2f1] sm:$0xff] %vm148, %v3341
  %3391 = vst.msk [vmem:[%s3350 + $0x321] sm:$0xff] %vm148, %v3342
  %3392 = vst.msk [vmem:[%s3350 + $0x331] sm:$0xff] %vm148, %v3343
  %3393 = vst.msk [vmem:[%s3350 + $0x341] sm:$0xff] %vm148, %v3344
  %3394 = vst.msk [vmem:[%s3350 + $0x351] sm:$0xff] %vm148, %v3345
  %3395 = vst.msk [vmem:[%s3350 + $0x361] sm:$0xff] %vm148, %v3346
  %3396 = vst.msk [vmem:[%s3350 + $0x371] sm:$0xff] %vm148, %v3347
  %3397 = vst.msk [vmem:[%s3350 + $0x381] sm:$0xff] %vm148, %v3348
  %3398 = vst.msk [vmem:[%s3350 + $0x391] sm:$0xff] %vm148, %v3349
  %v3399 = vld [vmem:[#allocation3] sm:$0xff]
  %v3400 = vld [vmem:[#allocation3 + $0x10] sm:$0xff]
  %v3401 = vld [vmem:[#allocation3 + $0x20] sm:$0xff]
  %v3402 = vld [vmem:[#allocation3 + $0x30] sm:$0xff]
  %v3403 = vld [vmem:[#allocation3 + $0x40] sm:$0xff]
  %v3404 = vld [vmem:[#allocation3 + $0x50] sm:$0xff]
  %v3405 = vld [vmem:[#allocation3 + $0x60] sm:$0xff]
  %v3406 = vld [vmem:[#allocation3 + $0x70] sm:$0xff]
  %v3407 = vld [vmem:[#allocation3 + $0xa0] sm:$0xff]
  %v3408 = vld [vmem:[#allocation3 + $0xb0] sm:$0xff]
  %v3409 = vld [vmem:[#allocation3 + $0xc0] sm:$0xff]
  %v3410 = vld [vmem:[#allocation3 + $0xd0] sm:$0xff]
  %v3411 = vld [vmem:[#allocation3 + $0xe0] sm:$0xff]
  %v3412 = vld [vmem:[#allocation3 + $0xf0] sm:$0xff]
  %v3413 = vld [vmem:[#allocation3 + $0x100] sm:$0xff]
  %v3414 = vld [vmem:[#allocation3 + $0x110] sm:$0xff]
  %v3415 = vld [vmem:[#allocation3 + $0x140] sm:$0xff]
  %v3416 = vld [vmem:[#allocation3 + $0x150] sm:$0xff]
  %v3417 = vld [vmem:[#allocation3 + $0x160] sm:$0xff]
  %v3418 = vld [vmem:[#allocation3 + $0x170] sm:$0xff]
  %v3419 = vld [vmem:[#allocation3 + $0x180] sm:$0xff]
  %v3420 = vld [vmem:[#allocation3 + $0x190] sm:$0xff]
  %v3421 = vld [vmem:[#allocation3 + $0x1a0] sm:$0xff]
  %v3422 = vld [vmem:[#allocation3 + $0x1b0] sm:$0xff]
  %v3423 = vld [vmem:[#allocation3 + $0x1e0] sm:$0xff]
  %v3424 = vld [vmem:[#allocation3 + $0x1f0] sm:$0xff]
  %v3425 = vld [vmem:[#allocation3 + $0x200] sm:$0xff]
  %v3426 = vld [vmem:[#allocation3 + $0x210] sm:$0xff]
  %v3427 = vld [vmem:[#allocation3 + $0x220] sm:$0xff]
  %v3428 = vld [vmem:[#allocation3 + $0x230] sm:$0xff]
  %v3429 = vld [vmem:[#allocation3 + $0x240] sm:$0xff]
  %v3430 = vld [vmem:[#allocation3 + $0x250] sm:$0xff]
  %v3431 = vld [vmem:[#allocation3 + $0x280] sm:$0xff]
  %v3432 = vld [vmem:[#allocation3 + $0x290] sm:$0xff]
  %v3433 = vld [vmem:[#allocation3 + $0x2a0] sm:$0xff]
  %v3434 = vld [vmem:[#allocation3 + $0x2b0] sm:$0xff]
  %v3435 = vld [vmem:[#allocation3 + $0x2c0] sm:$0xff]
  %v3436 = vld [vmem:[#allocation3 + $0x2d0] sm:$0xff]
  %v3437 = vld [vmem:[#allocation3 + $0x2e0] sm:$0xff]
  %v3438 = vld [vmem:[#allocation3 + $0x2f0] sm:$0xff]
  %v3439 = vld [vmem:[#allocation3 + $0x320] sm:$0xff]
  %v3440 = vld [vmem:[#allocation3 + $0x330] sm:$0xff]
  %v3441 = vld [vmem:[#allocation3 + $0x340] sm:$0xff]
  %v3442 = vld [vmem:[#allocation3 + $0x350] sm:$0xff]
  %v3443 = vld [vmem:[#allocation3 + $0x360] sm:$0xff]
  %v3444 = vld [vmem:[#allocation3 + $0x370] sm:$0xff]
  %v3445 = vld [vmem:[#allocation3 + $0x380] sm:$0xff]
  %v3446 = vld [vmem:[#allocation3 + $0x390] sm:$0xff]
  %v3447 = vld [vmem:[#allocation3 + $0x1] sm:$0xff]
  %v3448 = vld [vmem:[#allocation3 + $0x11] sm:$0xff]
  %v3449 = vld [vmem:[#allocation3 + $0x21] sm:$0xff]
  %v3450 = vld [vmem:[#allocation3 + $0x31] sm:$0xff]
  %v3451 = vld [vmem:[#allocation3 + $0x41] sm:$0xff]
  %v3452 = vld [vmem:[#allocation3 + $0x51] sm:$0xff]
  %v3453 = vld [vmem:[#allocation3 + $0x61] sm:$0xff]
  %v3454 = vld [vmem:[#allocation3 + $0x71] sm:$0xff]
  %v3455 = vld [vmem:[#allocation3 + $0xa1] sm:$0xff]
  %v3456 = vld [vmem:[#allocation3 + $0xb1] sm:$0xff]
  %v3457 = vld [vmem:[#allocation3 + $0xc1] sm:$0xff]
  %v3458 = vld [vmem:[#allocation3 + $0xd1] sm:$0xff]
  %v3459 = vld [vmem:[#allocation3 + $0xe1] sm:$0xff]
  %v3460 = vld [vmem:[#allocation3 + $0xf1] sm:$0xff]
  %v3461 = vld [vmem:[#allocation3 + $0x101] sm:$0xff]
  %v3462 = vld [vmem:[#allocation3 + $0x111] sm:$0xff]
  %v3463 = vld [vmem:[#allocation3 + $0x141] sm:$0xff]
  %v3464 = vld [vmem:[#allocation3 + $0x151] sm:$0xff]
  %v3465 = vld [vmem:[#allocation3 + $0x161] sm:$0xff]
  %v3466 = vld [vmem:[#allocation3 + $0x171] sm:$0xff]
  %v3467 = vld [vmem:[#allocation3 + $0x181] sm:$0xff]
  %v3468 = vld [vmem:[#allocation3 + $0x191] sm:$0xff]
  %v3469 = vld [vmem:[#allocation3 + $0x1a1] sm:$0xff]
  %v3470 = vld [vmem:[#allocation3 + $0x1b1] sm:$0xff]
  %v3471 = vld [vmem:[#allocation3 + $0x1e1] sm:$0xff]
  %v3472 = vld [vmem:[#allocation3 + $0x1f1] sm:$0xff]
  %v3473 = vld [vmem:[#allocation3 + $0x201] sm:$0xff]
  %v3474 = vld [vmem:[#allocation3 + $0x211] sm:$0xff]
  %v3475 = vld [vmem:[#allocation3 + $0x221] sm:$0xff]
  %v3476 = vld [vmem:[#allocation3 + $0x231] sm:$0xff]
  %v3477 = vld [vmem:[#allocation3 + $0x241] sm:$0xff]
  %v3478 = vld [vmem:[#allocation3 + $0x251] sm:$0xff]
  %v3479 = vld [vmem:[#allocation3 + $0x281] sm:$0xff]
  %v3480 = vld [vmem:[#allocation3 + $0x291] sm:$0xff]
  %v3481 = vld [vmem:[#allocation3 + $0x2a1] sm:$0xff]
  %v3482 = vld [vmem:[#allocation3 + $0x2b1] sm:$0xff]
  %v3483 = vld [vmem:[#allocation3 + $0x2c1] sm:$0xff]
  %v3484 = vld [vmem:[#allocation3 + $0x2d1] sm:$0xff]
  %v3485 = vld [vmem:[#allocation3 + $0x2e1] sm:$0xff]
  %v3486 = vld [vmem:[#allocation3 + $0x2f1] sm:$0xff]
  %v3487 = vld [vmem:[#allocation3 + $0x321] sm:$0xff]
  %v3488 = vld [vmem:[#allocation3 + $0x331] sm:$0xff]
  %v3489 = vld [vmem:[#allocation3 + $0x341] sm:$0xff]
  %v3490 = vld [vmem:[#allocation3 + $0x351] sm:$0xff]
  %v3491 = vld [vmem:[#allocation3 + $0x361] sm:$0xff]
  %v3492 = vld [vmem:[#allocation3 + $0x371] sm:$0xff]
  %v3493 = vld [vmem:[#allocation3 + $0x381] sm:$0xff]
  %v3494 = vld [vmem:[#allocation3 + $0x391] sm:$0xff]
  %v3495 = vld [vmem:[#allocation3 + $0x2] sm:$0xff]
  %v3496 = vld [vmem:[#allocation3 + $0x12] sm:$0xff]
  %v3497 = vld [vmem:[#allocation3 + $0x22] sm:$0xff]
  %v3498 = vld [vmem:[#allocation3 + $0x32] sm:$0xff]
  %v3499 = vld [vmem:[#allocation3 + $0x42] sm:$0xff]
  %v3500 = vld [vmem:[#allocation3 + $0x52] sm:$0xff]
  %v3501 = vld [vmem:[#allocation3 + $0x62] sm:$0xff]
  %v3502 = vld [vmem:[#allocation3 + $0x72] sm:$0xff]
  %v3503 = vld [vmem:[#allocation3 + $0xa2] sm:$0xff]
  %v3504 = vld [vmem:[#allocation3 + $0xb2] sm:$0xff]
  %v3505 = vld [vmem:[#allocation3 + $0xc2] sm:$0xff]
  %v3506 = vld [vmem:[#allocation3 + $0xd2] sm:$0xff]
  %v3507 = vld [vmem:[#allocation3 + $0xe2] sm:$0xff]
  %v3508 = vld [vmem:[#allocation3 + $0xf2] sm:$0xff]
  %v3509 = vld [vmem:[#allocation3 + $0x102] sm:$0xff]
  %v3510 = vld [vmem:[#allocation3 + $0x112] sm:$0xff]
  %v3511 = vld [vmem:[#allocation3 + $0x142] sm:$0xff]
  %v3512 = vld [vmem:[#allocation3 + $0x152] sm:$0xff]
  %v3513 = vld [vmem:[#allocation3 + $0x162] sm:$0xff]
  %v3514 = vld [vmem:[#allocation3 + $0x172] sm:$0xff]
  %v3515 = vld [vmem:[#allocation3 + $0x182] sm:$0xff]
  %v3516 = vld [vmem:[#allocation3 + $0x192] sm:$0xff]
  %v3517 = vld [vmem:[#allocation3 + $0x1a2] sm:$0xff]
  %v3518 = vld [vmem:[#allocation3 + $0x1b2] sm:$0xff]
  %v3519 = vld [vmem:[#allocation3 + $0x1e2] sm:$0xff]
  %v3520 = vld [vmem:[#allocation3 + $0x1f2] sm:$0xff]
  %v3521 = vld [vmem:[#allocation3 + $0x202] sm:$0xff]
  %v3522 = vld [vmem:[#allocation3 + $0x212] sm:$0xff]
  %v3523 = vld [vmem:[#allocation3 + $0x222] sm:$0xff]
  %v3524 = vld [vmem:[#allocation3 + $0x232] sm:$0xff]
  %v3525 = vld [vmem:[#allocation3 + $0x242] sm:$0xff]
  %v3526 = vld [vmem:[#allocation3 + $0x252] sm:$0xff]
  %v3527 = vld [vmem:[#allocation3 + $0x282] sm:$0xff]
  %v3528 = vld [vmem:[#allocation3 + $0x292] sm:$0xff]
  %v3529 = vld [vmem:[#allocation3 + $0x2a2] sm:$0xff]
  %v3530 = vld [vmem:[#allocation3 + $0x2b2] sm:$0xff]
  %v3531 = vld [vmem:[#allocation3 + $0x2c2] sm:$0xff]
  %v3532 = vld [vmem:[#allocation3 + $0x2d2] sm:$0xff]
  %v3533 = vld [vmem:[#allocation3 + $0x2e2] sm:$0xff]
  %v3534 = vld [vmem:[#allocation3 + $0x2f2] sm:$0xff]
  %v3535 = vld [vmem:[#allocation3 + $0x322] sm:$0xff]
  %v3536 = vld [vmem:[#allocation3 + $0x332] sm:$0xff]
  %v3537 = vld [vmem:[#allocation3 + $0x342] sm:$0xff]
  %v3538 = vld [vmem:[#allocation3 + $0x352] sm:$0xff]
  %v3539 = vld [vmem:[#allocation3 + $0x362] sm:$0xff]
  %v3540 = vld [vmem:[#allocation3 + $0x372] sm:$0xff]
  %v3541 = vld [vmem:[#allocation3 + $0x382] sm:$0xff]
  %v3542 = vld [vmem:[#allocation3 + $0x392] sm:$0xff]
  %v3543 = vld [vmem:[%s3350] sm:$0xff]
  %v3544 = vld [vmem:[%s3350 + $0x10] sm:$0xff]
  %v3545 = vld [vmem:[%s3350 + $0x20] sm:$0xff]
  %v3546 = vld [vmem:[%s3350 + $0x30] sm:$0xff]
  %v3547 = vld [vmem:[%s3350 + $0x40] sm:$0xff]
  %v3548 = vld [vmem:[%s3350 + $0x50] sm:$0xff]
  %v3549 = vld [vmem:[%s3350 + $0x60] sm:$0xff]
  %v3550 = vld [vmem:[%s3350 + $0x70] sm:$0xff]
  %v3551 = vld [vmem:[%s3350 + $0xa0] sm:$0xff]
  %v3552 = vld [vmem:[%s3350 + $0xb0] sm:$0xff]
  %v3553 = vld [vmem:[%s3350 + $0xc0] sm:$0xff]
  %v3554 = vld [vmem:[%s3350 + $0xd0] sm:$0xff]
  %v3555 = vld [vmem:[%s3350 + $0xe0] sm:$0xff]
  %v3556 = vld [vmem:[%s3350 + $0xf0] sm:$0xff]
  %v3557 = vld [vmem:[%s3350 + $0x100] sm:$0xff]
  %v3558 = vld [vmem:[%s3350 + $0x110] sm:$0xff]
  %v3559 = vld [vmem:[%s3350 + $0x140] sm:$0xff]
  %v3560 = vld [vmem:[%s3350 + $0x150] sm:$0xff]
  %v3561 = vld [vmem:[%s3350 + $0x160] sm:$0xff]
  %v3562 = vld [vmem:[%s3350 + $0x170] sm:$0xff]
  %v3563 = vld [vmem:[%s3350 + $0x180] sm:$0xff]
  %v3564 = vld [vmem:[%s3350 + $0x190] sm:$0xff]
  %v3565 = vld [vmem:[%s3350 + $0x1a0] sm:$0xff]
  %v3566 = vld [vmem:[%s3350 + $0x1b0] sm:$0xff]
  %v3567 = vld [vmem:[%s3350 + $0x1e0] sm:$0xff]
  %v3568 = vld [vmem:[%s3350 + $0x1f0] sm:$0xff]
  %v3569 = vld [vmem:[%s3350 + $0x200] sm:$0xff]
  %v3570 = vld [vmem:[%s3350 + $0x210] sm:$0xff]
  %v3571 = vld [vmem:[%s3350 + $0x220] sm:$0xff]
  %v3572 = vld [vmem:[%s3350 + $0x230] sm:$0xff]
  %v3573 = vld [vmem:[%s3350 + $0x240] sm:$0xff]
  %v3574 = vld [vmem:[%s3350 + $0x250] sm:$0xff]
  %v3575 = vld [vmem:[%s3350 + $0x280] sm:$0xff]
  %v3576 = vld [vmem:[%s3350 + $0x290] sm:$0xff]
  %v3577 = vld [vmem:[%s3350 + $0x2a0] sm:$0xff]
  %v3578 = vld [vmem:[%s3350 + $0x2b0] sm:$0xff]
  %v3579 = vld [vmem:[%s3350 + $0x2c0] sm:$0xff]
  %v3580 = vld [vmem:[%s3350 + $0x2d0] sm:$0xff]
  %v3581 = vld [vmem:[%s3350 + $0x2e0] sm:$0xff]
  %v3582 = vld [vmem:[%s3350 + $0x2f0] sm:$0xff]
  %v3583 = vld [vmem:[%s3350 + $0x320] sm:$0xff]
  %v3584 = vld [vmem:[%s3350 + $0x330] sm:$0xff]
  %v3585 = vld [vmem:[%s3350 + $0x340] sm:$0xff]
  %v3586 = vld [vmem:[%s3350 + $0x350] sm:$0xff]
  %v3587 = vld [vmem:[%s3350 + $0x360] sm:$0xff]
  %v3588 = vld [vmem:[%s3350 + $0x370] sm:$0xff]
  %v3589 = vld [vmem:[%s3350 + $0x380] sm:$0xff]
  %v3590 = vld [vmem:[%s3350 + $0x390] sm:$0xff]
  %v3591 = vld [vmem:[%s3350 + $0x1] sm:$0xff]
  %v3592 = vld [vmem:[%s3350 + $0x11] sm:$0xff]
  %v3593 = vld [vmem:[%s3350 + $0x21] sm:$0xff]
  %v3594 = vld [vmem:[%s3350 + $0x31] sm:$0xff]
  %v3595 = vld [vmem:[%s3350 + $0x41] sm:$0xff]
  %v3596 = vld [vmem:[%s3350 + $0x51] sm:$0xff]
  %v3597 = vld [vmem:[%s3350 + $0x61] sm:$0xff]
  %v3598 = vld [vmem:[%s3350 + $0x71] sm:$0xff]
  %v3599 = vld [vmem:[%s3350 + $0xa1] sm:$0xff]
  %v3600 = vld [vmem:[%s3350 + $0xb1] sm:$0xff]
  %v3601 = vld [vmem:[%s3350 + $0xc1] sm:$0xff]
  %v3602 = vld [vmem:[%s3350 + $0xd1] sm:$0xff]
  %v3603 = vld [vmem:[%s3350 + $0xe1] sm:$0xff]
  %v3604 = vld [vmem:[%s3350 + $0xf1] sm:$0xff]
  %v3605 = vld [vmem:[%s3350 + $0x101] sm:$0xff]
  %v3606 = vld [vmem:[%s3350 + $0x111] sm:$0xff]
  %v3607 = vld [vmem:[%s3350 + $0x141] sm:$0xff]
  %v3608 = vld [vmem:[%s3350 + $0x151] sm:$0xff]
  %v3609 = vld [vmem:[%s3350 + $0x161] sm:$0xff]
  %v3610 = vld [vmem:[%s3350 + $0x171] sm:$0xff]
  %v3611 = vld [vmem:[%s3350 + $0x181] sm:$0xff]
  %v3612 = vld [vmem:[%s3350 + $0x191] sm:$0xff]
  %v3613 = vld [vmem:[%s3350 + $0x1a1] sm:$0xff]
  %v3614 = vld [vmem:[%s3350 + $0x1b1] sm:$0xff]
  %v3615 = vld [vmem:[%s3350 + $0x1e1] sm:$0xff]
  %v3616 = vld [vmem:[%s3350 + $0x1f1] sm:$0xff]
  %v3617 = vld [vmem:[%s3350 + $0x201] sm:$0xff]
  %v3618 = vld [vmem:[%s3350 + $0x211] sm:$0xff]
  %v3619 = vld [vmem:[%s3350 + $0x221] sm:$0xff]
  %v3620 = vld [vmem:[%s3350 + $0x231] sm:$0xff]
  %v3621 = vld [vmem:[%s3350 + $0x241] sm:$0xff]
  %v3622 = vld [vmem:[%s3350 + $0x251] sm:$0xff]
  %v3623 = vld [vmem:[%s3350 + $0x281] sm:$0xff]
  %v3624 = vld [vmem:[%s3350 + $0x291] sm:$0xff]
  %v3625 = vld [vmem:[%s3350 + $0x2a1] sm:$0xff]
  %v3626 = vld [vmem:[%s3350 + $0x2b1] sm:$0xff]
  %v3627 = vld [vmem:[%s3350 + $0x2c1] sm:$0xff]
  %v3628 = vld [vmem:[%s3350 + $0x2d1] sm:$0xff]
  %v3629 = vld [vmem:[%s3350 + $0x2e1] sm:$0xff]
  %v3630 = vld [vmem:[%s3350 + $0x2f1] sm:$0xff]
  %v3631 = vld [vmem:[%s3350 + $0x321] sm:$0xff]
  %v3632 = vld [vmem:[%s3350 + $0x331] sm:$0xff]
  %v3633 = vld [vmem:[%s3350 + $0x341] sm:$0xff]
  %v3634 = vld [vmem:[%s3350 + $0x351] sm:$0xff]
  %v3635 = vld [vmem:[%s3350 + $0x361] sm:$0xff]
  %v3636 = vld [vmem:[%s3350 + $0x371] sm:$0xff]
  %v3637 = vld [vmem:[%s3350 + $0x381] sm:$0xff]
  %v3638 = vld [vmem:[%s3350 + $0x391] sm:$0xff]
  %v3639 = vld [vmem:[%s3350 + $0x2] sm:$0xff]
  %v3640 = vld [vmem:[%s3350 + $0x12] sm:$0xff]
  %v3641 = vld [vmem:[%s3350 + $0x22] sm:$0xff]
  %v3642 = vld [vmem:[%s3350 + $0x32] sm:$0xff]
  %v3643 = vld [vmem:[%s3350 + $0x42] sm:$0xff]
  %v3644 = vld [vmem:[%s3350 + $0x52] sm:$0xff]
  %v3645 = vld [vmem:[%s3350 + $0x62] sm:$0xff]
  %v3646 = vld [vmem:[%s3350 + $0x72] sm:$0xff]
  %v3647 = vld [vmem:[%s3350 + $0xa2] sm:$0xff]
  %v3648 = vld [vmem:[%s3350 + $0xb2] sm:$0xff]
  %v3649 = vld [vmem:[%s3350 + $0xc2] sm:$0xff]
  %v3650 = vld [vmem:[%s3350 + $0xd2] sm:$0xff]
  %v3651 = vld [vmem:[%s3350 + $0xe2] sm:$0xff]
  %v3652 = vld [vmem:[%s3350 + $0xf2] sm:$0xff]
  %v3653 = vld [vmem:[%s3350 + $0x102] sm:$0xff]
  %v3654 = vld [vmem:[%s3350 + $0x112] sm:$0xff]
  %v3655 = vld [vmem:[%s3350 + $0x142] sm:$0xff]
  %v3656 = vld [vmem:[%s3350 + $0x152] sm:$0xff]
  %v3657 = vld [vmem:[%s3350 + $0x162] sm:$0xff]
  %v3658 = vld [vmem:[%s3350 + $0x172] sm:$0xff]
  %v3659 = vld [vmem:[%s3350 + $0x182] sm:$0xff]
  %v3660 = vld [vmem:[%s3350 + $0x192] sm:$0xff]
  %v3661 = vld [vmem:[%s3350 + $0x1a2] sm:$0xff]
  %v3662 = vld [vmem:[%s3350 + $0x1b2] sm:$0xff]
  %v3663 = vld [vmem:[%s3350 + $0x1e2] sm:$0xff]
  %v3664 = vld [vmem:[%s3350 + $0x1f2] sm:$0xff]
  %v3665 = vld [vmem:[%s3350 + $0x202] sm:$0xff]
  %v3666 = vld [vmem:[%s3350 + $0x212] sm:$0xff]
  %v3667 = vld [vmem:[%s3350 + $0x222] sm:$0xff]
  %v3668 = vld [vmem:[%s3350 + $0x232] sm:$0xff]
  %v3669 = vld [vmem:[%s3350 + $0x242] sm:$0xff]
  %v3670 = vld [vmem:[%s3350 + $0x252] sm:$0xff]
  %v3671 = vld [vmem:[%s3350 + $0x282] sm:$0xff]
  %v3672 = vld [vmem:[%s3350 + $0x292] sm:$0xff]
  %v3673 = vld [vmem:[%s3350 + $0x2a2] sm:$0xff]
  %v3674 = vld [vmem:[%s3350 + $0x2b2] sm:$0xff]
  %v3675 = vld [vmem:[%s3350 + $0x2c2] sm:$0xff]
  %v3676 = vld [vmem:[%s3350 + $0x2d2] sm:$0xff]
  %v3677 = vld [vmem:[%s3350 + $0x2e2] sm:$0xff]
  %v3678 = vld [vmem:[%s3350 + $0x2f2] sm:$0xff]
  %v3679 = vld [vmem:[%s3350 + $0x322] sm:$0xff]
  %v3680 = vld [vmem:[%s3350 + $0x332] sm:$0xff]
  %v3681 = vld [vmem:[%s3350 + $0x342] sm:$0xff]
  %v3682 = vld [vmem:[%s3350 + $0x352] sm:$0xff]
  %v3683 = vld [vmem:[%s3350 + $0x362] sm:$0xff]
  %v3684 = vld [vmem:[%s3350 + $0x372] sm:$0xff]
  %v3685 = vld [vmem:[%s3350 + $0x382] sm:$0xff]
  %v3686 = vld [vmem:[%s3350 + $0x392] sm:$0xff]
  %s3687 = scalar_lea.vmem [#allocation3], 32
  %v3688 = vld [vmem:[%s3687] sm:$0xff]
  %v3689 = vld [vmem:[%s3687 + $0x10] sm:$0xff]
  %v3690 = vld [vmem:[%s3687 + $0x20] sm:$0xff]
  %v3691 = vld [vmem:[%s3687 + $0x30] sm:$0xff]
  %v3692 = vld [vmem:[%s3687 + $0x40] sm:$0xff]
  %v3693 = vld [vmem:[%s3687 + $0x50] sm:$0xff]
  %v3694 = vld [vmem:[%s3687 + $0x60] sm:$0xff]
  %v3695 = vld [vmem:[%s3687 + $0x70] sm:$0xff]
  %v3696 = vld [vmem:[%s3687 + $0xa0] sm:$0xff]
  %v3697 = vld [vmem:[%s3687 + $0xb0] sm:$0xff]
  %v3698 = vld [vmem:[%s3687 + $0xc0] sm:$0xff]
  %v3699 = vld [vmem:[%s3687 + $0xd0] sm:$0xff]
  %v3700 = vld [vmem:[%s3687 + $0xe0] sm:$0xff]
  %v3701 = vld [vmem:[%s3687 + $0xf0] sm:$0xff]
  %v3702 = vld [vmem:[%s3687 + $0x100] sm:$0xff]
  %v3703 = vld [vmem:[%s3687 + $0x110] sm:$0xff]
  %v3704 = vld [vmem:[%s3687 + $0x140] sm:$0xff]
  %v3705 = vld [vmem:[%s3687 + $0x150] sm:$0xff]
  %v3706 = vld [vmem:[%s3687 + $0x160] sm:$0xff]
  %v3707 = vld [vmem:[%s3687 + $0x170] sm:$0xff]
  %v3708 = vld [vmem:[%s3687 + $0x180] sm:$0xff]
  %v3709 = vld [vmem:[%s3687 + $0x190] sm:$0xff]
  %v3710 = vld [vmem:[%s3687 + $0x1a0] sm:$0xff]
  %v3711 = vld [vmem:[%s3687 + $0x1b0] sm:$0xff]
  %v3712 = vld [vmem:[%s3687 + $0x1e0] sm:$0xff]
  %v3713 = vld [vmem:[%s3687 + $0x1f0] sm:$0xff]
  %v3714 = vld [vmem:[%s3687 + $0x200] sm:$0xff]
  %v3715 = vld [vmem:[%s3687 + $0x210] sm:$0xff]
  %v3716 = vld [vmem:[%s3687 + $0x220] sm:$0xff]
  %v3717 = vld [vmem:[%s3687 + $0x230] sm:$0xff]
  %v3718 = vld [vmem:[%s3687 + $0x240] sm:$0xff]
  %v3719 = vld [vmem:[%s3687 + $0x250] sm:$0xff]
  %v3720 = vld [vmem:[%s3687 + $0x280] sm:$0xff]
  %v3721 = vld [vmem:[%s3687 + $0x290] sm:$0xff]
  %v3722 = vld [vmem:[%s3687 + $0x2a0] sm:$0xff]
  %v3723 = vld [vmem:[%s3687 + $0x2b0] sm:$0xff]
  %v3724 = vld [vmem:[%s3687 + $0x2c0] sm:$0xff]
  %v3725 = vld [vmem:[%s3687 + $0x2d0] sm:$0xff]
  %v3726 = vld [vmem:[%s3687 + $0x2e0] sm:$0xff]
  %v3727 = vld [vmem:[%s3687 + $0x2f0] sm:$0xff]
  %v3728 = vld [vmem:[%s3687 + $0x320] sm:$0xff]
  %v3729 = vld [vmem:[%s3687 + $0x330] sm:$0xff]
  %v3730 = vld [vmem:[%s3687 + $0x340] sm:$0xff]
  %v3731 = vld [vmem:[%s3687 + $0x350] sm:$0xff]
  %v3732 = vld [vmem:[%s3687 + $0x360] sm:$0xff]
  %v3733 = vld [vmem:[%s3687 + $0x370] sm:$0xff]
  %v3734 = vld [vmem:[%s3687 + $0x380] sm:$0xff]
  %v3735 = vld [vmem:[%s3687 + $0x390] sm:$0xff]
  %v3736 = vld [vmem:[%s3687 + $0x1] sm:$0xff]
  %v3737 = vld [vmem:[%s3687 + $0x11] sm:$0xff]
  %v3738 = vld [vmem:[%s3687 + $0x21] sm:$0xff]
  %v3739 = vld [vmem:[%s3687 + $0x31] sm:$0xff]
  %v3740 = vld [vmem:[%s3687 + $0x41] sm:$0xff]
  %v3741 = vld [vmem:[%s3687 + $0x51] sm:$0xff]
  %v3742 = vld [vmem:[%s3687 + $0x61] sm:$0xff]
  %v3743 = vld [vmem:[%s3687 + $0x71] sm:$0xff]
  %v3744 = vld [vmem:[%s3687 + $0xa1] sm:$0xff]
  %v3745 = vld [vmem:[%s3687 + $0xb1] sm:$0xff]
  %v3746 = vld [vmem:[%s3687 + $0xc1] sm:$0xff]
  %v3747 = vld [vmem:[%s3687 + $0xd1] sm:$0xff]
  %v3748 = vld [vmem:[%s3687 + $0xe1] sm:$0xff]
  %v3749 = vld [vmem:[%s3687 + $0xf1] sm:$0xff]
  %v3750 = vld [vmem:[%s3687 + $0x101] sm:$0xff]
  %v3751 = vld [vmem:[%s3687 + $0x111] sm:$0xff]
  %v3752 = vld [vmem:[%s3687 + $0x141] sm:$0xff]
  %v3753 = vld [vmem:[%s3687 + $0x151] sm:$0xff]
  %v3754 = vld [vmem:[%s3687 + $0x161] sm:$0xff]
  %v3755 = vld [vmem:[%s3687 + $0x171] sm:$0xff]
  %v3756 = vld [vmem:[%s3687 + $0x181] sm:$0xff]
  %v3757 = vld [vmem:[%s3687 + $0x191] sm:$0xff]
  %v3758 = vld [vmem:[%s3687 + $0x1a1] sm:$0xff]
  %v3759 = vld [vmem:[%s3687 + $0x1b1] sm:$0xff]
  %v3760 = vld [vmem:[%s3687 + $0x1e1] sm:$0xff]
  %v3761 = vld [vmem:[%s3687 + $0x1f1] sm:$0xff]
  %v3762 = vld [vmem:[%s3687 + $0x201] sm:$0xff]
  %v3763 = vld [vmem:[%s3687 + $0x211] sm:$0xff]
  %v3764 = vld [vmem:[%s3687 + $0x221] sm:$0xff]
  %v3765 = vld [vmem:[%s3687 + $0x231] sm:$0xff]
  %v3766 = vld [vmem:[%s3687 + $0x241] sm:$0xff]
  %v3767 = vld [vmem:[%s3687 + $0x251] sm:$0xff]
  %v3768 = vld [vmem:[%s3687 + $0x281] sm:$0xff]
  %v3769 = vld [vmem:[%s3687 + $0x291] sm:$0xff]
  %v3770 = vld [vmem:[%s3687 + $0x2a1] sm:$0xff]
  %v3771 = vld [vmem:[%s3687 + $0x2b1] sm:$0xff]
  %v3772 = vld [vmem:[%s3687 + $0x2c1] sm:$0xff]
  %v3773 = vld [vmem:[%s3687 + $0x2d1] sm:$0xff]
  %v3774 = vld [vmem:[%s3687 + $0x2e1] sm:$0xff]
  %v3775 = vld [vmem:[%s3687 + $0x2f1] sm:$0xff]
  %v3776 = vld [vmem:[%s3687 + $0x321] sm:$0xff]
  %v3777 = vld [vmem:[%s3687 + $0x331] sm:$0xff]
  %v3778 = vld [vmem:[%s3687 + $0x341] sm:$0xff]
  %v3779 = vld [vmem:[%s3687 + $0x351] sm:$0xff]
  %v3780 = vld [vmem:[%s3687 + $0x361] sm:$0xff]
  %v3781 = vld [vmem:[%s3687 + $0x371] sm:$0xff]
  %v3782 = vld [vmem:[%s3687 + $0x381] sm:$0xff]
  %v3783 = vld [vmem:[%s3687 + $0x391] sm:$0xff]
  %v3784 = vld [vmem:[%s3687 + $0x2] sm:$0xff]
  %v3785 = vld [vmem:[%s3687 + $0x12] sm:$0xff]
  %v3786 = vld [vmem:[%s3687 + $0x22] sm:$0xff]
  %v3787 = vld [vmem:[%s3687 + $0x32] sm:$0xff]
  %v3788 = vld [vmem:[%s3687 + $0x42] sm:$0xff]
  %v3789 = vld [vmem:[%s3687 + $0x52] sm:$0xff]
  %v3790 = vld [vmem:[%s3687 + $0x62] sm:$0xff]
  %v3791 = vld [vmem:[%s3687 + $0x72] sm:$0xff]
  %v3792 = vld [vmem:[%s3687 + $0xa2] sm:$0xff]
  %v3793 = vld [vmem:[%s3687 + $0xb2] sm:$0xff]
  %v3794 = vld [vmem:[%s3687 + $0xc2] sm:$0xff]
  %v3795 = vld [vmem:[%s3687 + $0xd2] sm:$0xff]
  %v3796 = vld [vmem:[%s3687 + $0xe2] sm:$0xff]
  %v3797 = vld [vmem:[%s3687 + $0xf2] sm:$0xff]
  %v3798 = vld [vmem:[%s3687 + $0x102] sm:$0xff]
  %v3799 = vld [vmem:[%s3687 + $0x112] sm:$0xff]
  %v3800 = vld [vmem:[%s3687 + $0x142] sm:$0xff]
  %v3801 = vld [vmem:[%s3687 + $0x152] sm:$0xff]
  %v3802 = vld [vmem:[%s3687 + $0x162] sm:$0xff]
  %v3803 = vld [vmem:[%s3687 + $0x172] sm:$0xff]
  %v3804 = vld [vmem:[%s3687 + $0x182] sm:$0xff]
  %v3805 = vld [vmem:[%s3687 + $0x192] sm:$0xff]
  %v3806 = vld [vmem:[%s3687 + $0x1a2] sm:$0xff]
  %v3807 = vld [vmem:[%s3687 + $0x1b2] sm:$0xff]
  %v3808 = vld [vmem:[%s3687 + $0x1e2] sm:$0xff]
  %v3809 = vld [vmem:[%s3687 + $0x1f2] sm:$0xff]
  %v3810 = vld [vmem:[%s3687 + $0x202] sm:$0xff]
  %v3811 = vld [vmem:[%s3687 + $0x212] sm:$0xff]
  %v3812 = vld [vmem:[%s3687 + $0x222] sm:$0xff]
  %v3813 = vld [vmem:[%s3687 + $0x232] sm:$0xff]
  %v3814 = vld [vmem:[%s3687 + $0x242] sm:$0xff]
  %v3815 = vld [vmem:[%s3687 + $0x252] sm:$0xff]
  %v3816 = vld [vmem:[%s3687 + $0x282] sm:$0xff]
  %v3817 = vld [vmem:[%s3687 + $0x292] sm:$0xff]
  %v3818 = vld [vmem:[%s3687 + $0x2a2] sm:$0xff]
  %v3819 = vld [vmem:[%s3687 + $0x2b2] sm:$0xff]
  %v3820 = vld [vmem:[%s3687 + $0x2c2] sm:$0xff]
  %v3821 = vld [vmem:[%s3687 + $0x2d2] sm:$0xff]
  %v3822 = vld [vmem:[%s3687 + $0x2e2] sm:$0xff]
  %v3823 = vld [vmem:[%s3687 + $0x2f2] sm:$0xff]
  %v3824 = vld [vmem:[%s3687 + $0x322] sm:$0xff]
  %v3825 = vld [vmem:[%s3687 + $0x332] sm:$0xff]
  %v3826 = vld [vmem:[%s3687 + $0x342] sm:$0xff]
  %v3827 = vld [vmem:[%s3687 + $0x352] sm:$0xff]
  %v3828 = vld [vmem:[%s3687 + $0x362] sm:$0xff]
  %v3829 = vld [vmem:[%s3687 + $0x372] sm:$0xff]
  %v3830 = vld [vmem:[%s3687 + $0x382] sm:$0xff]
  %v3831 = vld [vmem:[%s3687 + $0x392] sm:$0xff]
  %3880 = vrot.lane.b32.xlu0 %v3447, 16
  %v3881 = vpop.permute.xlu0 %3880
  %3882 = vrot.lane.b32.xlu0 %v3448, 16
  %v3883 = vpop.permute.xlu0 %3882
  %3884 = vrot.lane.b32.xlu0 %v3449, 16
  %v3885 = vpop.permute.xlu0 %3884
  %3886 = vrot.lane.b32.xlu0 %v3450, 16
  %v3887 = vpop.permute.xlu0 %3886
  %3888 = vrot.lane.b32.xlu0 %v3451, 16
  %v3889 = vpop.permute.xlu0 %3888
  %3890 = vrot.lane.b32.xlu0 %v3452, 16
  %v3891 = vpop.permute.xlu0 %3890
  %3892 = vrot.lane.b32.xlu0 %v3453, 16
  %v3893 = vpop.permute.xlu0 %3892
  %3894 = vrot.lane.b32.xlu0 %v3454, 16
  %v3895 = vpop.permute.xlu0 %3894
  %3896 = vrot.lane.b32.xlu0 %v3455, 16
  %v3897 = vpop.permute.xlu0 %3896
  %3898 = vrot.lane.b32.xlu0 %v3456, 16
  %v3899 = vpop.permute.xlu0 %3898
  %3900 = vrot.lane.b32.xlu0 %v3457, 16
  %v3901 = vpop.permute.xlu0 %3900
  %3902 = vrot.lane.b32.xlu0 %v3458, 16
  %v3903 = vpop.permute.xlu0 %3902
  %3904 = vrot.lane.b32.xlu0 %v3459, 16
  %v3905 = vpop.permute.xlu0 %3904
  %3906 = vrot.lane.b32.xlu0 %v3460, 16
  %v3907 = vpop.permute.xlu0 %3906
  %3908 = vrot.lane.b32.xlu0 %v3461, 16
  %v3909 = vpop.permute.xlu0 %3908
  %3910 = vrot.lane.b32.xlu0 %v3462, 16
  %v3911 = vpop.permute.xlu0 %3910
  %3912 = vrot.lane.b32.xlu0 %v3463, 16
  %v3913 = vpop.permute.xlu0 %3912
  %3914 = vrot.lane.b32.xlu0 %v3464, 16
  %v3915 = vpop.permute.xlu0 %3914
  %3916 = vrot.lane.b32.xlu0 %v3465, 16
  %v3917 = vpop.permute.xlu0 %3916
  %3918 = vrot.lane.b32.xlu0 %v3466, 16
  %v3919 = vpop.permute.xlu0 %3918
  %3920 = vrot.lane.b32.xlu0 %v3467, 16
  %v3921 = vpop.permute.xlu0 %3920
  %3922 = vrot.lane.b32.xlu0 %v3468, 16
  %v3923 = vpop.permute.xlu0 %3922
  %3924 = vrot.lane.b32.xlu0 %v3469, 16
  %v3925 = vpop.permute.xlu0 %3924
  %3926 = vrot.lane.b32.xlu0 %v3470, 16
  %v3927 = vpop.permute.xlu0 %3926
  %3928 = vrot.lane.b32.xlu0 %v3471, 16
  %v3929 = vpop.permute.xlu0 %3928
  %3930 = vrot.lane.b32.xlu0 %v3472, 16
  %v3931 = vpop.permute.xlu0 %3930
  %3932 = vrot.lane.b32.xlu0 %v3473, 16
  %v3933 = vpop.permute.xlu0 %3932
  %3934 = vrot.lane.b32.xlu0 %v3474, 16
  %v3935 = vpop.permute.xlu0 %3934
  %3936 = vrot.lane.b32.xlu0 %v3475, 16
  %v3937 = vpop.permute.xlu0 %3936
  %3938 = vrot.lane.b32.xlu0 %v3476, 16
  %v3939 = vpop.permute.xlu0 %3938
  %3940 = vrot.lane.b32.xlu0 %v3477, 16
  %v3941 = vpop.permute.xlu0 %3940
  %3942 = vrot.lane.b32.xlu0 %v3478, 16
  %v3943 = vpop.permute.xlu0 %3942
  %3944 = vrot.lane.b32.xlu0 %v3479, 16
  %v3945 = vpop.permute.xlu0 %3944
  %3946 = vrot.lane.b32.xlu0 %v3480, 16
  %v3947 = vpop.permute.xlu0 %3946
  %3948 = vrot.lane.b32.xlu0 %v3481, 16
  %v3949 = vpop.permute.xlu0 %3948
  %3950 = vrot.lane.b32.xlu0 %v3482, 16
  %v3951 = vpop.permute.xlu0 %3950
  %3952 = vrot.lane.b32.xlu0 %v3483, 16
  %v3953 = vpop.permute.xlu0 %3952
  %3954 = vrot.lane.b32.xlu0 %v3484, 16
  %v3955 = vpop.permute.xlu0 %3954
  %3956 = vrot.lane.b32.xlu0 %v3485, 16
  %v3957 = vpop.permute.xlu0 %3956
  %3958 = vrot.lane.b32.xlu0 %v3486, 16
  %v3959 = vpop.permute.xlu0 %3958
  %3960 = vrot.lane.b32.xlu0 %v3487, 16
  %v3961 = vpop.permute.xlu0 %3960
  %3962 = vrot.lane.b32.xlu0 %v3488, 16
  %v3963 = vpop.permute.xlu0 %3962
  %3964 = vrot.lane.b32.xlu0 %v3489, 16
  %v3965 = vpop.permute.xlu0 %3964
  %3966 = vrot.lane.b32.xlu0 %v3490, 16
  %v3967 = vpop.permute.xlu0 %3966
  %3968 = vrot.lane.b32.xlu0 %v3491, 16
  %v3969 = vpop.permute.xlu0 %3968
  %3970 = vrot.lane.b32.xlu0 %v3492, 16
  %v3971 = vpop.permute.xlu0 %3970
  %3972 = vrot.lane.b32.xlu0 %v3493, 16
  %v3973 = vpop.permute.xlu0 %3972
  %3974 = vrot.lane.b32.xlu0 %v3494, 16
  %v3975 = vpop.permute.xlu0 %3974
  %4072 = vrot.lane.b32.xlu0 %v3495, 32
  %v4073 = vpop.permute.xlu0 %4072
  %4074 = vrot.lane.b32.xlu0 %v3496, 32
  %v4075 = vpop.permute.xlu0 %4074
  %4076 = vrot.lane.b32.xlu0 %v3497, 32
  %v4077 = vpop.permute.xlu0 %4076
  %4078 = vrot.lane.b32.xlu0 %v3498, 32
  %v4079 = vpop.permute.xlu0 %4078
  %4080 = vrot.lane.b32.xlu0 %v3499, 32
  %v4081 = vpop.permute.xlu0 %4080
  %4082 = vrot.lane.b32.xlu0 %v3500, 32
  %v4083 = vpop.permute.xlu0 %4082
  %4084 = vrot.lane.b32.xlu0 %v3501, 32
  %v4085 = vpop.permute.xlu0 %4084
  %4086 = vrot.lane.b32.xlu0 %v3502, 32
  %v4087 = vpop.permute.xlu0 %4086
  %4088 = vrot.lane.b32.xlu0 %v3503, 32
  %v4089 = vpop.permute.xlu0 %4088
  %4090 = vrot.lane.b32.xlu0 %v3504, 32
  %v4091 = vpop.permute.xlu0 %4090
  %4092 = vrot.lane.b32.xlu0 %v3505, 32
  %v4093 = vpop.permute.xlu0 %4092
  %4094 = vrot.lane.b32.xlu0 %v3506, 32
  %v4095 = vpop.permute.xlu0 %4094
  %4096 = vrot.lane.b32.xlu0 %v3507, 32
  %v4097 = vpop.permute.xlu0 %4096
  %4098 = vrot.lane.b32.xlu0 %v3508, 32
  %v4099 = vpop.permute.xlu0 %4098
  %4100 = vrot.lane.b32.xlu0 %v3509, 32
  %v4101 = vpop.permute.xlu0 %4100
  %4102 = vrot.lane.b32.xlu0 %v3510, 32
  %v4103 = vpop.permute.xlu0 %4102
  %4104 = vrot.lane.b32.xlu0 %v3511, 32
  %v4105 = vpop.permute.xlu0 %4104
  %4106 = vrot.lane.b32.xlu0 %v3512, 32
  %v4107 = vpop.permute.xlu0 %4106
  %4108 = vrot.lane.b32.xlu0 %v3513, 32
  %v4109 = vpop.permute.xlu0 %4108
  %4110 = vrot.lane.b32.xlu0 %v3514, 32
  %v4111 = vpop.permute.xlu0 %4110
  %4112 = vrot.lane.b32.xlu0 %v3515, 32
  %v4113 = vpop.permute.xlu0 %4112
  %4114 = vrot.lane.b32.xlu0 %v3516, 32
  %v4115 = vpop.permute.xlu0 %4114
  %4116 = vrot.lane.b32.xlu0 %v3517, 32
  %v4117 = vpop.permute.xlu0 %4116
  %4118 = vrot.lane.b32.xlu0 %v3518, 32
  %v4119 = vpop.permute.xlu0 %4118
  %4120 = vrot.lane.b32.xlu0 %v3519, 32
  %v4121 = vpop.permute.xlu0 %4120
  %4122 = vrot.lane.b32.xlu0 %v3520, 32
  %v4123 = vpop.permute.xlu0 %4122
  %4124 = vrot.lane.b32.xlu0 %v3521, 32
  %v4125 = vpop.permute.xlu0 %4124
  %4126 = vrot.lane.b32.xlu0 %v3522, 32
  %v4127 = vpop.permute.xlu0 %4126
  %4128 = vrot.lane.b32.xlu0 %v3523, 32
  %v4129 = vpop.permute.xlu0 %4128
  %4130 = vrot.lane.b32.xlu0 %v3524, 32
  %v4131 = vpop.permute.xlu0 %4130
  %4132 = vrot.lane.b32.xlu0 %v3525, 32
  %v4133 = vpop.permute.xlu0 %4132
  %4134 = vrot.lane.b32.xlu0 %v3526, 32
  %v4135 = vpop.permute.xlu0 %4134
  %4136 = vrot.lane.b32.xlu0 %v3527, 32
  %v4137 = vpop.permute.xlu0 %4136
  %4138 = vrot.lane.b32.xlu0 %v3528, 32
  %v4139 = vpop.permute.xlu0 %4138
  %4140 = vrot.lane.b32.xlu0 %v3529, 32
  %v4141 = vpop.permute.xlu0 %4140
  %4142 = vrot.lane.b32.xlu0 %v3530, 32
  %v4143 = vpop.permute.xlu0 %4142
  %4144 = vrot.lane.b32.xlu0 %v3531, 32
  %v4145 = vpop.permute.xlu0 %4144
  %4146 = vrot.lane.b32.xlu0 %v3532, 32
  %v4147 = vpop.permute.xlu0 %4146
  %4148 = vrot.lane.b32.xlu0 %v3533, 32
  %v4149 = vpop.permute.xlu0 %4148
  %4150 = vrot.lane.b32.xlu0 %v3534, 32
  %v4151 = vpop.permute.xlu0 %4150
  %4152 = vrot.lane.b32.xlu0 %v3535, 32
  %v4153 = vpop.permute.xlu0 %4152
  %4154 = vrot.lane.b32.xlu0 %v3536, 32
  %v4155 = vpop.permute.xlu0 %4154
  %4156 = vrot.lane.b32.xlu0 %v3537, 32
  %v4157 = vpop.permute.xlu0 %4156
  %4158 = vrot.lane.b32.xlu0 %v3538, 32
  %v4159 = vpop.permute.xlu0 %4158
  %4160 = vrot.lane.b32.xlu0 %v3539, 32
  %v4161 = vpop.permute.xlu0 %4160
  %4162 = vrot.lane.b32.xlu0 %v3540, 32
  %v4163 = vpop.permute.xlu0 %4162
  %4164 = vrot.lane.b32.xlu0 %v3541, 32
  %v4165 = vpop.permute.xlu0 %4164
  %4166 = vrot.lane.b32.xlu0 %v3542, 32
  %v4167 = vpop.permute.xlu0 %4166
  %4264 = vrot.lane.b32.xlu0 %v3543, 48
  %v4265 = vpop.permute.xlu0 %4264
  %4266 = vrot.lane.b32.xlu0 %v3544, 48
  %v4267 = vpop.permute.xlu0 %4266
  %4268 = vrot.lane.b32.xlu0 %v3545, 48
  %v4269 = vpop.permute.xlu0 %4268
  %4270 = vrot.lane.b32.xlu0 %v3546, 48
  %v4271 = vpop.permute.xlu0 %4270
  %4272 = vrot.lane.b32.xlu0 %v3547, 48
  %v4273 = vpop.permute.xlu0 %4272
  %4274 = vrot.lane.b32.xlu0 %v3548, 48
  %v4275 = vpop.permute.xlu0 %4274
  %4276 = vrot.lane.b32.xlu0 %v3549, 48
  %v4277 = vpop.permute.xlu0 %4276
  %4278 = vrot.lane.b32.xlu0 %v3550, 48
  %v4279 = vpop.permute.xlu0 %4278
  %4280 = vrot.lane.b32.xlu0 %v3551, 48
  %v4281 = vpop.permute.xlu0 %4280
  %4282 = vrot.lane.b32.xlu0 %v3552, 48
  %v4283 = vpop.permute.xlu0 %4282
  %4284 = vrot.lane.b32.xlu0 %v3553, 48
  %v4285 = vpop.permute.xlu0 %4284
  %4286 = vrot.lane.b32.xlu0 %v3554, 48
  %v4287 = vpop.permute.xlu0 %4286
  %4288 = vrot.lane.b32.xlu0 %v3555, 48
  %v4289 = vpop.permute.xlu0 %4288
  %4290 = vrot.lane.b32.xlu0 %v3556, 48
  %v4291 = vpop.permute.xlu0 %4290
  %4292 = vrot.lane.b32.xlu0 %v3557, 48
  %v4293 = vpop.permute.xlu0 %4292
  %4294 = vrot.lane.b32.xlu0 %v3558, 48
  %v4295 = vpop.permute.xlu0 %4294
  %4296 = vrot.lane.b32.xlu0 %v3559, 48
  %v4297 = vpop.permute.xlu0 %4296
  %4298 = vrot.lane.b32.xlu0 %v3560, 48
  %v4299 = vpop.permute.xlu0 %4298
  %4300 = vrot.lane.b32.xlu0 %v3561, 48
  %v4301 = vpop.permute.xlu0 %4300
  %4302 = vrot.lane.b32.xlu0 %v3562, 48
  %v4303 = vpop.permute.xlu0 %4302
  %4304 = vrot.lane.b32.xlu0 %v3563, 48
  %v4305 = vpop.permute.xlu0 %4304
  %4306 = vrot.lane.b32.xlu0 %v3564, 48
  %v4307 = vpop.permute.xlu0 %4306
  %4308 = vrot.lane.b32.xlu0 %v3565, 48
  %v4309 = vpop.permute.xlu0 %4308
  %4310 = vrot.lane.b32.xlu0 %v3566, 48
  %v4311 = vpop.permute.xlu0 %4310
  %4312 = vrot.lane.b32.xlu0 %v3567, 48
  %v4313 = vpop.permute.xlu0 %4312
  %4314 = vrot.lane.b32.xlu0 %v3568, 48
  %v4315 = vpop.permute.xlu0 %4314
  %4316 = vrot.lane.b32.xlu0 %v3569, 48
  %v4317 = vpop.permute.xlu0 %4316
  %4318 = vrot.lane.b32.xlu0 %v3570, 48
  %v4319 = vpop.permute.xlu0 %4318
  %4320 = vrot.lane.b32.xlu0 %v3571, 48
  %v4321 = vpop.permute.xlu0 %4320
  %4322 = vrot.lane.b32.xlu0 %v3572, 48
  %v4323 = vpop.permute.xlu0 %4322
  %4324 = vrot.lane.b32.xlu0 %v3573, 48
  %v4325 = vpop.permute.xlu0 %4324
  %4326 = vrot.lane.b32.xlu0 %v3574, 48
  %v4327 = vpop.permute.xlu0 %4326
  %4328 = vrot.lane.b32.xlu0 %v3575, 48
  %v4329 = vpop.permute.xlu0 %4328
  %4330 = vrot.lane.b32.xlu0 %v3576, 48
  %v4331 = vpop.permute.xlu0 %4330
  %4332 = vrot.lane.b32.xlu0 %v3577, 48
  %v4333 = vpop.permute.xlu0 %4332
  %4334 = vrot.lane.b32.xlu0 %v3578, 48
  %v4335 = vpop.permute.xlu0 %4334
  %4336 = vrot.lane.b32.xlu0 %v3579, 48
  %v4337 = vpop.permute.xlu0 %4336
  %4338 = vrot.lane.b32.xlu0 %v3580, 48
  %v4339 = vpop.permute.xlu0 %4338
  %4340 = vrot.lane.b32.xlu0 %v3581, 48
  %v4341 = vpop.permute.xlu0 %4340
  %4342 = vrot.lane.b32.xlu0 %v3582, 48
  %v4343 = vpop.permute.xlu0 %4342
  %4344 = vrot.lane.b32.xlu0 %v3583, 48
  %v4345 = vpop.permute.xlu0 %4344
  %4346 = vrot.lane.b32.xlu0 %v3584, 48
  %v4347 = vpop.permute.xlu0 %4346
  %4348 = vrot.lane.b32.xlu0 %v3585, 48
  %v4349 = vpop.permute.xlu0 %4348
  %4350 = vrot.lane.b32.xlu0 %v3586, 48
  %v4351 = vpop.permute.xlu0 %4350
  %4352 = vrot.lane.b32.xlu0 %v3587, 48
  %v4353 = vpop.permute.xlu0 %4352
  %4354 = vrot.lane.b32.xlu0 %v3588, 48
  %v4355 = vpop.permute.xlu0 %4354
  %4356 = vrot.lane.b32.xlu0 %v3589, 48
  %v4357 = vpop.permute.xlu0 %4356
  %4358 = vrot.lane.b32.xlu0 %v3590, 48
  %v4359 = vpop.permute.xlu0 %4358
  %4456 = vrot.lane.b32.xlu0 %v3591, 64
  %v4457 = vpop.permute.xlu0 %4456
  %4458 = vrot.lane.b32.xlu0 %v3592, 64
  %v4459 = vpop.permute.xlu0 %4458
  %4460 = vrot.lane.b32.xlu0 %v3593, 64
  %v4461 = vpop.permute.xlu0 %4460
  %4462 = vrot.lane.b32.xlu0 %v3594, 64
  %v4463 = vpop.permute.xlu0 %4462
  %4464 = vrot.lane.b32.xlu0 %v3595, 64
  %v4465 = vpop.permute.xlu0 %4464
  %4466 = vrot.lane.b32.xlu0 %v3596, 64
  %v4467 = vpop.permute.xlu0 %4466
  %4468 = vrot.lane.b32.xlu0 %v3597, 64
  %v4469 = vpop.permute.xlu0 %4468
  %4470 = vrot.lane.b32.xlu0 %v3598, 64
  %v4471 = vpop.permute.xlu0 %4470
  %4472 = vrot.lane.b32.xlu0 %v3599, 64
  %v4473 = vpop.permute.xlu0 %4472
  %4474 = vrot.lane.b32.xlu0 %v3600, 64
  %v4475 = vpop.permute.xlu0 %4474
  %4476 = vrot.lane.b32.xlu0 %v3601, 64
  %v4477 = vpop.permute.xlu0 %4476
  %4478 = vrot.lane.b32.xlu0 %v3602, 64
  %v4479 = vpop.permute.xlu0 %4478
  %4480 = vrot.lane.b32.xlu0 %v3603, 64
  %v4481 = vpop.permute.xlu0 %4480
  %4482 = vrot.lane.b32.xlu0 %v3604, 64
  %v4483 = vpop.permute.xlu0 %4482
  %4484 = vrot.lane.b32.xlu0 %v3605, 64
  %v4485 = vpop.permute.xlu0 %4484
  %4486 = vrot.lane.b32.xlu0 %v3606, 64
  %v4487 = vpop.permute.xlu0 %4486
  %4488 = vrot.lane.b32.xlu0 %v3607, 64
  %v4489 = vpop.permute.xlu0 %4488
  %4490 = vrot.lane.b32.xlu0 %v3608, 64
  %v4491 = vpop.permute.xlu0 %4490
  %4492 = vrot.lane.b32.xlu0 %v3609, 64
  %v4493 = vpop.permute.xlu0 %4492
  %4494 = vrot.lane.b32.xlu0 %v3610, 64
  %v4495 = vpop.permute.xlu0 %4494
  %4496 = vrot.lane.b32.xlu0 %v3611, 64
  %v4497 = vpop.permute.xlu0 %4496
  %4498 = vrot.lane.b32.xlu0 %v3612, 64
  %v4499 = vpop.permute.xlu0 %4498
  %4500 = vrot.lane.b32.xlu0 %v3613, 64
  %v4501 = vpop.permute.xlu0 %4500
  %4502 = vrot.lane.b32.xlu0 %v3614, 64
  %v4503 = vpop.permute.xlu0 %4502
  %4504 = vrot.lane.b32.xlu0 %v3615, 64
  %v4505 = vpop.permute.xlu0 %4504
  %4506 = vrot.lane.b32.xlu0 %v3616, 64
  %v4507 = vpop.permute.xlu0 %4506
  %4508 = vrot.lane.b32.xlu0 %v3617, 64
  %v4509 = vpop.permute.xlu0 %4508
  %4510 = vrot.lane.b32.xlu0 %v3618, 64
  %v4511 = vpop.permute.xlu0 %4510
  %4512 = vrot.lane.b32.xlu0 %v3619, 64
  %v4513 = vpop.permute.xlu0 %4512
  %4514 = vrot.lane.b32.xlu0 %v3620, 64
  %v4515 = vpop.permute.xlu0 %4514
  %4516 = vrot.lane.b32.xlu0 %v3621, 64
  %v4517 = vpop.permute.xlu0 %4516
  %4518 = vrot.lane.b32.xlu0 %v3622, 64
  %v4519 = vpop.permute.xlu0 %4518
  %4520 = vrot.lane.b32.xlu0 %v3623, 64
  %v4521 = vpop.permute.xlu0 %4520
  %4522 = vrot.lane.b32.xlu0 %v3624, 64
  %v4523 = vpop.permute.xlu0 %4522
  %4524 = vrot.lane.b32.xlu0 %v3625, 64
  %v4525 = vpop.permute.xlu0 %4524
  %4526 = vrot.lane.b32.xlu0 %v3626, 64
  %v4527 = vpop.permute.xlu0 %4526
  %4528 = vrot.lane.b32.xlu0 %v3627, 64
  %v4529 = vpop.permute.xlu0 %4528
  %4530 = vrot.lane.b32.xlu0 %v3628, 64
  %v4531 = vpop.permute.xlu0 %4530
  %4532 = vrot.lane.b32.xlu0 %v3629, 64
  %v4533 = vpop.permute.xlu0 %4532
  %4534 = vrot.lane.b32.xlu0 %v3630, 64
  %v4535 = vpop.permute.xlu0 %4534
  %4536 = vrot.lane.b32.xlu0 %v3631, 64
  %v4537 = vpop.permute.xlu0 %4536
  %4538 = vrot.lane.b32.xlu0 %v3632, 64
  %v4539 = vpop.permute.xlu0 %4538
  %4540 = vrot.lane.b32.xlu0 %v3633, 64
  %v4541 = vpop.permute.xlu0 %4540
  %4542 = vrot.lane.b32.xlu0 %v3634, 64
  %v4543 = vpop.permute.xlu0 %4542
  %4544 = vrot.lane.b32.xlu0 %v3635, 64
  %v4545 = vpop.permute.xlu0 %4544
  %4546 = vrot.lane.b32.xlu0 %v3636, 64
  %v4547 = vpop.permute.xlu0 %4546
  %4548 = vrot.lane.b32.xlu0 %v3637, 64
  %v4549 = vpop.permute.xlu0 %4548
  %4550 = vrot.lane.b32.xlu0 %v3638, 64
  %v4551 = vpop.permute.xlu0 %4550
  %4648 = vrot.lane.b32.xlu0 %v3639, 80
  %v4649 = vpop.permute.xlu0 %4648
  %4650 = vrot.lane.b32.xlu0 %v3640, 80
  %v4651 = vpop.permute.xlu0 %4650
  %4652 = vrot.lane.b32.xlu0 %v3641, 80
  %v4653 = vpop.permute.xlu0 %4652
  %4654 = vrot.lane.b32.xlu0 %v3642, 80
  %v4655 = vpop.permute.xlu0 %4654
  %4656 = vrot.lane.b32.xlu0 %v3643, 80
  %v4657 = vpop.permute.xlu0 %4656
  %4658 = vrot.lane.b32.xlu0 %v3644, 80
  %v4659 = vpop.permute.xlu0 %4658
  %4660 = vrot.lane.b32.xlu0 %v3645, 80
  %v4661 = vpop.permute.xlu0 %4660
  %4662 = vrot.lane.b32.xlu0 %v3646, 80
  %v4663 = vpop.permute.xlu0 %4662
  %4664 = vrot.lane.b32.xlu0 %v3647, 80
  %v4665 = vpop.permute.xlu0 %4664
  %4666 = vrot.lane.b32.xlu0 %v3648, 80
  %v4667 = vpop.permute.xlu0 %4666
  %4668 = vrot.lane.b32.xlu0 %v3649, 80
  %v4669 = vpop.permute.xlu0 %4668
  %4670 = vrot.lane.b32.xlu0 %v3650, 80
  %v4671 = vpop.permute.xlu0 %4670
  %4672 = vrot.lane.b32.xlu0 %v3651, 80
  %v4673 = vpop.permute.xlu0 %4672
  %4674 = vrot.lane.b32.xlu0 %v3652, 80
  %v4675 = vpop.permute.xlu0 %4674
  %4676 = vrot.lane.b32.xlu0 %v3653, 80
  %v4677 = vpop.permute.xlu0 %4676
  %4678 = vrot.lane.b32.xlu0 %v3654, 80
  %v4679 = vpop.permute.xlu0 %4678
  %4680 = vrot.lane.b32.xlu0 %v3655, 80
  %v4681 = vpop.permute.xlu0 %4680
  %4682 = vrot.lane.b32.xlu0 %v3656, 80
  %v4683 = vpop.permute.xlu0 %4682
  %4684 = vrot.lane.b32.xlu0 %v3657, 80
  %v4685 = vpop.permute.xlu0 %4684
  %4686 = vrot.lane.b32.xlu0 %v3658, 80
  %v4687 = vpop.permute.xlu0 %4686
  %4688 = vrot.lane.b32.xlu0 %v3659, 80
  %v4689 = vpop.permute.xlu0 %4688
  %4690 = vrot.lane.b32.xlu0 %v3660, 80
  %v4691 = vpop.permute.xlu0 %4690
  %4692 = vrot.lane.b32.xlu0 %v3661, 80
  %v4693 = vpop.permute.xlu0 %4692
  %4694 = vrot.lane.b32.xlu0 %v3662, 80
  %v4695 = vpop.permute.xlu0 %4694
  %4696 = vrot.lane.b32.xlu0 %v3663, 80
  %v4697 = vpop.permute.xlu0 %4696
  %4698 = vrot.lane.b32.xlu0 %v3664, 80
  %v4699 = vpop.permute.xlu0 %4698
  %4700 = vrot.lane.b32.xlu0 %v3665, 80
  %v4701 = vpop.permute.xlu0 %4700
  %4702 = vrot.lane.b32.xlu0 %v3666, 80
  %v4703 = vpop.permute.xlu0 %4702
  %4704 = vrot.lane.b32.xlu0 %v3667, 80
  %v4705 = vpop.permute.xlu0 %4704
  %4706 = vrot.lane.b32.xlu0 %v3668, 80
  %v4707 = vpop.permute.xlu0 %4706
  %4708 = vrot.lane.b32.xlu0 %v3669, 80
  %v4709 = vpop.permute.xlu0 %4708
  %4710 = vrot.lane.b32.xlu0 %v3670, 80
  %v4711 = vpop.permute.xlu0 %4710
  %4712 = vrot.lane.b32.xlu0 %v3671, 80
  %v4713 = vpop.permute.xlu0 %4712
  %4714 = vrot.lane.b32.xlu0 %v3672, 80
  %v4715 = vpop.permute.xlu0 %4714
  %4716 = vrot.lane.b32.xlu0 %v3673, 80
  %v4717 = vpop.permute.xlu0 %4716
  %4718 = vrot.lane.b32.xlu0 %v3674, 80
  %v4719 = vpop.permute.xlu0 %4718
  %4720 = vrot.lane.b32.xlu0 %v3675, 80
  %v4721 = vpop.permute.xlu0 %4720
  %4722 = vrot.lane.b32.xlu0 %v3676, 80
  %v4723 = vpop.permute.xlu0 %4722
  %4724 = vrot.lane.b32.xlu0 %v3677, 80
  %v4725 = vpop.permute.xlu0 %4724
  %4726 = vrot.lane.b32.xlu0 %v3678, 80
  %v4727 = vpop.permute.xlu0 %4726
  %4728 = vrot.lane.b32.xlu0 %v3679, 80
  %v4729 = vpop.permute.xlu0 %4728
  %4730 = vrot.lane.b32.xlu0 %v3680, 80
  %v4731 = vpop.permute.xlu0 %4730
  %4732 = vrot.lane.b32.xlu0 %v3681, 80
  %v4733 = vpop.permute.xlu0 %4732
  %4734 = vrot.lane.b32.xlu0 %v3682, 80
  %v4735 = vpop.permute.xlu0 %4734
  %4736 = vrot.lane.b32.xlu0 %v3683, 80
  %v4737 = vpop.permute.xlu0 %4736
  %4738 = vrot.lane.b32.xlu0 %v3684, 80
  %v4739 = vpop.permute.xlu0 %4738
  %4740 = vrot.lane.b32.xlu0 %v3685, 80
  %v4741 = vpop.permute.xlu0 %4740
  %4742 = vrot.lane.b32.xlu0 %v3686, 80
  %v4743 = vpop.permute.xlu0 %4742
  %4840 = vrot.lane.b32.xlu0 %v3688, 96
  %v4841 = vpop.permute.xlu0 %4840
  %4842 = vrot.lane.b32.xlu0 %v3689, 96
  %v4843 = vpop.permute.xlu0 %4842
  %4844 = vrot.lane.b32.xlu0 %v3690, 96
  %v4845 = vpop.permute.xlu0 %4844
  %4846 = vrot.lane.b32.xlu0 %v3691, 96
  %v4847 = vpop.permute.xlu0 %4846
  %4848 = vrot.lane.b32.xlu0 %v3692, 96
  %v4849 = vpop.permute.xlu0 %4848
  %4850 = vrot.lane.b32.xlu0 %v3693, 96
  %v4851 = vpop.permute.xlu0 %4850
  %4852 = vrot.lane.b32.xlu0 %v3694, 96
  %v4853 = vpop.permute.xlu0 %4852
  %4854 = vrot.lane.b32.xlu0 %v3695, 96
  %v4855 = vpop.permute.xlu0 %4854
  %4856 = vrot.lane.b32.xlu0 %v3696, 96
  %v4857 = vpop.permute.xlu0 %4856
  %4858 = vrot.lane.b32.xlu0 %v3697, 96
  %v4859 = vpop.permute.xlu0 %4858
  %4860 = vrot.lane.b32.xlu0 %v3698, 96
  %v4861 = vpop.permute.xlu0 %4860
  %4862 = vrot.lane.b32.xlu0 %v3699, 96
  %v4863 = vpop.permute.xlu0 %4862
  %4864 = vrot.lane.b32.xlu0 %v3700, 96
  %v4865 = vpop.permute.xlu0 %4864
  %4866 = vrot.lane.b32.xlu0 %v3701, 96
  %v4867 = vpop.permute.xlu0 %4866
  %4868 = vrot.lane.b32.xlu0 %v3702, 96
  %v4869 = vpop.permute.xlu0 %4868
  %4870 = vrot.lane.b32.xlu0 %v3703, 96
  %v4871 = vpop.permute.xlu0 %4870
  %4872 = vrot.lane.b32.xlu0 %v3704, 96
  %v4873 = vpop.permute.xlu0 %4872
  %4874 = vrot.lane.b32.xlu0 %v3705, 96
  %v4875 = vpop.permute.xlu0 %4874
  %4876 = vrot.lane.b32.xlu0 %v3706, 96
  %v4877 = vpop.permute.xlu0 %4876
  %4878 = vrot.lane.b32.xlu0 %v3707, 96
  %v4879 = vpop.permute.xlu0 %4878
  %4880 = vrot.lane.b32.xlu0 %v3708, 96
  %v4881 = vpop.permute.xlu0 %4880
  %4882 = vrot.lane.b32.xlu0 %v3709, 96
  %v4883 = vpop.permute.xlu0 %4882
  %4884 = vrot.lane.b32.xlu0 %v3710, 96
  %v4885 = vpop.permute.xlu0 %4884
  %4886 = vrot.lane.b32.xlu0 %v3711, 96
  %v4887 = vpop.permute.xlu0 %4886
  %4888 = vrot.lane.b32.xlu0 %v3712, 96
  %v4889 = vpop.permute.xlu0 %4888
  %4890 = vrot.lane.b32.xlu0 %v3713, 96
  %v4891 = vpop.permute.xlu0 %4890
  %4892 = vrot.lane.b32.xlu0 %v3714, 96
  %v4893 = vpop.permute.xlu0 %4892
  %4894 = vrot.lane.b32.xlu0 %v3715, 96
  %v4895 = vpop.permute.xlu0 %4894
  %4896 = vrot.lane.b32.xlu0 %v3716, 96
  %v4897 = vpop.permute.xlu0 %4896
  %4898 = vrot.lane.b32.xlu0 %v3717, 96
  %v4899 = vpop.permute.xlu0 %4898
  %4900 = vrot.lane.b32.xlu0 %v3718, 96
  %v4901 = vpop.permute.xlu0 %4900
  %4902 = vrot.lane.b32.xlu0 %v3719, 96
  %v4903 = vpop.permute.xlu0 %4902
  %4904 = vrot.lane.b32.xlu0 %v3720, 96
  %v4905 = vpop.permute.xlu0 %4904
  %4906 = vrot.lane.b32.xlu0 %v3721, 96
  %v4907 = vpop.permute.xlu0 %4906
  %4908 = vrot.lane.b32.xlu0 %v3722, 96
  %v4909 = vpop.permute.xlu0 %4908
  %4910 = vrot.lane.b32.xlu0 %v3723, 96
  %v4911 = vpop.permute.xlu0 %4910
  %4912 = vrot.lane.b32.xlu0 %v3724, 96
  %v4913 = vpop.permute.xlu0 %4912
  %4914 = vrot.lane.b32.xlu0 %v3725, 96
  %v4915 = vpop.permute.xlu0 %4914
  %4916 = vrot.lane.b32.xlu0 %v3726, 96
  %v4917 = vpop.permute.xlu0 %4916
  %4918 = vrot.lane.b32.xlu0 %v3727, 96
  %v4919 = vpop.permute.xlu0 %4918
  %4920 = vrot.lane.b32.xlu0 %v3728, 96
  %v4921 = vpop.permute.xlu0 %4920
  %4922 = vrot.lane.b32.xlu0 %v3729, 96
  %v4923 = vpop.permute.xlu0 %4922
  %4924 = vrot.lane.b32.xlu0 %v3730, 96
  %v4925 = vpop.permute.xlu0 %4924
  %4926 = vrot.lane.b32.xlu0 %v3731, 96
  %v4927 = vpop.permute.xlu0 %4926
  %4928 = vrot.lane.b32.xlu0 %v3732, 96
  %v4929 = vpop.permute.xlu0 %4928
  %4930 = vrot.lane.b32.xlu0 %v3733, 96
  %v4931 = vpop.permute.xlu0 %4930
  %4932 = vrot.lane.b32.xlu0 %v3734, 96
  %v4933 = vpop.permute.xlu0 %4932
  %4934 = vrot.lane.b32.xlu0 %v3735, 96
  %v4935 = vpop.permute.xlu0 %4934
  %5032 = vrot.lane.b32.xlu0 %v3736, 112
  %v5033 = vpop.permute.xlu0 %5032
  %5034 = vrot.lane.b32.xlu0 %v3737, 112
  %v5035 = vpop.permute.xlu0 %5034
  %5036 = vrot.lane.b32.xlu0 %v3738, 112
  %v5037 = vpop.permute.xlu0 %5036
  %5038 = vrot.lane.b32.xlu0 %v3739, 112
  %v5039 = vpop.permute.xlu0 %5038
  %5040 = vrot.lane.b32.xlu0 %v3740, 112
  %v5041 = vpop.permute.xlu0 %5040
  %5042 = vrot.lane.b32.xlu0 %v3741, 112
  %v5043 = vpop.permute.xlu0 %5042
  %5044 = vrot.lane.b32.xlu0 %v3742, 112
  %v5045 = vpop.permute.xlu0 %5044
  %5046 = vrot.lane.b32.xlu0 %v3743, 112
  %v5047 = vpop.permute.xlu0 %5046
  %5048 = vrot.lane.b32.xlu0 %v3744, 112
  %v5049 = vpop.permute.xlu0 %5048
  %5050 = vrot.lane.b32.xlu0 %v3745, 112
  %v5051 = vpop.permute.xlu0 %5050
  %5052 = vrot.lane.b32.xlu0 %v3746, 112
  %v5053 = vpop.permute.xlu0 %5052
  %5054 = vrot.lane.b32.xlu0 %v3747, 112
  %v5055 = vpop.permute.xlu0 %5054
  %5056 = vrot.lane.b32.xlu0 %v3748, 112
  %v5057 = vpop.permute.xlu0 %5056
  %5058 = vrot.lane.b32.xlu0 %v3749, 112
  %v5059 = vpop.permute.xlu0 %5058
  %5060 = vrot.lane.b32.xlu0 %v3750, 112
  %v5061 = vpop.permute.xlu0 %5060
  %5062 = vrot.lane.b32.xlu0 %v3751, 112
  %v5063 = vpop.permute.xlu0 %5062
  %5064 = vrot.lane.b32.xlu0 %v3752, 112
  %v5065 = vpop.permute.xlu0 %5064
  %5066 = vrot.lane.b32.xlu0 %v3753, 112
  %v5067 = vpop.permute.xlu0 %5066
  %5068 = vrot.lane.b32.xlu0 %v3754, 112
  %v5069 = vpop.permute.xlu0 %5068
  %5070 = vrot.lane.b32.xlu0 %v3755, 112
  %v5071 = vpop.permute.xlu0 %5070
  %5072 = vrot.lane.b32.xlu0 %v3756, 112
  %v5073 = vpop.permute.xlu0 %5072
  %5074 = vrot.lane.b32.xlu0 %v3757, 112
  %v5075 = vpop.permute.xlu0 %5074
  %5076 = vrot.lane.b32.xlu0 %v3758, 112
  %v5077 = vpop.permute.xlu0 %5076
  %5078 = vrot.lane.b32.xlu0 %v3759, 112
  %v5079 = vpop.permute.xlu0 %5078
  %5080 = vrot.lane.b32.xlu0 %v3760, 112
  %v5081 = vpop.permute.xlu0 %5080
  %5082 = vrot.lane.b32.xlu0 %v3761, 112
  %v5083 = vpop.permute.xlu0 %5082
  %5084 = vrot.lane.b32.xlu0 %v3762, 112
  %v5085 = vpop.permute.xlu0 %5084
  %5086 = vrot.lane.b32.xlu0 %v3763, 112
  %v5087 = vpop.permute.xlu0 %5086
  %5088 = vrot.lane.b32.xlu0 %v3764, 112
  %v5089 = vpop.permute.xlu0 %5088
  %5090 = vrot.lane.b32.xlu0 %v3765, 112
  %v5091 = vpop.permute.xlu0 %5090
  %5092 = vrot.lane.b32.xlu0 %v3766, 112
  %v5093 = vpop.permute.xlu0 %5092
  %5094 = vrot.lane.b32.xlu0 %v3767, 112
  %v5095 = vpop.permute.xlu0 %5094
  %5096 = vrot.lane.b32.xlu0 %v3768, 112
  %v5097 = vpop.permute.xlu0 %5096
  %5098 = vrot.lane.b32.xlu0 %v3769, 112
  %v5099 = vpop.permute.xlu0 %5098
  %5100 = vrot.lane.b32.xlu0 %v3770, 112
  %v5101 = vpop.permute.xlu0 %5100
  %5102 = vrot.lane.b32.xlu0 %v3771, 112
  %v5103 = vpop.permute.xlu0 %5102
  %5104 = vrot.lane.b32.xlu0 %v3772, 112
  %v5105 = vpop.permute.xlu0 %5104
  %5106 = vrot.lane.b32.xlu0 %v3773, 112
  %v5107 = vpop.permute.xlu0 %5106
  %5108 = vrot.lane.b32.xlu0 %v3774, 112
  %v5109 = vpop.permute.xlu0 %5108
  %5110 = vrot.lane.b32.xlu0 %v3775, 112
  %v5111 = vpop.permute.xlu0 %5110
  %5112 = vrot.lane.b32.xlu0 %v3776, 112
  %v5113 = vpop.permute.xlu0 %5112
  %5114 = vrot.lane.b32.xlu0 %v3777, 112
  %v5115 = vpop.permute.xlu0 %5114
  %5116 = vrot.lane.b32.xlu0 %v3778, 112
  %v5117 = vpop.permute.xlu0 %5116
  %5118 = vrot.lane.b32.xlu0 %v3779, 112
  %v5119 = vpop.permute.xlu0 %5118
  %5120 = vrot.lane.b32.xlu0 %v3780, 112
  %v5121 = vpop.permute.xlu0 %5120
  %5122 = vrot.lane.b32.xlu0 %v3781, 112
  %v5123 = vpop.permute.xlu0 %5122
  %5124 = vrot.lane.b32.xlu0 %v3782, 112
  %v5125 = vpop.permute.xlu0 %5124
  %5126 = vrot.lane.b32.xlu0 %v3783, 112
  %v5127 = vpop.permute.xlu0 %5126
  %v5176 = vsel %vm148, %v3399, %v3881
  %v5177 = vsel %vm148, %v3400, %v3883
  %v5178 = vsel %vm148, %v3401, %v3885
  %v5179 = vsel %vm148, %v3402, %v3887
  %v5180 = vsel %vm148, %v3403, %v3889
  %v5181 = vsel %vm148, %v3404, %v3891
  %v5182 = vsel %vm148, %v3405, %v3893
  %v5183 = vsel %vm148, %v3406, %v3895
  %v5184 = vsel %vm148, %v3407, %v3897
  %v5185 = vsel %vm148, %v3408, %v3899
  %v5186 = vsel %vm148, %v3409, %v3901
  %v5187 = vsel %vm148, %v3410, %v3903
  %v5188 = vsel %vm148, %v3411, %v3905
  %v5189 = vsel %vm148, %v3412, %v3907
  %v5190 = vsel %vm148, %v3413, %v3909
  %v5191 = vsel %vm148, %v3414, %v3911
  %v5192 = vsel %vm148, %v3415, %v3913
  %v5193 = vsel %vm148, %v3416, %v3915
  %v5194 = vsel %vm148, %v3417, %v3917
  %v5195 = vsel %vm148, %v3418, %v3919
  %v5196 = vsel %vm148, %v3419, %v3921
  %v5197 = vsel %vm148, %v3420, %v3923
  %v5198 = vsel %vm148, %v3421, %v3925
  %v5199 = vsel %vm148, %v3422, %v3927
  %v5200 = vsel %vm148, %v3423, %v3929
  %v5201 = vsel %vm148, %v3424, %v3931
  %v5202 = vsel %vm148, %v3425, %v3933
  %v5203 = vsel %vm148, %v3426, %v3935
  %v5204 = vsel %vm148, %v3427, %v3937
  %v5205 = vsel %vm148, %v3428, %v3939
  %v5206 = vsel %vm148, %v3429, %v3941
  %v5207 = vsel %vm148, %v3430, %v3943
  %v5208 = vsel %vm148, %v3431, %v3945
  %v5209 = vsel %vm148, %v3432, %v3947
  %v5210 = vsel %vm148, %v3433, %v3949
  %v5211 = vsel %vm148, %v3434, %v3951
  %v5212 = vsel %vm148, %v3435, %v3953
  %v5213 = vsel %vm148, %v3436, %v3955
  %v5214 = vsel %vm148, %v3437, %v3957
  %v5215 = vsel %vm148, %v3438, %v3959
  %v5216 = vsel %vm148, %v3439, %v3961
  %v5217 = vsel %vm148, %v3440, %v3963
  %v5218 = vsel %vm148, %v3441, %v3965
  %v5219 = vsel %vm148, %v3442, %v3967
  %v5220 = vsel %vm148, %v3443, %v3969
  %v5221 = vsel %vm148, %v3444, %v3971
  %v5222 = vsel %vm148, %v3445, %v3973
  %v5223 = vsel %vm148, %v3446, %v3975
  %v5224 = vsel %vm2677, %v5176, %v4073
  %v5225 = vsel %vm2677, %v5177, %v4075
  %v5226 = vsel %vm2677, %v5178, %v4077
  %v5227 = vsel %vm2677, %v5179, %v4079
  %v5228 = vsel %vm2677, %v5180, %v4081
  %v5229 = vsel %vm2677, %v5181, %v4083
  %v5230 = vsel %vm2677, %v5182, %v4085
  %v5231 = vsel %vm2677, %v5183, %v4087
  %v5232 = vsel %vm2677, %v5184, %v4089
  %v5233 = vsel %vm2677, %v5185, %v4091
  %v5234 = vsel %vm2677, %v5186, %v4093
  %v5235 = vsel %vm2677, %v5187, %v4095
  %v5236 = vsel %vm2677, %v5188, %v4097
  %v5237 = vsel %vm2677, %v5189, %v4099
  %v5238 = vsel %vm2677, %v5190, %v4101
  %v5239 = vsel %vm2677, %v5191, %v4103
  %v5240 = vsel %vm2677, %v5192, %v4105
  %v5241 = vsel %vm2677, %v5193, %v4107
  %v5242 = vsel %vm2677, %v5194, %v4109
  %v5243 = vsel %vm2677, %v5195, %v4111
  %v5244 = vsel %vm2677, %v5196, %v4113
  %v5245 = vsel %vm2677, %v5197, %v4115
  %v5246 = vsel %vm2677, %v5198, %v4117
  %v5247 = vsel %vm2677, %v5199, %v4119
  %v5248 = vsel %vm2677, %v5200, %v4121
  %v5249 = vsel %vm2677, %v5201, %v4123
  %v5250 = vsel %vm2677, %v5202, %v4125
  %v5251 = vsel %vm2677, %v5203, %v4127
  %v5252 = vsel %vm2677, %v5204, %v4129
  %v5253 = vsel %vm2677, %v5205, %v4131
  %v5254 = vsel %vm2677, %v5206, %v4133
  %v5255 = vsel %vm2677, %v5207, %v4135
  %v5256 = vsel %vm2677, %v5208, %v4137
  %v5257 = vsel %vm2677, %v5209, %v4139
  %v5258 = vsel %vm2677, %v5210, %v4141
  %v5259 = vsel %vm2677, %v5211, %v4143
  %v5260 = vsel %vm2677, %v5212, %v4145
  %v5261 = vsel %vm2677, %v5213, %v4147
  %v5262 = vsel %vm2677, %v5214, %v4149
  %v5263 = vsel %vm2677, %v5215, %v4151
  %v5264 = vsel %vm2677, %v5216, %v4153
  %v5265 = vsel %vm2677, %v5217, %v4155
  %v5266 = vsel %vm2677, %v5218, %v4157
  %v5267 = vsel %vm2677, %v5219, %v4159
  %v5268 = vsel %vm2677, %v5220, %v4161
  %v5269 = vsel %vm2677, %v5221, %v4163
  %v5270 = vsel %vm2677, %v5222, %v4165
  %v5271 = vsel %vm2677, %v5223, %v4167
  %vm5272 = vcmask 392192
  %v5273 = vsel %vm5272, %v5224, %v4265
  %v5274 = vsel %vm5272, %v5225, %v4267
  %v5275 = vsel %vm5272, %v5226, %v4269
  %v5276 = vsel %vm5272, %v5227, %v4271
  %v5277 = vsel %vm5272, %v5228, %v4273
  %v5278 = vsel %vm5272, %v5229, %v4275
  %v5279 = vsel %vm5272, %v5230, %v4277
  %v5280 = vsel %vm5272, %v5231, %v4279
  %v5281 = vsel %vm5272, %v5232, %v4281
  %v5282 = vsel %vm5272, %v5233, %v4283
  %v5283 = vsel %vm5272, %v5234, %v4285
  %v5284 = vsel %vm5272, %v5235, %v4287
  %v5285 = vsel %vm5272, %v5236, %v4289
  %v5286 = vsel %vm5272, %v5237, %v4291
  %v5287 = vsel %vm5272, %v5238, %v4293
  %v5288 = vsel %vm5272, %v5239, %v4295
  %v5289 = vsel %vm5272, %v5240, %v4297
  %v5290 = vsel %vm5272, %v5241, %v4299
  %v5291 = vsel %vm5272, %v5242, %v4301
  %v5292 = vsel %vm5272, %v5243, %v4303
  %v5293 = vsel %vm5272, %v5244, %v4305
  %v5294 = vsel %vm5272, %v5245, %v4307
  %v5295 = vsel %vm5272, %v5246, %v4309
  %v5296 = vsel %vm5272, %v5247, %v4311
  %v5297 = vsel %vm5272, %v5248, %v4313
  %v5298 = vsel %vm5272, %v5249, %v4315
  %v5299 = vsel %vm5272, %v5250, %v4317
  %v5300 = vsel %vm5272, %v5251, %v4319
  %v5301 = vsel %vm5272, %v5252, %v4321
  %v5302 = vsel %vm5272, %v5253, %v4323
  %v5303 = vsel %vm5272, %v5254, %v4325
  %v5304 = vsel %vm5272, %v5255, %v4327
  %v5305 = vsel %vm5272, %v5256, %v4329
  %v5306 = vsel %vm5272, %v5257, %v4331
  %v5307 = vsel %vm5272, %v5258, %v4333
  %v5308 = vsel %vm5272, %v5259, %v4335
  %v5309 = vsel %vm5272, %v5260, %v4337
  %v5310 = vsel %vm5272, %v5261, %v4339
  %v5311 = vsel %vm5272, %v5262, %v4341
  %v5312 = vsel %vm5272, %v5263, %v4343
  %v5313 = vsel %vm5272, %v5264, %v4345
  %v5314 = vsel %vm5272, %v5265, %v4347
  %v5315 = vsel %vm5272, %v5266, %v4349
  %v5316 = vsel %vm5272, %v5267, %v4351
  %v5317 = vsel %vm5272, %v5268, %v4353
  %v5318 = vsel %vm5272, %v5269, %v4355
  %v5319 = vsel %vm5272, %v5270, %v4357
  %v5320 = vsel %vm5272, %v5271, %v4359
  %vm5321 = vcmask 523264
  %v5322 = vsel %vm5321, %v5273, %v4457
  %v5323 = vsel %vm5321, %v5274, %v4459
  %v5324 = vsel %vm5321, %v5275, %v4461
  %v5325 = vsel %vm5321, %v5276, %v4463
  %v5326 = vsel %vm5321, %v5277, %v4465
  %v5327 = vsel %vm5321, %v5278, %v4467
  %v5328 = vsel %vm5321, %v5279, %v4469
  %v5329 = vsel %vm5321, %v5280, %v4471
  %v5330 = vsel %vm5321, %v5281, %v4473
  %v5331 = vsel %vm5321, %v5282, %v4475
  %v5332 = vsel %vm5321, %v5283, %v4477
  %v5333 = vsel %vm5321, %v5284, %v4479
  %v5334 = vsel %vm5321, %v5285, %v4481
  %v5335 = vsel %vm5321, %v5286, %v4483
  %v5336 = vsel %vm5321, %v5287, %v4485
  %v5337 = vsel %vm5321, %v5288, %v4487
  %v5338 = vsel %vm5321, %v5289, %v4489
  %v5339 = vsel %vm5321, %v5290, %v4491
  %v5340 = vsel %vm5321, %v5291, %v4493
  %v5341 = vsel %vm5321, %v5292, %v4495
  %v5342 = vsel %vm5321, %v5293, %v4497
  %v5343 = vsel %vm5321, %v5294, %v4499
  %v5344 = vsel %vm5321, %v5295, %v4501
  %v5345 = vsel %vm5321, %v5296, %v4503
  %v5346 = vsel %vm5321, %v5297, %v4505
  %v5347 = vsel %vm5321, %v5298, %v4507
  %v5348 = vsel %vm5321, %v5299, %v4509
  %v5349 = vsel %vm5321, %v5300, %v4511
  %v5350 = vsel %vm5321, %v5301, %v4513
  %v5351 = vsel %vm5321, %v5302, %v4515
  %v5352 = vsel %vm5321, %v5303, %v4517
  %v5353 = vsel %vm5321, %v5304, %v4519
  %v5354 = vsel %vm5321, %v5305, %v4521
  %v5355 = vsel %vm5321, %v5306, %v4523
  %v5356 = vsel %vm5321, %v5307, %v4525
  %v5357 = vsel %vm5321, %v5308, %v4527
  %v5358 = vsel %vm5321, %v5309, %v4529
  %v5359 = vsel %vm5321, %v5310, %v4531
  %v5360 = vsel %vm5321, %v5311, %v4533
  %v5361 = vsel %vm5321, %v5312, %v4535
  %v5362 = vsel %vm5321, %v5313, %v4537
  %v5363 = vsel %vm5321, %v5314, %v4539
  %v5364 = vsel %vm5321, %v5315, %v4541
  %v5365 = vsel %vm5321, %v5316, %v4543
  %v5366 = vsel %vm5321, %v5317, %v4545
  %v5367 = vsel %vm5321, %v5318, %v4547
  %v5368 = vsel %vm5321, %v5319, %v4549
  %v5369 = vsel %vm5321, %v5320, %v4551
  %vm5370 = vcmask 654336
  %v5371 = vsel %vm5370, %v5322, %v4649
  %v5372 = vsel %vm5370, %v5323, %v4651
  %v5373 = vsel %vm5370, %v5324, %v4653
  %v5374 = vsel %vm5370, %v5325, %v4655
  %v5375 = vsel %vm5370, %v5326, %v4657
  %v5376 = vsel %vm5370, %v5327, %v4659
  %v5377 = vsel %vm5370, %v5328, %v4661
  %v5378 = vsel %vm5370, %v5329, %v4663
  %v5379 = vsel %vm5370, %v5330, %v4665
  %v5380 = vsel %vm5370, %v5331, %v4667
  %v5381 = vsel %vm5370, %v5332, %v4669
  %v5382 = vsel %vm5370, %v5333, %v4671
  %v5383 = vsel %vm5370, %v5334, %v4673
  %v5384 = vsel %vm5370, %v5335, %v4675
  %v5385 = vsel %vm5370, %v5336, %v4677
  %v5386 = vsel %vm5370, %v5337, %v4679
  %v5387 = vsel %vm5370, %v5338, %v4681
  %v5388 = vsel %vm5370, %v5339, %v4683
  %v5389 = vsel %vm5370, %v5340, %v4685
  %v5390 = vsel %vm5370, %v5341, %v4687
  %v5391 = vsel %vm5370, %v5342, %v4689
  %v5392 = vsel %vm5370, %v5343, %v4691
  %v5393 = vsel %vm5370, %v5344, %v4693
  %v5394 = vsel %vm5370, %v5345, %v4695
  %v5395 = vsel %vm5370, %v5346, %v4697
  %v5396 = vsel %vm5370, %v5347, %v4699
  %v5397 = vsel %vm5370, %v5348, %v4701
  %v5398 = vsel %vm5370, %v5349, %v4703
  %v5399 = vsel %vm5370, %v5350, %v4705
  %v5400 = vsel %vm5370, %v5351, %v4707
  %v5401 = vsel %vm5370, %v5352, %v4709
  %v5402 = vsel %vm5370, %v5353, %v4711
  %v5403 = vsel %vm5370, %v5354, %v4713
  %v5404 = vsel %vm5370, %v5355, %v4715
  %v5405 = vsel %vm5370, %v5356, %v4717
  %v5406 = vsel %vm5370, %v5357, %v4719
  %v5407 = vsel %vm5370, %v5358, %v4721
  %v5408 = vsel %vm5370, %v5359, %v4723
  %v5409 = vsel %vm5370, %v5360, %v4725
  %v5410 = vsel %vm5370, %v5361, %v4727
  %v5411 = vsel %vm5370, %v5362, %v4729
  %v5412 = vsel %vm5370, %v5363, %v4731
  %v5413 = vsel %vm5370, %v5364, %v4733
  %v5414 = vsel %vm5370, %v5365, %v4735
  %v5415 = vsel %vm5370, %v5366, %v4737
  %v5416 = vsel %vm5370, %v5367, %v4739
  %v5417 = vsel %vm5370, %v5368, %v4741
  %v5418 = vsel %vm5370, %v5369, %v4743
  %vm5419 = vcmask 785408
  %v5420 = vsel %vm5419, %v5371, %v4841
  %v5421 = vsel %vm5419, %v5372, %v4843
  %v5422 = vsel %vm5419, %v5373, %v4845
  %v5423 = vsel %vm5419, %v5374, %v4847
  %v5424 = vsel %vm5419, %v5375, %v4849
  %v5425 = vsel %vm5419, %v5376, %v4851
  %v5426 = vsel %vm5419, %v5377, %v4853
  %v5427 = vsel %vm5419, %v5378, %v4855
  %v5428 = vsel %vm5419, %v5379, %v4857
  %v5429 = vsel %vm5419, %v5380, %v4859
  %v5430 = vsel %vm5419, %v5381, %v4861
  %v5431 = vsel %vm5419, %v5382, %v4863
  %v5432 = vsel %vm5419, %v5383, %v4865
  %v5433 = vsel %vm5419, %v5384, %v4867
  %v5434 = vsel %vm5419, %v5385, %v4869
  %v5435 = vsel %vm5419, %v5386, %v4871
  %v5436 = vsel %vm5419, %v5387, %v4873
  %v5437 = vsel %vm5419, %v5388, %v4875
  %v5438 = vsel %vm5419, %v5389, %v4877
  %v5439 = vsel %vm5419, %v5390, %v4879
  %v5440 = vsel %vm5419, %v5391, %v4881
  %v5441 = vsel %vm5419, %v5392, %v4883
  %v5442 = vsel %vm5419, %v5393, %v4885
  %v5443 = vsel %vm5419, %v5394, %v4887
  %v5444 = vsel %vm5419, %v5395, %v4889
  %v5445 = vsel %vm5419, %v5396, %v4891
  %v5446 = vsel %vm5419, %v5397, %v4893
  %v5447 = vsel %vm5419, %v5398, %v4895
  %v5448 = vsel %vm5419, %v5399, %v4897
  %v5449 = vsel %vm5419, %v5400, %v4899
  %v5450 = vsel %vm5419, %v5401, %v4901
  %v5451 = vsel %vm5419, %v5402, %v4903
  %v5452 = vsel %vm5419, %v5403, %v4905
  %v5453 = vsel %vm5419, %v5404, %v4907
  %v5454 = vsel %vm5419, %v5405, %v4909
  %v5455 = vsel %vm5419, %v5406, %v4911
  %v5456 = vsel %vm5419, %v5407, %v4913
  %v5457 = vsel %vm5419, %v5408, %v4915
  %v5458 = vsel %vm5419, %v5409, %v4917
  %v5459 = vsel %vm5419, %v5410, %v4919
  %v5460 = vsel %vm5419, %v5411, %v4921
  %v5461 = vsel %vm5419, %v5412, %v4923
  %v5462 = vsel %vm5419, %v5413, %v4925
  %v5463 = vsel %vm5419, %v5414, %v4927
  %v5464 = vsel %vm5419, %v5415, %v4929
  %v5465 = vsel %vm5419, %v5416, %v4931
  %v5466 = vsel %vm5419, %v5417, %v4933
  %v5467 = vsel %vm5419, %v5418, %v4935
  %vm5468 = vcmask 916480
  %v5469 = vsel %vm5468, %v5420, %v5033
  %v5470 = vsel %vm5468, %v5421, %v5035
  %v5471 = vsel %vm5468, %v5422, %v5037
  %v5472 = vsel %vm5468, %v5423, %v5039
  %v5473 = vsel %vm5468, %v5424, %v5041
  %v5474 = vsel %vm5468, %v5425, %v5043
  %v5475 = vsel %vm5468, %v5426, %v5045
  %v5476 = vsel %vm5468, %v5427, %v5047
  %v5477 = vsel %vm5468, %v5428, %v5049
  %v5478 = vsel %vm5468, %v5429, %v5051
  %v5479 = vsel %vm5468, %v5430, %v5053
  %v5480 = vsel %vm5468, %v5431, %v5055
  %v5481 = vsel %vm5468, %v5432, %v5057
  %v5482 = vsel %vm5468, %v5433, %v5059
  %v5483 = vsel %vm5468, %v5434, %v5061
  %v5484 = vsel %vm5468, %v5435, %v5063
  %v5485 = vsel %vm5468, %v5436, %v5065
  %v5486 = vsel %vm5468, %v5437, %v5067
  %v5487 = vsel %vm5468, %v5438, %v5069
  %v5488 = vsel %vm5468, %v5439, %v5071
  %v5489 = vsel %vm5468, %v5440, %v5073
  %v5490 = vsel %vm5468, %v5441, %v5075
  %v5491 = vsel %vm5468, %v5442, %v5077
  %v5492 = vsel %vm5468, %v5443, %v5079
  %v5493 = vsel %vm5468, %v5444, %v5081
  %v5494 = vsel %vm5468, %v5445, %v5083
  %v5495 = vsel %vm5468, %v5446, %v5085
  %v5496 = vsel %vm5468, %v5447, %v5087
  %v5497 = vsel %vm5468, %v5448, %v5089
  %v5498 = vsel %vm5468, %v5449, %v5091
  %v5499 = vsel %vm5468, %v5450, %v5093
  %v5500 = vsel %vm5468, %v5451, %v5095
  %v5501 = vsel %vm5468, %v5452, %v5097
  %v5502 = vsel %vm5468, %v5453, %v5099
  %v5503 = vsel %vm5468, %v5454, %v5101
  %v5504 = vsel %vm5468, %v5455, %v5103
  %v5505 = vsel %vm5468, %v5456, %v5105
  %v5506 = vsel %vm5468, %v5457, %v5107
  %v5507 = vsel %vm5468, %v5458, %v5109
  %v5508 = vsel %vm5468, %v5459, %v5111
  %v5509 = vsel %vm5468, %v5460, %v5113
  %v5510 = vsel %vm5468, %v5461, %v5115
  %v5511 = vsel %vm5468, %v5462, %v5117
  %v5512 = vsel %vm5468, %v5463, %v5119
  %v5513 = vsel %vm5468, %v5464, %v5121
  %v5514 = vsel %vm5468, %v5465, %v5123
  %v5515 = vsel %vm5468, %v5466, %v5125
  %v5516 = vsel %vm5468, %v5467, %v5127
  %v5517 = vld [vmem:[%s5] sm:$0xff]
  %v5518 = vld [vmem:[%s5 + $0x8] sm:$0xff]
  %v5519 = vld [vmem:[%s5 + $0x10] sm:$0xff]
  %v5520 = vld [vmem:[%s5 + $0x18] sm:$0xff]
  %v5521 = vld [vmem:[%s5 + $0x20] sm:$0xff]
  %v5522 = vld [vmem:[%s5 + $0x28] sm:$0xff]
  %v5523 = vld [vmem:[%s5 + $0x30] sm:$0xff]
  %v5524 = vld [vmem:[%s5 + $0x38] sm:$0xff]
  %v5525 = vld [vmem:[%s5 + $0x40] sm:$0xff]
  %v5526 = vld [vmem:[%s5 + $0x48] sm:$0xff]
  %v5527 = vld [vmem:[%s5 + $0x50] sm:$0xff]
  %v5528 = vld [vmem:[%s5 + $0x58] sm:$0xff]
  %v5529 = vld [vmem:[%s5 + $0x60] sm:$0xff]
  %v5530 = vld [vmem:[%s5 + $0x68] sm:$0xff]
  %v5531 = vld [vmem:[%s5 + $0x70] sm:$0xff]
  %v5532 = vld [vmem:[%s5 + $0x78] sm:$0xff]
  %v5533 = vld [vmem:[%s5 + $0x80] sm:$0xff]
  %v5534 = vld [vmem:[%s5 + $0x88] sm:$0xff]
  %v5535 = vld [vmem:[%s6] sm:$0x1]
  %v5537 = vlaneseq
  %v5538 = vshrl.u32 %v5537, 7
  %v5539 = vsub.s32 0, %v5538
  %v5540 = vrot.slane %v5535, %v5539
  %v5543 = vsel %vm148, %v3784, 0
  %v5546 = vsel %vm148, %v3785, 0
  %v5549 = vsel %vm148, %v3786, 0
  %v5552 = vsel %vm148, %v3787, 0
  %v5555 = vsel %vm148, %v3788, 0
  %v5558 = vsel %vm148, %v3789, 0
  %v5561 = vsel %vm148, %v3790, 0
  %v5564 = vsel %vm148, %v3791, 0
  %v5567 = vsel %vm148, %v3792, 0
  %v5570 = vsel %vm148, %v3793, 0
  %v5573 = vsel %vm148, %v3794, 0
  %v5576 = vsel %vm148, %v3795, 0
  %v5579 = vsel %vm148, %v3796, 0
  %v5582 = vsel %vm148, %v3797, 0
  %v5585 = vsel %vm148, %v3798, 0
  %v5588 = vsel %vm148, %v3799, 0
  %v5591 = vsel %vm148, %v3800, 0
  %v5594 = vsel %vm148, %v3801, 0
  %v5597 = vsel %vm148, %v3802, 0
  %v5600 = vsel %vm148, %v3803, 0
  %v5603 = vsel %vm148, %v3804, 0
  %v5606 = vsel %vm148, %v3805, 0
  %v5609 = vsel %vm148, %v3806, 0
  %v5612 = vsel %vm148, %v3807, 0
  %v5615 = vsel %vm148, %v3808, 0
  %v5618 = vsel %vm148, %v3809, 0
  %v5621 = vsel %vm148, %v3810, 0
  %v5624 = vsel %vm148, %v3811, 0
  %v5627 = vsel %vm148, %v3812, 0
  %v5630 = vsel %vm148, %v3813, 0
  %v5633 = vsel %vm148, %v3814, 0
  %v5636 = vsel %vm148, %v3815, 0
  %v5639 = vsel %vm148, %v3816, 0
  %v5642 = vsel %vm148, %v3817, 0
  %v5645 = vsel %vm148, %v3818, 0
  %v5648 = vsel %vm148, %v3819, 0
  %v5651 = vsel %vm148, %v3820, 0
  %v5654 = vsel %vm148, %v3821, 0
  %v5657 = vsel %vm148, %v3822, 0
  %v5660 = vsel %vm148, %v3823, 0
  %v5663 = vsel %vm148, %v3824, 0
  %v5666 = vsel %vm148, %v3825, 0
  %v5669 = vsel %vm148, %v3826, 0
  %v5672 = vsel %vm148, %v3827, 0
  %v5675 = vsel %vm148, %v3828, 0
  %v5678 = vsel %vm148, %v3829, 0
  %v5681 = vsel %vm148, %v3830, 0
  %v5684 = vsel %vm148, %v3831, 0
  %5686 = vmatprep.subr.mxu0 0.0
  %5687 = vmatpush1.msra.mxu0 %v5517
  %5688 = vmatprep.subr.mxu0 0.0
  %5689 = vmatpush1.msra.mxu0 %v5518
  %5690 = vmatprep.subr.mxu0 0.0
  %5691 = vmatpush1.msra.mxu0 %v5519
  %5692 = vmatprep.subr.mxu0 0.0
  %5693 = vmatpush1.msra.mxu0 %v5520
  %5694 = vmatprep.subr.mxu0 0.0
  %5695 = vmatpush1.msra.mxu0 %v5521
  %5696 = vmatprep.subr.mxu0 0.0
  %5697 = vmatpush1.msra.mxu0 %v5522
  %5698 = vmatprep.subr.mxu0 0.0
  %5699 = vmatpush1.msra.mxu0 %v5523
  %5700 = vmatprep.subr.mxu0 0.0
  %5701 = vmatpush1.msra.mxu0 %v5524
  %5702 = vmatprep.subr.mxu0 0.0
  %5703 = vmatpush1.msra.mxu0 %v5525
  %5704 = vmatprep.subr.mxu0 0.0
  %5705 = vmatpush1.msra.mxu0 %v5526
  %5706 = vmatprep.subr.mxu0 0.0
  %5707 = vmatpush1.msra.mxu0 %v5527
  %5708 = vmatprep.subr.mxu0 0.0
  %5709 = vmatpush1.msra.mxu0 %v5528
  %5710 = vmatprep.subr.mxu0 0.0
  %5711 = vmatpush1.msra.mxu0 %v5529
  %5712 = vmatprep.subr.mxu0 0.0
  %5713 = vmatpush1.msra.mxu0 %v5530
  %5714 = vmatprep.subr.mxu0 0.0
  %5715 = vmatpush1.msra.mxu0 %v5531
  %5716 = vmatprep.subr.mxu0 0.0
  %5717 = vmatpush1.msra.mxu0 %v5532
  %5718 = vmatprep.subr.mxu0 0.0
  %5719 = vmatpush1.msra.mxu0 %v5533
  %5720 = vmatprep.subr.mxu0 0.0
  %5721 = vmatpush1.msra.mxu0 %v5534
  %5722 = vmatprep.subr.mxu0 0.0
  %5723 = vmatpush1.msra.mxu0 0.0
  %5724 = vmatprep.subr.mxu0 0.0
  %5725 = vmatpush1.msra.mxu0 0.0
  %5726 = vmatprep.subr.mxu0 0.0
  %5727 = vmatpush1.msra.mxu0 0.0
  %5728 = vmatprep.subr.mxu0 0.0
  %5729 = vmatpush1.msra.mxu0 0.0
  %5730 = vmatprep.subr.mxu0 0.0
  %5731 = vmatpush1.msra.mxu0 0.0
  %5732 = vmatprep.subr.mxu0 0.0
  %5733 = vmatpush1.msra.mxu0 0.0
  %5734 = vmatprep.subr.mxu0 0.0
  %5735 = vmatpush1.msra.mxu0 0.0
  %5736 = vmatprep.subr.mxu0 0.0
  %5737 = vmatpush1.msra.mxu0 0.0
  %5738 = vmatprep.subr.mxu0 0.0
  %5739 = vmatpush1.msra.mxu0 0.0
  %5740 = vmatprep.subr.mxu0 0.0
  %5741 = vmatpush1.msra.mxu0 0.0
  %5742 = vmatprep.subr.mxu0 0.0
  %5743 = vmatpush1.msra.mxu0 0.0
  %5744 = vmatprep.subr.mxu0 0.0
  %5745 = vmatpush1.msra.mxu0 0.0
  %5746 = vmatprep.subr.mxu0 0.0
  %5747 = vmatpush1.msra.mxu0 0.0
  %5748 = vmatprep.subr.mxu0 0.0
  %5749 = vmatpush1.msra.mxu0 0.0
  %5750 = vmatprep.mubr.f32.mxu0 %v5543
  %5751 = vmatmul.mubr.f32.gmra.mrb[0].mxu0 %v5469
  %v5752 = vpop.f32.mrb[0].mxu0
  %v5753 = vadd.f32 %v5540, %v5752
  %v5754 = vpop.f32.mrb[0].mxu0
  %5755 = vmatprep.mubr.f32.mxu0 %v5546
  %5756 = vmatmul.mubr.f32.gmra.mrb[0].mxu0 %v5470
  %v5757 = vpop.f32.mrb[0].mxu0
  %v5758 = vadd.f32 %v5540, %v5757
  %v5759 = vpop.f32.mrb[0].mxu0
  %5760 = vmatprep.mubr.f32.mxu0 %v5549
  %5761 = vmatmul.mubr.f32.gmra.mrb[0].mxu0 %v5471
  %v5762 = vpop.f32.mrb[0].mxu0
  %v5763 = vadd.f32 %v5540, %v5762
  %v5764 = vpop.f32.mrb[0].mxu0
  %5765 = vmatprep.mubr.f32.mxu0 %v5552
  %5766 = vmatmul.mubr.f32.gmra.mrb[0].mxu0 %v5472
  %v5767 = vpop.f32.mrb[0].mxu0
  %v5768 = vadd.f32 %v5540, %v5767
  %v5769 = vpop.f32.mrb[0].mxu0
  %5770 = vmatprep.mubr.f32.mxu0 %v5555
  %5771 = vmatmul.mubr.f32.gmra.mrb[0].mxu0 %v5473
  %v5772 = vpop.f32.mrb[0].mxu0
  %v5773 = vadd.f32 %v5540, %v5772
  %v5774 = vpop.f32.mrb[0].mxu0
  %5775 = vmatprep.mubr.f32.mxu0 %v5558
  %5776 = vmatmul.mubr.f32.gmra.mrb[0].mxu0 %v5474
  %v5777 = vpop.f32.mrb[0].mxu0
  %v5778 = vadd.f32 %v5540, %v5777
  %v5779 = vpop.f32.mrb[0].mxu0
  %5780 = vmatprep.mubr.f32.mxu0 %v5561
  %5781 = vmatmul.mubr.f32.gmra.mrb[0].mxu0 %v5475
  %v5782 = vpop.f32.mrb[0].mxu0
  %v5783 = vadd.f32 %v5540, %v5782
  %v5784 = vpop.f32.mrb[0].mxu0
  %5785 = vmatprep.mubr.f32.mxu0 %v5564
  %5786 = vmatmul.mubr.f32.gmra.mrb[0].mxu0 %v5476
  %v5787 = vpop.f32.mrb[0].mxu0
  %v5788 = vadd.f32 %v5540, %v5787
  %v5789 = vpop.f32.mrb[0].mxu0
  %5790 = vmatprep.mubr.f32.mxu0 %v5567
  %5791 = vmatmul.mubr.f32.gmra.mrb[0].mxu0 %v5477
  %v5792 = vpop.f32.mrb[0].mxu0
  %v5793 = vadd.f32 %v5540, %v5792
  %v5794 = vpop.f32.mrb[0].mxu0
  %5795 = vmatprep.mubr.f32.mxu0 %v5570
  %5796 = vmatmul.mubr.f32.gmra.mrb[0].mxu0 %v5478
  %v5797 = vpop.f32.mrb[0].mxu0
  %v5798 = vadd.f32 %v5540, %v5797
  %v5799 = vpop.f32.mrb[0].mxu0
  %5800 = vmatprep.mubr.f32.mxu0 %v5573
  %5801 = vmatmul.mubr.f32.gmra.mrb[0].mxu0 %v5479
  %v5802 = vpop.f32.mrb[0].mxu0
  %v5803 = vadd.f32 %v5540, %v5802
  %v5804 = vpop.f32.mrb[0].mxu0
  %5805 = vmatprep.mubr.f32.mxu0 %v5576
  %5806 = vmatmul.mubr.f32.gmra.mrb[0].mxu0 %v5480
  %v5807 = vpop.f32.mrb[0].mxu0
  %v5808 = vadd.f32 %v5540, %v5807
  %v5809 = vpop.f32.mrb[0].mxu0
  %5810 = vmatprep.mubr.f32.mxu0 %v5579
  %5811 = vmatmul.mubr.f32.gmra.mrb[0].mxu0 %v5481
  %v5812 = vpop.f32.mrb[0].mxu0
  %v5813 = vadd.f32 %v5540, %v5812
  %v5814 = vpop.f32.mrb[0].mxu0
  %5815 = vmatprep.mubr.f32.mxu0 %v5582
  %5816 = vmatmul.mubr.f32.gmra.mrb[0].mxu0 %v5482
  %v5817 = vpop.f32.mrb[0].mxu0
  %v5818 = vadd.f32 %v5540, %v5817
  %v5819 = vpop.f32.mrb[0].mxu0
  %5820 = vmatprep.mubr.f32.mxu0 %v5585
  %5821 = vmatmul.mubr.f32.gmra.mrb[0].mxu0 %v5483
  %v5822 = vpop.f32.mrb[0].mxu0
  %v5823 = vadd.f32 %v5540, %v5822
  %v5824 = vpop.f32.mrb[0].mxu0
  %5825 = vmatprep.mubr.f32.mxu0 %v5588
  %5826 = vmatmul.mubr.f32.gmra.mrb[0].mxu0 %v5484
  %v5827 = vpop.f32.mrb[0].mxu0
  %v5828 = vadd.f32 %v5540, %v5827
  %v5829 = vpop.f32.mrb[0].mxu0
  %5830 = vmatprep.mubr.f32.mxu0 %v5591
  %5831 = vmatmul.mubr.f32.gmra.mrb[0].mxu0 %v5485
  %v5832 = vpop.f32.mrb[0].mxu0
  %v5833 = vadd.f32 %v5540, %v5832
  %v5834 = vpop.f32.mrb[0].mxu0
  %5835 = vmatprep.mubr.f32.mxu0 %v5594
  %5836 = vmatmul.mubr.f32.gmra.mrb[0].mxu0 %v5486
  %v5837 = vpop.f32.mrb[0].mxu0
  %v5838 = vadd.f32 %v5540, %v5837
  %v5839 = vpop.f32.mrb[0].mxu0
  %5840 = vmatprep.mubr.f32.mxu0 %v5597
  %5841 = vmatmul.mubr.f32.gmra.mrb[0].mxu0 %v5487
  %v5842 = vpop.f32.mrb[0].mxu0
  %v5843 = vadd.f32 %v5540, %v5842
  %v5844 = vpop.f32.mrb[0].mxu0
  %5845 = vmatprep.mubr.f32.mxu0 %v5600
  %5846 = vmatmul.mubr.f32.gmra.mrb[0].mxu0 %v5488
  %v5847 = vpop.f32.mrb[0].mxu0
  %v5848 = vadd.f32 %v5540, %v5847
  %v5849 = vpop.f32.mrb[0].mxu0
  %5850 = vmatprep.mubr.f32.mxu0 %v5603
  %5851 = vmatmul.mubr.f32.gmra.mrb[0].mxu0 %v5489
  %v5852 = vpop.f32.mrb[0].mxu0
  %v5853 = vadd.f32 %v5540, %v5852
  %v5854 = vpop.f32.mrb[0].mxu0
  %5855 = vmatprep.mubr.f32.mxu0 %v5606
  %5856 = vmatmul.mubr.f32.gmra.mrb[0].mxu0 %v5490
  %v5857 = vpop.f32.mrb[0].mxu0
  %v5858 = vadd.f32 %v5540, %v5857
  %v5859 = vpop.f32.mrb[0].mxu0
  %5860 = vmatprep.mubr.f32.mxu0 %v5609
  %5861 = vmatmul.mubr.f32.gmra.mrb[0].mxu0 %v5491
  %v5862 = vpop.f32.mrb[0].mxu0
  %v5863 = vadd.f32 %v5540, %v5862
  %v5864 = vpop.f32.mrb[0].mxu0
  %5865 = vmatprep.mubr.f32.mxu0 %v5612
  %5866 = vmatmul.mubr.f32.gmra.mrb[0].mxu0 %v5492
  %v5867 = vpop.f32.mrb[0].mxu0
  %v5868 = vadd.f32 %v5540, %v5867
  %v5869 = vpop.f32.mrb[0].mxu0
  %5870 = vmatprep.mubr.f32.mxu0 %v5615
  %5871 = vmatmul.mubr.f32.gmra.mrb[0].mxu0 %v5493
  %v5872 = vpop.f32.mrb[0].mxu0
  %v5873 = vadd.f32 %v5540, %v5872
  %v5874 = vpop.f32.mrb[0].mxu0
  %5875 = vmatprep.mubr.f32.mxu0 %v5618
  %5876 = vmatmul.mubr.f32.gmra.mrb[0].mxu0 %v5494
  %v5877 = vpop.f32.mrb[0].mxu0
  %v5878 = vadd.f32 %v5540, %v5877
  %v5879 = vpop.f32.mrb[0].mxu0
  %5880 = vmatprep.mubr.f32.mxu0 %v5621
  %5881 = vmatmul.mubr.f32.gmra.mrb[0].mxu0 %v5495
  %v5882 = vpop.f32.mrb[0].mxu0
  %v5883 = vadd.f32 %v5540, %v5882
  %v5884 = vpop.f32.mrb[0].mxu0
  %5885 = vmatprep.mubr.f32.mxu0 %v5624
  %5886 = vmatmul.mubr.f32.gmra.mrb[0].mxu0 %v5496
  %v5887 = vpop.f32.mrb[0].mxu0
  %v5888 = vadd.f32 %v5540, %v5887
  %v5889 = vpop.f32.mrb[0].mxu0
  %5890 = vmatprep.mubr.f32.mxu0 %v5627
  %5891 = vmatmul.mubr.f32.gmra.mrb[0].mxu0 %v5497
  %v5892 = vpop.f32.mrb[0].mxu0
  %v5893 = vadd.f32 %v5540, %v5892
  %v5894 = vpop.f32.mrb[0].mxu0
  %5895 = vmatprep.mubr.f32.mxu0 %v5630
  %5896 = vmatmul.mubr.f32.gmra.mrb[0].mxu0 %v5498
  %v5897 = vpop.f32.mrb[0].mxu0
  %v5898 = vadd.f32 %v5540, %v5897
  %v5899 = vpop.f32.mrb[0].mxu0
  %5900 = vmatprep.mubr.f32.mxu0 %v5633
  %5901 = vmatmul.mubr.f32.gmra.mrb[0].mxu0 %v5499
  %v5902 = vpop.f32.mrb[0].mxu0
  %v5903 = vadd.f32 %v5540, %v5902
  %v5904 = vpop.f32.mrb[0].mxu0
  %5905 = vmatprep.mubr.f32.mxu0 %v5636
  %5906 = vmatmul.mubr.f32.gmra.mrb[0].mxu0 %v5500
  %v5907 = vpop.f32.mrb[0].mxu0
  %v5908 = vadd.f32 %v5540, %v5907
  %v5909 = vpop.f32.mrb[0].mxu0
  %5910 = vmatprep.mubr.f32.mxu0 %v5639
  %5911 = vmatmul.mubr.f32.gmra.mrb[0].mxu0 %v5501
  %v5912 = vpop.f32.mrb[0].mxu0
  %v5913 = vadd.f32 %v5540, %v5912
  %v5914 = vpop.f32.mrb[0].mxu0
  %5915 = vmatprep.mubr.f32.mxu0 %v5642
  %5916 = vmatmul.mubr.f32.gmra.mrb[0].mxu0 %v5502
  %v5917 = vpop.f32.mrb[0].mxu0
  %v5918 = vadd.f32 %v5540, %v5917
  %v5919 = vpop.f32.mrb[0].mxu0
  %5920 = vmatprep.mubr.f32.mxu0 %v5645
  %5921 = vmatmul.mubr.f32.gmra.mrb[0].mxu0 %v5503
  %v5922 = vpop.f32.mrb[0].mxu0
  %v5923 = vadd.f32 %v5540, %v5922
  %v5924 = vpop.f32.mrb[0].mxu0
  %5925 = vmatprep.mubr.f32.mxu0 %v5648
  %5926 = vmatmul.mubr.f32.gmra.mrb[0].mxu0 %v5504
  %v5927 = vpop.f32.mrb[0].mxu0
  %v5928 = vadd.f32 %v5540, %v5927
  %v5929 = vpop.f32.mrb[0].mxu0
  %5930 = vmatprep.mubr.f32.mxu0 %v5651
  %5931 = vmatmul.mubr.f32.gmra.mrb[0].mxu0 %v5505
  %v5932 = vpop.f32.mrb[0].mxu0
  %v5933 = vadd.f32 %v5540, %v5932
  %v5934 = vpop.f32.mrb[0].mxu0
  %5935 = vmatprep.mubr.f32.mxu0 %v5654
  %5936 = vmatmul.mubr.f32.gmra.mrb[0].mxu0 %v5506
  %v5937 = vpop.f32.mrb[0].mxu0
  %v5938 = vadd.f32 %v5540, %v5937
  %v5939 = vpop.f32.mrb[0].mxu0
  %5940 = vmatprep.mubr.f32.mxu0 %v5657
  %5941 = vmatmul.mubr.f32.gmra.mrb[0].mxu0 %v5507
  %v5942 = vpop.f32.mrb[0].mxu0
  %v5943 = vadd.f32 %v5540, %v5942
  %v5944 = vpop.f32.mrb[0].mxu0
  %5945 = vmatprep.mubr.f32.mxu0 %v5660
  %5946 = vmatmul.mubr.f32.gmra.mrb[0].mxu0 %v5508
  %v5947 = vpop.f32.mrb[0].mxu0
  %v5948 = vadd.f32 %v5540, %v5947
  %v5949 = vpop.f32.mrb[0].mxu0
  %5950 = vmatprep.mubr.f32.mxu0 %v5663
  %5951 = vmatmul.mubr.f32.gmra.mrb[0].mxu0 %v5509
  %v5952 = vpop.f32.mrb[0].mxu0
  %v5953 = vadd.f32 %v5540, %v5952
  %v5954 = vpop.f32.mrb[0].mxu0
  %5955 = vmatprep.mubr.f32.mxu0 %v5666
  %5956 = vmatmul.mubr.f32.gmra.mrb[0].mxu0 %v5510
  %v5957 = vpop.f32.mrb[0].mxu0
  %v5958 = vadd.f32 %v5540, %v5957
  %v5959 = vpop.f32.mrb[0].mxu0
  %5960 = vmatprep.mubr.f32.mxu0 %v5669
  %5961 = vmatmul.mubr.f32.gmra.mrb[0].mxu0 %v5511
  %v5962 = vpop.f32.mrb[0].mxu0
  %v5963 = vadd.f32 %v5540, %v5962
  %v5964 = vpop.f32.mrb[0].mxu0
  %5965 = vmatprep.mubr.f32.mxu0 %v5672
  %5966 = vmatmul.mubr.f32.gmra.mrb[0].mxu0 %v5512
  %v5967 = vpop.f32.mrb[0].mxu0
  %v5968 = vadd.f32 %v5540, %v5967
  %v5969 = vpop.f32.mrb[0].mxu0
  %5970 = vmatprep.mubr.f32.mxu0 %v5675
  %5971 = vmatmul.mubr.f32.gmra.mrb[0].mxu0 %v5513
  %v5972 = vpop.f32.mrb[0].mxu0
  %v5973 = vadd.f32 %v5540, %v5972
  %v5974 = vpop.f32.mrb[0].mxu0
  %5975 = vmatprep.mubr.f32.mxu0 %v5678
  %5976 = vmatmul.mubr.f32.gmra.mrb[0].mxu0 %v5514
  %v5977 = vpop.f32.mrb[0].mxu0
  %v5978 = vadd.f32 %v5540, %v5977
  %v5979 = vpop.f32.mrb[0].mxu0
  %5980 = vmatprep.mubr.f32.mxu0 %v5681
  %5981 = vmatmul.mubr.f32.gmra.mrb[0].mxu0 %v5515
  %v5982 = vpop.f32.mrb[0].mxu0
  %v5983 = vadd.f32 %v5540, %v5982
  %v5984 = vpop.f32.mrb[0].mxu0
  %5985 = vmatprep.mubr.f32.mxu0 %v5684
  %5986 = vmatmul.mubr.f32.gmra.mrb[0].mxu0 %v5516
  %v5987 = vpop.f32.mrb[0].mxu0
  %v5988 = vadd.f32 %v5540, %v5987
  %v5989 = vpop.f32.mrb[0].mxu0
  %5990 = vdwg.mxu0
  %v5991 = vmax.f32 %v5753, 0.0
  %v5992 = vmax.f32 %v5758, 0.0
  %v5993 = vmax.f32 %v5763, 0.0
  %v5994 = vmax.f32 %v5768, 0.0
  %v5995 = vmax.f32 %v5773, 0.0
  %v5996 = vmax.f32 %v5778, 0.0
  %v5997 = vmax.f32 %v5783, 0.0
  %v5998 = vmax.f32 %v5788, 0.0
  %v5999 = vmax.f32 %v5793, 0.0
  %v6000 = vmax.f32 %v5798, 0.0
  %v6001 = vmax.f32 %v5803, 0.0
  %v6002 = vmax.f32 %v5808, 0.0
  %v6003 = vmax.f32 %v5813, 0.0
  %v6004 = vmax.f32 %v5818, 0.0
  %v6005 = vmax.f32 %v5823, 0.0
  %v6006 = vmax.f32 %v5828, 0.0
  %v6007 = vmax.f32 %v5833, 0.0
  %v6008 = vmax.f32 %v5838, 0.0
  %v6009 = vmax.f32 %v5843, 0.0
  %v6010 = vmax.f32 %v5848, 0.0
  %v6011 = vmax.f32 %v5853, 0.0
  %v6012 = vmax.f32 %v5858, 0.0
  %v6013 = vmax.f32 %v5863, 0.0
  %v6014 = vmax.f32 %v5868, 0.0
  %v6015 = vmax.f32 %v5873, 0.0
  %v6016 = vmax.f32 %v5878, 0.0
  %v6017 = vmax.f32 %v5883, 0.0
  %v6018 = vmax.f32 %v5888, 0.0
  %v6019 = vmax.f32 %v5893, 0.0
  %v6020 = vmax.f32 %v5898, 0.0
  %v6021 = vmax.f32 %v5903, 0.0
  %v6022 = vmax.f32 %v5908, 0.0
  %v6023 = vmax.f32 %v5913, 0.0
  %v6024 = vmax.f32 %v5918, 0.0
  %v6025 = vmax.f32 %v5923, 0.0
  %v6026 = vmax.f32 %v5928, 0.0
  %v6027 = vmax.f32 %v5933, 0.0
  %v6028 = vmax.f32 %v5938, 0.0
  %v6029 = vmax.f32 %v5943, 0.0
  %v6030 = vmax.f32 %v5948, 0.0
  %v6031 = vmax.f32 %v5953, 0.0
  %v6032 = vmax.f32 %v5958, 0.0
  %v6033 = vmax.f32 %v5963, 0.0
  %v6034 = vmax.f32 %v5968, 0.0
  %v6035 = vmax.f32 %v5973, 0.0
  %v6036 = vmax.f32 %v5978, 0.0
  %v6037 = vmax.f32 %v5983, 0.0
  %v6038 = vmax.f32 %v5988, 0.0
  %6039 = vst.msk [vmem:[%s7] sm:$0xff] %vm2384, %v5991
  %6040 = vst.msk [vmem:[%s7 + $0x8] sm:$0xff] %vm2384, %v5992
  %6041 = vst.msk [vmem:[%s7 + $0x10] sm:$0xff] %vm2384, %v5993
  %6042 = vst.msk [vmem:[%s7 + $0x18] sm:$0xff] %vm2384, %v5994
  %6043 = vst.msk [vmem:[%s7 + $0x20] sm:$0xff] %vm2384, %v5995
  %6044 = vst.msk [vmem:[%s7 + $0x28] sm:$0xff] %vm2384, %v5996
  %6045 = vst.msk [vmem:[%s7 + $0x30] sm:$0xff] %vm2384, %v5997
  %6046 = vst.msk [vmem:[%s7 + $0x38] sm:$0xff] %vm2384, %v5998
  %6047 = vst.msk [vmem:[%s7 + $0x40] sm:$0xff] %vm2384, %v5999
  %6048 = vst.msk [vmem:[%s7 + $0x48] sm:$0xff] %vm2384, %v6000
  %6049 = vst.msk [vmem:[%s7 + $0x50] sm:$0xff] %vm2384, %v6001
  %6050 = vst.msk [vmem:[%s7 + $0x58] sm:$0xff] %vm2384, %v6002
  %6051 = vst.msk [vmem:[%s7 + $0x60] sm:$0xff] %vm2384, %v6003
  %6052 = vst.msk [vmem:[%s7 + $0x68] sm:$0xff] %vm2384, %v6004
  %6053 = vst.msk [vmem:[%s7 + $0x70] sm:$0xff] %vm2384, %v6005
  %6054 = vst.msk [vmem:[%s7 + $0x78] sm:$0xff] %vm2384, %v6006
  %6055 = vst.msk [vmem:[%s7 + $0x80] sm:$0xff] %vm2384, %v6007
  %6056 = vst.msk [vmem:[%s7 + $0x88] sm:$0xff] %vm2384, %v6008
  %6057 = vst.msk [vmem:[%s7 + $0x90] sm:$0xff] %vm2384, %v6009
  %6058 = vst.msk [vmem:[%s7 + $0x98] sm:$0xff] %vm2384, %v6010
  %6059 = vst.msk [vmem:[%s7 + $0xa0] sm:$0xff] %vm2384, %v6011
  %6060 = vst.msk [vmem:[%s7 + $0xa8] sm:$0xff] %vm2384, %v6012
  %6061 = vst.msk [vmem:[%s7 + $0xb0] sm:$0xff] %vm2384, %v6013
  %6062 = vst.msk [vmem:[%s7 + $0xb8] sm:$0xff] %vm2384, %v6014
  %6063 = vst.msk [vmem:[%s7 + $0xc0] sm:$0xff] %vm2384, %v6015
  %6064 = vst.msk [vmem:[%s7 + $0xc8] sm:$0xff] %vm2384, %v6016
  %6065 = vst.msk [vmem:[%s7 + $0xd0] sm:$0xff] %vm2384, %v6017
  %6066 = vst.msk [vmem:[%s7 + $0xd8] sm:$0xff] %vm2384, %v6018
  %6067 = vst.msk [vmem:[%s7 + $0xe0] sm:$0xff] %vm2384, %v6019
  %6068 = vst.msk [vmem:[%s7 + $0xe8] sm:$0xff] %vm2384, %v6020
  %6069 = vst.msk [vmem:[%s7 + $0xf0] sm:$0xff] %vm2384, %v6021
  %6070 = vst.msk [vmem:[%s7 + $0xf8] sm:$0xff] %vm2384, %v6022
  %6071 = vst.msk [vmem:[%s7 + $0x100] sm:$0xff] %vm2384, %v6023
  %6072 = vst.msk [vmem:[%s7 + $0x108] sm:$0xff] %vm2384, %v6024
  %6073 = vst.msk [vmem:[%s7 + $0x110] sm:$0xff] %vm2384, %v6025
  %6074 = vst.msk [vmem:[%s7 + $0x118] sm:$0xff] %vm2384, %v6026
  %6075 = vst.msk [vmem:[%s7 + $0x120] sm:$0xff] %vm2384, %v6027
  %6076 = vst.msk [vmem:[%s7 + $0x128] sm:$0xff] %vm2384, %v6028
  %6077 = vst.msk [vmem:[%s7 + $0x130] sm:$0xff] %vm2384, %v6029
  %6078 = vst.msk [vmem:[%s7 + $0x138] sm:$0xff] %vm2384, %v6030
  %6079 = vst.msk [vmem:[%s7 + $0x140] sm:$0xff] %vm2384, %v6031
  %6080 = vst.msk [vmem:[%s7 + $0x148] sm:$0xff] %vm2384, %v6032
  %6081 = vst.msk [vmem:[%s7 + $0x150] sm:$0xff] %vm2384, %v6033
  %6082 = vst.msk [vmem:[%s7 + $0x158] sm:$0xff] %vm2384, %v6034
  %6083 = vst.msk [vmem:[%s7 + $0x160] sm:$0xff] %vm2384, %v6035
  %6084 = vst.msk [vmem:[%s7 + $0x168] sm:$0xff] %vm2384, %v6036
  %6085 = vst.msk [vmem:[%s7 + $0x170] sm:$0xff] %vm2384, %v6037
  %6086 = vst.msk [vmem:[%s7 + $0x178] sm:$0xff] %vm2384, %v6038
  // Predicated region
  $region30: #{tpu_custom_call.1} parent=0 // pred_check
    _
  $region31: #{tpu_custom_call.1} parent=0 // pred_check_branch
    %6088 = sbr.rel (0) target = $region33
  $region32: #{tpu_custom_call.1} parent=0 // pred_region
    _
  $region33: #{tpu_custom_call.1} parent=0 // pred_fallthru
    _
  // Predicated region
  $region34: #{tpu_custom_call.1} parent=0 // pred_check
    _
  $region35: #{tpu_custom_call.1} parent=0 // pred_check_branch
    %6090 = sbr.rel (0) target = $region37
  $region36: #{tpu_custom_call.1} parent=0 // pred_region
    _
  $region37: #{tpu_custom_call.1} parent=0 // pred_fallthru
    _

</llo_original>
